<compile_context>
chip_gen: v5e
topology: v5e:2x2
jax: 0.10.0
libtpu: 0.0.40
codegen_flags: <defaults>
</compile_context>

<pallas_src>
import functools

import jax
import jax.numpy as jnp
from jax.experimental import pallas as pl
from jax.experimental.pallas import tpu as pltpu

_LANES = 128


def encoder_kernel(x_ref, w1_ref, w2_ref, b2_ref, w3_ref,
                   out_ref, mmax_ref, *, n_tile):
    n = pl.program_id(1)

    x = x_ref[...]                                              # (8, n_tile) bf16

    # conv1 + bn1 (folded, bias folded into the ones-channel column) + relu
    h = jnp.dot(w1_ref[...], x, preferred_element_type=jnp.float32)
    h = jnp.maximum(h, 0.0)

    # conv2 + bn2 (folded) + relu
    h = jnp.dot(w2_ref[...], h.astype(jnp.bfloat16),
                preferred_element_type=jnp.float32)
    h = jnp.maximum(h + b2_ref[...], 0.0)

    # conv3 (bn3 scale folded into w3; per-channel shift added after the pool)
    h = jnp.dot(w3_ref[...], h.astype(jnp.bfloat16),
                preferred_element_type=jnp.float32)             # (1024, n_tile)

    # Tile max accumulated in registers across 128-lane slabs; the VMEM
    # scratch is read/written exactly once per tile.
    local = h[:, :_LANES]
    for i in range(1, n_tile // _LANES):
        local = jnp.maximum(local, h[:, i * _LANES:(i + 1) * _LANES])

    @pl.when(n == 0)
    def _():
        mmax_ref[...] = local

    @pl.when(n > 0)
    def _():
        mmax_ref[...] = jnp.maximum(mmax_ref[...], local)

    @pl.when(n == pl.num_programs(1) - 1)
    def _():
        # Single cross-lane reduce per batch element.
        out_ref[...] = jnp.max(mmax_ref[...], axis=1, keepdims=True)


def pointnet_encoder_forward(x_ncl, folded, *, n_tile=1024):
    """x_ncl: (B, C, N) float32 (PyTorch Conv1d layout). Returns (B, 1024)."""
    B, C, N = x_ncl.shape
    assert n_tile % _LANES == 0
    c_pad = 8
    assert C < c_pad, "need a spare padded channel for the conv1-bias trick"

    # Clamp the tile for small point clouds (keep a multiple of 128).
    n_tile = min(n_tile, _LANES * int(pl.cdiv(N, _LANES)))
    n_tiles = int(pl.cdiv(N, n_tile))
    n_padded = n_tiles * n_tile

    # Edge-replicate the points axis: duplicated real points cannot change the
    # channel max, so no in-kernel masking is needed.  Channel layout after
    # padding: [xyz..., ones (carries b1 via w1), zeros...].
    x_pts = jnp.pad(x_ncl, ((0, 0), (0, 0), (0, n_padded - N)), mode="edge")
    ones = jnp.ones((B, 1, n_padded), x_pts.dtype)
    zeros = jnp.zeros((B, c_pad - C - 1, n_padded), x_pts.dtype)
    x = jnp.concatenate([x_pts, ones, zeros], axis=1).astype(jnp.bfloat16)

    # conv1: BN-folded weight in columns 0..C-1, folded bias in column C.
    w1 = jnp.zeros((64, c_pad), jnp.float32)
    w1 = w1.at[:, :C].set(folded["w1"])
    w1 = w1.at[:, C].set(folded["b1"])
    w1 = w1.astype(jnp.bfloat16)                                               # (64, 8)
    w2 = folded["w2"].astype(jnp.bfloat16)                                     # (128, 64)
    w3 = folded["w3"].astype(jnp.bfloat16)                                     # (1024, 128)
    b2 = folded["b2"].reshape(128, 1).astype(jnp.float32)
    b3 = folded["b3"].astype(jnp.float32)                                      # (1024,)

    flops = 2 * B * n_padded * (c_pad * 64 + 64 * 128 + 128 * 1024)
    bytes_accessed = int(x.size * 2 + w1.size * 2 + w2.size * 2 + w3.size * 2
                         + b2.size * 4 + B * 1024 * 4)

    out = pl.pallas_call(
        functools.partial(encoder_kernel, n_tile=n_tile),
        out_shape=jax.ShapeDtypeStruct((B, 1024, 1), jnp.float32),
        grid=(B, n_tiles),
        in_specs=[
            pl.BlockSpec((pl.Squeezed(), c_pad, n_tile), lambda b, n: (b, 0, n)),
            pl.BlockSpec((64, c_pad), lambda b, n: (0, 0)),
            pl.BlockSpec((128, 64), lambda b, n: (0, 0)),
            pl.BlockSpec((128, 1), lambda b, n: (0, 0)),
            pl.BlockSpec((1024, 128), lambda b, n: (0, 0)),
        ],
        out_specs=pl.BlockSpec((pl.Squeezed(), 1024, 1), lambda b, n: (b, 0, 0)),
        scratch_shapes=[pltpu.VMEM((1024, _LANES), jnp.float32)],
        compiler_params=pltpu.CompilerParams(
            dimension_semantics=("parallel", "arbitrary"),
            # ~6 MB live at n_tile=1024; 32 MiB keeps headroom on every
            # generation (v7x physical VMEM is 64 MiB).
            vmem_limit_bytes=32 * 1024 * 1024,
        ),
        cost_estimate=pl.CostEstimate(flops=flops, transcendentals=0,
                                      bytes_accessed=bytes_accessed),
    )(x, w1, w2, b2, w3)

    # bn3/conv3 per-channel additive shift commutes with the max over points.
    return out.reshape(B, 1024) + b3[None, :]


def init_raw_params(key, channel=3):
    """Synthetic eval-mode parameters with the PyTorch module's shapes."""
    ks = iter(jax.random.split(key, 32))

    def uni(shape, scale=0.1):
        return jax.random.uniform(next(ks), shape, jnp.float32, -scale, scale)

    raw = {}
    for i, (co, ci) in enumerate(((64, channel), (128, 64), (1024, 128)), start=1):
        raw[f"conv{i}_w"] = uni((co, ci))          # Conv1d weight (C_out, C_in, 1) squeezed
        raw[f"conv{i}_b"] = uni((co,))
        raw[f"bn{i}_gamma"] = 1.0 + uni((co,), 0.05)
        raw[f"bn{i}_beta"] = uni((co,), 0.05)
        raw[f"bn{i}_mean"] = uni((co,), 0.05)
        raw[f"bn{i}_var"] = 1.0 + jnp.abs(uni((co,), 0.05))
    return raw


def fold_bn_into_conv(raw, eps=1e-5):
    """Eval-mode BN folded into the 1x1 conv: W' = s*W, b' = s*b + t."""
    # TODO(synk): training-mode BatchNorm (batch statistics) is not implemented.
    folded = {}
    for i in (1, 2, 3):
        s = raw[f"bn{i}_gamma"] / jnp.sqrt(raw[f"bn{i}_var"] + eps)
        t = raw[f"bn{i}_beta"] - raw[f"bn{i}_mean"] * s
        folded[f"w{i}"] = raw[f"conv{i}_w"] * s[:, None]
        folded[f"b{i}"] = raw[f"conv{i}_b"] * s + t
    return folded


def reference_forward(x_ncl, raw, eps=1e-5):
    """Pure-JAX f32 mirror of PyTorch eval-mode PointNetEncoder.forward."""
    h = x_ncl.astype(jnp.float32)
    for i, relu in ((1, True), (2, True), (3, False)):
        y = jnp.einsum("oi,bin->bon", raw[f"conv{i}_w"], h) \
            + raw[f"conv{i}_b"][None, :, None]
        s = raw[f"bn{i}_gamma"] / jnp.sqrt(raw[f"bn{i}_var"] + eps)
        t = raw[f"bn{i}_beta"] - raw[f"bn{i}_mean"] * s
        y = y * s[None, :, None] + t[None, :, None]
        h = jnp.maximum(y, 0.0) if relu else y
    return jnp.max(h, axis=2)                      # (B, 1024) global feature


if __name__ == "__main__":
    key = jax.random.PRNGKey(0)
    k_param, k_x = jax.random.split(key)

    # Small shapes: 2 point clouds, xyz channels, 320 points (non-multiple of
    # 128 exercises edge-replicated point padding; B=2 feeds both v7x cores).
    B, C, N = 2, 3, 320

    raw = init_raw_params(k_param, channel=C)
    folded = fold_bn_into_conv(raw)
    x = jax.random.normal(k_x, (B, C, N), jnp.float32)

    out = pointnet_encoder_forward(x, folded)
    out = jax.block_until_ready(out)

    ref = reference_forward(x, raw)
    assert out.shape == (B, 1024)
    # bf16 matmuls (f32 accumulation) -> slightly looser tolerance than pure f32.
    assert jnp.allclose(out, ref, atol=3e-2, rtol=3e-2), "mismatch vs reference"

    print("KERNEL_OK")
</pallas_src>

<mosaic_0001>
module attributes {stable_mosaic.version = 11 : i64} {
  func.func @encoder_kernel(%arg0: i32, %arg1: i32, %arg2: memref<1x8x384xbf16, #tpu.memory_space<vmem>>, %arg3: memref<64x8xbf16, #tpu.memory_space<vmem>>, %arg4: memref<128x64xbf16, #tpu.memory_space<vmem>>, %arg5: memref<128x1xf32, #tpu.memory_space<vmem>>, %arg6: memref<1024x128xbf16, #tpu.memory_space<vmem>>, %arg7: memref<1x1024x1xf32, #tpu.memory_space<vmem>>, %arg8: memref<1024x128xf32, #tpu.memory_space<vmem>>) attributes {dimension_semantics = [#tpu.dimension_semantics<parallel>, #tpu.dimension_semantics<arbitrary>], iteration_bounds = array<i64: 2, 1>, scalar_prefetch = 0 : i64, scratch_operands = 1 : i64, tpu.core_type = #tpu.core_type<tc>, window_params = [{transform_indices = @transform_0, window_bounds = array<i64: 1, 8, 384>}, {pipeline_mode = #tpu.pipeline_mode<synchronous>, transform_indices = @transform_1, window_bounds = array<i64: 64, 8>}, {pipeline_mode = #tpu.pipeline_mode<synchronous>, transform_indices = @transform_2, window_bounds = array<i64: 128, 64>}, {pipeline_mode = #tpu.pipeline_mode<synchronous>, transform_indices = @transform_3, window_bounds = array<i64: 128, 1>}, {pipeline_mode = #tpu.pipeline_mode<synchronous>, transform_indices = @transform_4, window_bounds = array<i64: 1024, 128>}, {transform_indices = @transform_5, window_bounds = array<i64: 1, 1024, 1>}]} {
    %c0 = arith.constant 0 : index
    %c0_0 = arith.constant 0 : index
    %c0_1 = arith.constant 0 : index
    %0 = vector.load %arg2[%c0, %c0_0, %c0_1] : memref<1x8x384xbf16, #tpu.memory_space<vmem>>, vector<1x8x384xbf16>
    %1 = vector.shape_cast %0 : vector<1x8x384xbf16> to vector<8x384xbf16>
    %c0_2 = arith.constant 0 : index
    %c0_3 = arith.constant 0 : index
    %2 = vector.load %arg3[%c0_2, %c0_3] : memref<64x8xbf16, #tpu.memory_space<vmem>>, vector<64x8xbf16>
    %cst = arith.constant dense<0.000000e+00> : vector<64x384xf32>
    %3 = tpu.matmul %2, %1, %cst {dimension_numbers = #tpu.dot_dimension_numbers<[1], [0], [0], [1], [0, 0, 1, 1], [], []>} : vector<64x8xbf16>, vector<8x384xbf16>, vector<64x384xf32> -> vector<64x384xf32>
    %cst_4 = arith.constant 0.000000e+00 : f32
    %4 = vector.broadcast %cst_4 : f32 to vector<64x384xf32>
    %5 = arith.maximumf %3, %4 : vector<64x384xf32>
    %c0_5 = arith.constant 0 : index
    %c0_6 = arith.constant 0 : index
    %6 = vector.load %arg4[%c0_5, %c0_6] : memref<128x64xbf16, #tpu.memory_space<vmem>>, vector<128x64xbf16>
    %7 = arith.truncf %5 : vector<64x384xf32> to vector<64x384xbf16>
    %cst_7 = arith.constant dense<0.000000e+00> : vector<128x384xf32>
    %8 = tpu.matmul %6, %7, %cst_7 {dimension_numbers = #tpu.dot_dimension_numbers<[1], [0], [0], [1], [0, 0, 1, 1], [], []>} : vector<128x64xbf16>, vector<64x384xbf16>, vector<128x384xf32> -> vector<128x384xf32>
    %c0_8 = arith.constant 0 : index
    %c0_9 = arith.constant 0 : index
    %9 = vector.load %arg5[%c0_8, %c0_9] : memref<128x1xf32, #tpu.memory_space<vmem>>, vector<128x1xf32>
    %10 = vector.broadcast %9 : vector<128x1xf32> to vector<128x384xf32>
    %11 = arith.addf %8, %10 : vector<128x384xf32>
    %cst_10 = arith.constant 0.000000e+00 : f32
    %12 = vector.broadcast %cst_10 : f32 to vector<128x384xf32>
    %13 = arith.maximumf %11, %12 : vector<128x384xf32>
    %c0_11 = arith.constant 0 : index
    %c0_12 = arith.constant 0 : index
    %14 = vector.load %arg6[%c0_11, %c0_12] : memref<1024x128xbf16, #tpu.memory_space<vmem>>, vector<1024x128xbf16>
    %15 = arith.truncf %13 : vector<128x384xf32> to vector<128x384xbf16>
    %cst_13 = arith.constant dense<0.000000e+00> : vector<1024x384xf32>
    %16 = tpu.matmul %14, %15, %cst_13 {dimension_numbers = #tpu.dot_dimension_numbers<[1], [0], [0], [1], [0, 0, 1, 1], [], []>} : vector<1024x128xbf16>, vector<128x384xbf16>, vector<1024x384xf32> -> vector<1024x384xf32>
    %17 = vector.extract_strided_slice %16 {offsets = [0, 0], sizes = [1024, 128], strides = [1, 1]} : vector<1024x384xf32> to vector<1024x128xf32>
    %18 = vector.extract_strided_slice %16 {offsets = [0, 128], sizes = [1024, 128], strides = [1, 1]} : vector<1024x384xf32> to vector<1024x128xf32>
    %19 = arith.maximumf %17, %18 : vector<1024x128xf32>
    %20 = vector.extract_strided_slice %16 {offsets = [0, 256], sizes = [1024, 128], strides = [1, 1]} : vector<1024x384xf32> to vector<1024x128xf32>
    %21 = arith.maximumf %19, %20 : vector<1024x128xf32>
    %c0_i32 = arith.constant 0 : i32
    %22 = arith.cmpi eq, %arg1, %c0_i32 : i32
    %23 = arith.extui %22 : i1 to i32
    %c0_i32_14 = arith.constant 0 : i32
    %24 = arith.cmpi ne, %23, %c0_i32_14 : i32
    scf.if %24 {
      %c0_19 = arith.constant 0 : index
      %c0_20 = arith.constant 0 : index
      %31 = vector.load %arg8[%c0_19, %c0_20] : memref<1024x128xf32, #tpu.memory_space<vmem>>, vector<1024x128xf32>
      tpu.vector_store %arg8[%c0_19, %c0_20], %21 {strides = array<i32>} : memref<1024x128xf32, #tpu.memory_space<vmem>>, vector<1024x128xf32>,
    } else {
    }
    %c0_i32_15 = arith.constant 0 : i32
    %25 = arith.cmpi sgt, %arg1, %c0_i32_15 : i32
    %26 = arith.extui %25 : i1 to i32
    %c0_i32_16 = arith.constant 0 : i32
    %27 = arith.cmpi ne, %26, %c0_i32_16 : i32
    scf.if %27 {
      %c0_19 = arith.constant 0 : index
      %c0_20 = arith.constant 0 : index
      %31 = vector.load %arg8[%c0_19, %c0_20] : memref<1024x128xf32, #tpu.memory_space<vmem>>, vector<1024x128xf32>
      %32 = arith.maximumf %31, %21 : vector<1024x128xf32>
      %c0_21 = arith.constant 0 : index
      %c0_22 = arith.constant 0 : index
      %33 = vector.load %arg8[%c0_21, %c0_22] : memref<1024x128xf32, #tpu.memory_space<vmem>>, vector<1024x128xf32>
      tpu.vector_store %arg8[%c0_21, %c0_22], %32 {strides = array<i32>} : memref<1024x128xf32, #tpu.memory_space<vmem>>, vector<1024x128xf32>,
    } else {
    }
    %c0_i32_17 = arith.constant 0 : i32
    %28 = arith.cmpi eq, %arg1, %c0_i32_17 : i32
    %29 = arith.extui %28 : i1 to i32
    %c0_i32_18 = arith.constant 0 : i32
    %30 = arith.cmpi ne, %29, %c0_i32_18 : i32
    scf.if %30 {
      %c0_19 = arith.constant 0 : index
      %c0_20 = arith.constant 0 : index
      %31 = vector.load %arg8[%c0_19, %c0_20] : memref<1024x128xf32, #tpu.memory_space<vmem>>, vector<1024x128xf32>
      %cst_21 = arith.constant dense<0xFF800000> : vector<1024xf32>
      %32 = vector.multi_reduction <maximumf>, %31, %cst_21 [1] : vector<1024x128xf32> to vector<1024xf32>
      %33 = vector.shape_cast %32 : vector<1024xf32> to vector<1024x1xf32>
      %c0_22 = arith.constant 0 : index
      %c0_23 = arith.constant 0 : index
      %c0_24 = arith.constant 0 : index
      %34 = vector.load %arg7[%c0_22, %c0_23, %c0_24] : memref<1x1024x1xf32, #tpu.memory_space<vmem>>, vector<1x1024x1xf32>
      %35 = vector.shape_cast %34 : vector<1x1024x1xf32> to vector<1024x1xf32>
      %36 = vector.shape_cast %33 : vector<1024x1xf32> to vector<1x1024x1xf32>
      tpu.vector_store %arg7[%c0_22, %c0_23, %c0_24], %36 {strides = array<i32>} : memref<1x1024x1xf32, #tpu.memory_space<vmem>>, vector<1x1024x1xf32>,
    } else {
    }
    return
  }
  func.func @transform_0(%arg0: i32, %arg1: i32) -> (i32, i32, i32) {
    %c0_i32 = arith.constant 0 : i32
    %c0_i32_0 = arith.constant 0 : i32
    return %arg0, %c0_i32, %arg1 : i32, i32, i32
  }
  func.func @transform_1(%arg0: i32, %arg1: i32) -> (i32, i32) {
    %c0_i32 = arith.constant 0 : i32
    %c0_i32_0 = arith.constant 0 : i32
    %c0_i32_1 = arith.constant 0 : i32
    return %c0_i32, %c0_i32_0 : i32, i32
  }
  func.func @transform_2(%arg0: i32, %arg1: i32) -> (i32, i32) {
    %c0_i32 = arith.constant 0 : i32
    %c0_i32_0 = arith.constant 0 : i32
    %c0_i32_1 = arith.constant 0 : i32
    return %c0_i32, %c0_i32_0 : i32, i32
  }
  func.func @transform_3(%arg0: i32, %arg1: i32) -> (i32, i32) {
    %c0_i32 = arith.constant 0 : i32
    %c0_i32_0 = arith.constant 0 : i32
    %c0_i32_1 = arith.constant 0 : i32
    return %c0_i32, %c0_i32_0 : i32, i32
  }
  func.func @transform_4(%arg0: i32, %arg1: i32) -> (i32, i32) {
    %c0_i32 = arith.constant 0 : i32
    %c0_i32_0 = arith.constant 0 : i32
    %c0_i32_1 = arith.constant 0 : i32
    return %c0_i32, %c0_i32_0 : i32, i32
  }
  func.func @transform_5(%arg0: i32, %arg1: i32) -> (i32, i32, i32) {
    %c0_i32 = arith.constant 0 : i32
    %c0_i32_0 = arith.constant 0 : i32
    %c0_i32_1 = arith.constant 0 : i32
    return %arg0, %c0_i32, %c0_i32_0 : i32, i32, i32
  }
}

</mosaic_0001>

<llo_original>
// kernel: tpu_custom_call.1
$region0: #{tpu_custom_call.1}
  #allocation0 [shape = 'u32[]', space=smem, size = 0x4, offset = 0x4, fixed_abs, tag = 'smem constant byte address 0x4 - core index']
  #allocation1 [shape = 'u32[72,128]{1,0:T(1,128)}', space=vmem, size = 0x9000, scoped, tag = 'internal scratch']
  #allocation2 [shape = 'f32[1024,128]{1,0:T(8,128)}', space=vmem, size = 0x80000, scoped, tag = 'scratch operand']
  %s0 = inlined_call_operand.vmem [shape: bf16[2,8,384], index: 0, kind: input, shape index: {}]
  %s1 = inlined_call_operand.vmem [shape: bf16[64,8], index: 1, kind: input, shape index: {}]
  %s2 = inlined_call_operand.vmem [shape: bf16[128,64], index: 2, kind: input, shape index: {}]
  %s3 = inlined_call_operand.vmem [shape: f32[128,1], index: 3, kind: input, shape index: {}]
  %s4 = inlined_call_operand.hbm [shape: bf16[1024,128], index: 4, kind: input, shape index: {}]
  %s5 = inlined_call_operand.vmem [shape: f32[2,1024,1], index: 5, kind: output, shape index: {}]
  %s6 = sld [smem:[#allocation0]]
  $region69: #{tpu_custom_call.1} parent=0
    _
  %s8 = ssub.s32 1, %s6
  %s9 = scalar_select 0, %s8, %s6
  $region1: #{tpu_custom_call.1} parent=0
    #allocation3 [shape = 'u8[262144]{0}', space=vmem, size = 0x40000, scoped, tag = 'input window, operand 4, single buffered']
    #allocation4 [shape = 's32[2]{0}', space=sflag, size = 0x8, scoped, tag = 'scoped memory for tpu_custom_call.1']
    %10 = vsyncpa [#allocation4], 0
    loop: start=0, step=1, limit=4
    $region2: #{tpu_custom_call.1} parent=1 // loop_pre_header
      _
    $region3: #{tpu_custom_call.1} parent=1 // loop_header
      %s12 = sphi 0, %s16
      %p13 = scmp.ge.s32.totalorder %s12, 4
      %s19 = sphi 0, %s31
      %s20 = sphi 0, %s27
      %s21 = sphi 0, %s19
      %s22 = sphi 0, %s20
      %s23 = sphi 0, %s21
      %s24 = sphi 0, %s22
      %s36 = sphi 0, %s38
      %s39 = sphi 0, %s36
      %s40 = sphi 0, %s39
      %s56 = sphi 0, %s40
      %s60 = sphi 0, %s60
      %s62 = sphi 0, %s60
      %s63 = sphi 0, %s62
      %s77 = sphi 0, %s63
      %s81 = sphi 0, %s81
      %s83 = sphi 0, %s81
      %s84 = sphi 0, %s83
      %s98 = sphi 0, %s84
      %s102 = sphi 0, %s102
      %s104 = sphi 0, %s102
      %s105 = sphi 0, %s104
      %s119 = sphi 0, %s105
      %s123 = sphi 0, %s123
      %s125 = sphi 0, %s123
      %s126 = sphi 0, %s125
      %s140 = sphi 0, %s126
      %s146 = sphi 0, %s148
      %s149 = sphi 0, %s146
      %s150 = sphi 0, %s149
      %s166 = sphi 0, %s150
    $region4: #{tpu_custom_call.1} parent=1 // loop_header_branch
      %15 = sbr.rel (%p13) target = $region8
    $region5: #{tpu_custom_call.1} parent=1 // loop_body
      %s17 = ssub.s32 %s12, 1
      %s18 = ssub.s32 %s12, 2
      %s25 = sadd.s32 1, %s20
      %p26 = scmp.ge.s32.totalorder %s25, 1
      %s27 = scalar_select %p26, 0, %s25
      %s28 = sadd.s32 1, %s19
      %s29 = scalar_select %p26, %s28, %s19
      %p30 = scmp.ge.s32.totalorder %s29, 2
      %s31 = scalar_select %p30, 0, %s29
      %s32 = ssub.s32 %s19, %s31
      %s33 = ssub.s32 %s20, %s27
      %s34 = sor.u32 %s32, %s33
      %p35 = scmp.eq.s32.totalorder %s34, 0
      %s37 = sadd.s32 %s36, 1
      %s38 = scalar_select %p35, %s36, %s37
      %p41 = pneg %p35
      %p42 = scmp.eq.s32.totalorder %s12, 1
      %p43 = por %p41, %p42
      %p44 = scmp.ne.s32.totalorder %s36, %s39
      %p45 = scmp.eq.s32.totalorder %s12, 0
      %p46 = por %p44, %p45
      %p47 = scmp.ne.s32.totalorder %s36, %s39
      %p48 = scmp.eq.s32.totalorder %s17, 1
      %p49 = por %p47, %p48
      %p50 = scmp.ne.s32.totalorder %s39, %s40
      %p51 = scmp.eq.s32.totalorder %s17, 0
      %p52 = por %p50, %p51
      %p53 = scmp.ne.s32.totalorder %s39, %s40
      %p54 = scmp.eq.s32.totalorder %s18, 1
      %p55 = por %p53, %p54
      %p57 = scmp.ne.s32.totalorder %s40, %s56
      %p58 = scmp.eq.s32.totalorder %s18, 0
      %p59 = por %p57, %p58
      %s61 = sadd.s32 %s60, 1
      %p64 = scmp.eq.s32.totalorder %s12, 1
      %p65 = scmp.ne.s32.totalorder %s60, %s62
      %p66 = scmp.eq.s32.totalorder %s12, 0
      %p67 = por %p65, %p66
      %p68 = scmp.ne.s32.totalorder %s60, %s62
      %p69 = scmp.eq.s32.totalorder %s17, 1
      %p70 = por %p68, %p69
      %p71 = scmp.ne.s32.totalorder %s62, %s63
      %p72 = scmp.eq.s32.totalorder %s17, 0
      %p73 = por %p71, %p72
      %p74 = scmp.ne.s32.totalorder %s62, %s63
      %p75 = scmp.eq.s32.totalorder %s18, 1
      %p76 = por %p74, %p75
      %p78 = scmp.ne.s32.totalorder %s63, %s77
      %p79 = scmp.eq.s32.totalorder %s18, 0
      %p80 = por %p78, %p79
      %s82 = sadd.s32 %s81, 1
      %p85 = scmp.eq.s32.totalorder %s12, 1
      %p86 = scmp.ne.s32.totalorder %s81, %s83
      %p87 = scmp.eq.s32.totalorder %s12, 0
      %p88 = por %p86, %p87
      %p89 = scmp.ne.s32.totalorder %s81, %s83
      %p90 = scmp.eq.s32.totalorder %s17, 1
      %p91 = por %p89, %p90
      %p92 = scmp.ne.s32.totalorder %s83, %s84
      %p93 = scmp.eq.s32.totalorder %s17, 0
      %p94 = por %p92, %p93
      %p95 = scmp.ne.s32.totalorder %s83, %s84
      %p96 = scmp.eq.s32.totalorder %s18, 1
      %p97 = por %p95, %p96
      %p99 = scmp.ne.s32.totalorder %s84, %s98
      %p100 = scmp.eq.s32.totalorder %s18, 0
      %p101 = por %p99, %p100
      %s103 = sadd.s32 %s102, 1
      %p106 = scmp.eq.s32.totalorder %s12, 1
      %p107 = scmp.ne.s32.totalorder %s102, %s104
      %p108 = scmp.eq.s32.totalorder %s12, 0
      %p109 = por %p107, %p108
      %p110 = scmp.ne.s32.totalorder %s102, %s104
      %p111 = scmp.eq.s32.totalorder %s17, 1
      %p112 = por %p110, %p111
      %p113 = scmp.ne.s32.totalorder %s104, %s105
      %p114 = scmp.eq.s32.totalorder %s17, 0
      %p115 = por %p113, %p114
      %p116 = scmp.ne.s32.totalorder %s104, %s105
      %p117 = scmp.eq.s32.totalorder %s18, 1
      %p118 = por %p116, %p117
      %p120 = scmp.ne.s32.totalorder %s105, %s119
      %p121 = scmp.eq.s32.totalorder %s18, 0
      %p122 = por %p120, %p121
      %s124 = sadd.s32 %s123, 1
      %p127 = scmp.eq.s32.totalorder %s12, 1
      %p128 = scmp.ne.s32.totalorder %s123, %s125
      %p129 = scmp.eq.s32.totalorder %s12, 0
      %p130 = por %p128, %p129
      %p131 = scmp.ne.s32.totalorder %s123, %s125
      %p132 = scmp.eq.s32.totalorder %s17, 1
      %p133 = por %p131, %p132
      %p134 = scmp.ne.s32.totalorder %s125, %s126
      %p135 = scmp.eq.s32.totalorder %s17, 0
      %p136 = por %p134, %p135
      %p137 = scmp.ne.s32.totalorder %s125, %s126
      %p138 = scmp.eq.s32.totalorder %s18, 1
      %p139 = por %p137, %p138
      %p141 = scmp.ne.s32.totalorder %s126, %s140
      %p142 = scmp.eq.s32.totalorder %s18, 0
      %p143 = por %p141, %p142
      %s144 = ssub.s32 %s19, %s31
      %p145 = scmp.eq.s32.totalorder %s144, 0
      %s147 = sadd.s32 %s146, 1
      %s148 = scalar_select %p145, %s146, %s147
      %p151 = pneg %p145
      %p152 = scmp.eq.s32.totalorder %s12, 1
      %p153 = por %p151, %p152
      %p154 = scmp.ne.s32.totalorder %s146, %s149
      %p155 = scmp.eq.s32.totalorder %s12, 0
      %p156 = por %p154, %p155
      %p157 = scmp.ne.s32.totalorder %s146, %s149
      %p158 = scmp.eq.s32.totalorder %s17, 1
      %p159 = por %p157, %p158
      %p160 = scmp.ne.s32.totalorder %s149, %s150
      %p161 = scmp.eq.s32.totalorder %s17, 0
      %p162 = por %p160, %p161
      %p163 = scmp.ne.s32.totalorder %s149, %s150
      %p164 = scmp.eq.s32.totalorder %s18, 1
      %p165 = por %p163, %p164
      %p167 = scmp.ne.s32.totalorder %s150, %s166
      %p168 = scmp.eq.s32.totalorder %s18, 0
      %p169 = por %p167, %p168
      %p170 = scmp.le.s32.totalorder 1, %s12
      %p171 = scmp.lt.s32.totalorder %s12, 3
      %p172 = pnand %p170, %p171
      %p173 = pneg %p172
      // Predicated region
      $region9: #{tpu_custom_call.1} parent=5 // pred_check
        _
      $region10: #{tpu_custom_call.1} parent=5 // pred_check_branch
        %175 = sbr.rel (%p172) target = $region12
      $region11: #{tpu_custom_call.1} parent=5 // pred_region
        %s176 = ssub.s32 %s12, 1
        // Predicated region
        $region13: #{tpu_custom_call.1} parent=11 // pred_check
          %p177 = pneg %p73
        $region14: #{tpu_custom_call.1} parent=11 // pred_check_branch
          %179 = sbr.rel (%p177) target = $region16
        $region15: #{tpu_custom_call.1} parent=11 // pred_region
          _
        $region16: #{tpu_custom_call.1} parent=11 // pred_fallthru
          _
        // Predicated region
        $region17: #{tpu_custom_call.1} parent=11 // pred_check
          %p180 = pneg %p94
        $region18: #{tpu_custom_call.1} parent=11 // pred_check_branch
          %182 = sbr.rel (%p180) target = $region20
        $region19: #{tpu_custom_call.1} parent=11 // pred_region
          _
        $region20: #{tpu_custom_call.1} parent=11 // pred_fallthru
          _
        // Predicated region
        $region21: #{tpu_custom_call.1} parent=11 // pred_check
          %p183 = pneg %p115
        $region22: #{tpu_custom_call.1} parent=11 // pred_check_branch
          %185 = sbr.rel (%p183) target = $region24
        $region23: #{tpu_custom_call.1} parent=11 // pred_region
          _
        $region24: #{tpu_custom_call.1} parent=11 // pred_fallthru
          _
        // Predicated region
        $region25: #{tpu_custom_call.1} parent=11 // pred_check
          %p186 = pneg %p136
        $region26: #{tpu_custom_call.1} parent=11 // pred_check_branch
          %188 = sbr.rel (%p186) target = $region28
        $region27: #{tpu_custom_call.1} parent=11 // pred_region
          %190 = vsyncadd [#allocation4], 0
          %s191 = sshll.u32 %s4, 4
          %s192 = int_to_ptr.hbm [resolvable:$true] %s191
          %s193 = sshll.u32 [#allocation3], 4
          %s194 = int_to_ptr.vmem [resolvable:$true] %s193
          %199 = dma.hbm_to_vmem [thread:$0]  %s192, 8192, %s194, [#allocation4], 64, 64, 4
        $region28: #{tpu_custom_call.1} parent=11 // pred_fallthru
          _
      $region12: #{tpu_custom_call.1} parent=5 // pred_fallthru
        _
      %p200 = scmp.lt.s32.totalorder %s12, 2
      // Predicated region
      $region29: #{tpu_custom_call.1} parent=5 // pred_check
        %p201 = pneg %p200
      $region30: #{tpu_custom_call.1} parent=5 // pred_check_branch
        %203 = sbr.rel (%p201) target = $region32
      $region31: #{tpu_custom_call.1} parent=5 // pred_region
        // Predicated region
        $region33: #{tpu_custom_call.1} parent=31 // pred_check
          %p204 = pneg %p46
        $region34: #{tpu_custom_call.1} parent=31 // pred_check_branch
          %206 = sbr.rel (%p204) target = $region36
        $region35: #{tpu_custom_call.1} parent=31 // pred_region
          %s207 = smul.u32 3, %s20
          %p208 = scmp.lt.s32.totalorder %s19, 1
          %s209 = scalar_select %p208, %s19, 1
          %p210 = scmp.lt.s32.totalorder %s207, 2
          %s211 = scalar_select %p210, %s207, 2
          %s212 = smul.addr %s209, 3
          %s213 = sadd.s32 %s211, %s212
          %s214 = smul.addr %s213, 4
          %s215 = scalar_lea.vmem %s0, %s214
          %s216 = smul.u32 3, %s20
        $region36: #{tpu_custom_call.1} parent=31 // pred_fallthru
          _
      $region32: #{tpu_custom_call.1} parent=5 // pred_fallthru
        _
      %p217 = scmp.le.s32.totalorder 1, %s12
      %p218 = scmp.lt.s32.totalorder %s12, 3
      %p219 = pnand %p217, %p218
      %p220 = pneg %p219
      // Predicated region
      $region37: #{tpu_custom_call.1} parent=5 // pred_check
        _
      $region38: #{tpu_custom_call.1} parent=5 // pred_check_branch
        %222 = sbr.rel (%p219) target = $region40
      $region39: #{tpu_custom_call.1} parent=5 // pred_region
        %s223 = ssub.s32 %s12, 1
        // Predicated region
        $region41: #{tpu_custom_call.1} parent=39 // pred_check
          %p224 = pneg %p136
        $region42: #{tpu_custom_call.1} parent=39 // pred_check_branch
          %226 = sbr.rel (%p224) target = $region44
        $region43: #{tpu_custom_call.1} parent=39 // pred_region
          %228 = dma.done [#allocation4], 8192
        $region44: #{tpu_custom_call.1} parent=39 // pred_fallthru
          _
        %s229 = smul.u32 3, %s22
        %p230 = scmp.lt.s32.totalorder %s21, 1
        %s231 = scalar_select %p230, %s21, 1
        %p232 = scmp.lt.s32.totalorder %s229, 2
        %s233 = scalar_select %p232, %s229, 2
        %s234 = smul.addr %s231, 3
        %s235 = sadd.s32 %s233, %s234
        %s236 = smul.addr %s235, 4
        %s237 = scalar_lea.vmem %s0, %s236
        %p238 = pneg %p52
        %p239 = pneg %p49
        %p240 = pneg %p73
        %p241 = pneg %p70
        %p242 = pneg %p94
        %p243 = pneg %p91
        %p244 = pneg %p115
        %p245 = pneg %p112
        %p246 = pneg %p136
        %p247 = pneg %p133
        %p248 = pneg %p162
        %p249 = pneg %p159
        %p250 = scmp.lt.s32.totalorder %s21, 1
        %s251 = scalar_select %p250, %s21, 1
        %s252 = smul.addr %s251, 128
        %s253 = smul.addr %s252, 8
        %s254 = scalar_lea.vmem %s5, %s253
        %s255 = smul.u32 3, %s22
        %p256 = scmp.lt.s32.totalorder %s21, 1
        %s257 = scalar_select %p256, %s21, 1
        %p258 = scmp.lt.s32.totalorder %s255, 2
        %s259 = scalar_select %p258, %s255, 2
        %s260 = smul.addr %s257, 3
        %s261 = sadd.s32 %s259, %s260
        %s262 = smul.addr %s261, 4
        %s263 = scalar_lea.vmem %s0, %s262
        %s264 = smul.u32 3, %s22
        %p265 = scmp.lt.s32.totalorder %s21, 1
        %s266 = scalar_select %p265, %s21, 1
        %s267 = smul.addr %s266, 128
        %s268 = smul.addr %s267, 8
        %s269 = scalar_lea.vmem %s5, %s268
        %v271 = vld [vmem:[%s263] sm:$0xff]
        %v272 = vld [vmem:[%s263 + $0x8] sm:$0xf]
        %v273 = vld [vmem:[%s1] sm:$0xf]
        %v274 = vld [vmem:[%s1 + $0x4] sm:$0xf]
        %v275 = vld [vmem:[%s1 + $0x8] sm:$0xf]
        %v276 = vld [vmem:[%s1 + $0xc] sm:$0xf]
        %v277 = vld [vmem:[%s1 + $0x10] sm:$0xf]
        %v278 = vld [vmem:[%s1 + $0x14] sm:$0xf]
        %v279 = vld [vmem:[%s1 + $0x18] sm:$0xf]
        %v280 = vld [vmem:[%s1 + $0x1c] sm:$0xf]
        %v289 = vunpack.c.l.b16 %v273
        %v290 = vunpack.c.l.b16 %v274
        %v291 = vunpack.c.l.b16 %v275
        %v292 = vunpack.c.l.b16 %v276
        %v293 = vunpack.c.l.b16 %v277
        %v294 = vunpack.c.l.b16 %v278
        %v295 = vunpack.c.l.b16 %v279
        %v296 = vunpack.c.l.b16 %v280
        %v297 = vpack.c.b16 %v290, %v289
        %v298 = vpack.c.b16 %v292, %v291
        %v299 = vpack.c.b16 %v294, %v293
        %v300 = vpack.c.b16 %v296, %v295
        %v303 = vunpack.c.l.b16 %v271
        %v304 = vunpack.c.h.b16 %v271
        %v305 = vunpack.c.l.b16 %v272
        %v306 = vpack.c.b16 %v303, %v303
        %v307 = vpack.c.b16 %v304, %v304
        %v308 = vpack.c.b16 %v305, %v305
        %vm309 = vcmask 64512
        %v311 = vsel %vm309, %v297, 0
        %v314 = vsel %vm309, %v298, 0
        %v317 = vsel %vm309, %v299, 0
        %v320 = vsel %vm309, %v300, 0
        %vm322 = vcmask 1043456
        %v324 = vsel %vm322, %v306, 0
        %v327 = vsel %vm322, %v307, 0
        %v330 = vsel %vm322, %v308, 0
        %332 = vmatpush.bf16.msra.mxu0 0
        %333 = vmatpush.bf16.msra.mxu0 0
        %334 = vmatpush.bf16.msra.mxu0 0
        %335 = vmatpush.bf16.msra.mxu0 0
        %336 = vmatpush.bf16.msra.mxu0 0
        %337 = vmatpush.bf16.msra.mxu0 0
        %338 = vmatpush.bf16.msra.mxu0 0
        %339 = vmatpush.bf16.msra.mxu0 %v324
        %340 = vmatmul.bf16.gmra.mxu0 %v311
        %v341 = vpop.f32.mrf.mxu0
        %v342 = vadd.f32 0.0, %v341
        %v343 = vpop.f32.mrf.mxu0
        %v344 = vadd.f32 0.0, %v343
        %345 = vmatmul.bf16.gmra.mxu0 %v314
        %v346 = vpop.f32.mrf.mxu0
        %v347 = vadd.f32 0.0, %v346
        %v348 = vpop.f32.mrf.mxu0
        %v349 = vadd.f32 0.0, %v348
        %350 = vmatmul.bf16.gmra.mxu0 %v317
        %v351 = vpop.f32.mrf.mxu0
        %v352 = vadd.f32 0.0, %v351
        %v353 = vpop.f32.mrf.mxu0
        %v354 = vadd.f32 0.0, %v353
        %355 = vmatmul.bf16.gmra.mxu0 %v320
        %v356 = vpop.f32.mrf.mxu0
        %v357 = vadd.f32 0.0, %v356
        %v358 = vpop.f32.mrf.mxu0
        %v359 = vadd.f32 0.0, %v358
        %360 = vdwg.mxu0
        %361 = vmatpush.bf16.msra.mxu0 0
        %362 = vmatpush.bf16.msra.mxu0 0
        %363 = vmatpush.bf16.msra.mxu0 0
        %364 = vmatpush.bf16.msra.mxu0 0
        %365 = vmatpush.bf16.msra.mxu0 0
        %366 = vmatpush.bf16.msra.mxu0 0
        %367 = vmatpush.bf16.msra.mxu0 0
        %368 = vmatpush.bf16.msra.mxu0 %v327
        %369 = vmatmul.bf16.gmra.mxu0 %v311
        %v370 = vpop.f32.mrf.mxu0
        %v371 = vadd.f32 0.0, %v370
        %v372 = vpop.f32.mrf.mxu0
        %v373 = vadd.f32 0.0, %v372
        %374 = vmatmul.bf16.gmra.mxu0 %v314
        %v375 = vpop.f32.mrf.mxu0
        %v376 = vadd.f32 0.0, %v375
        %v377 = vpop.f32.mrf.mxu0
        %v378 = vadd.f32 0.0, %v377
        %379 = vmatmul.bf16.gmra.mxu0 %v317
        %v380 = vpop.f32.mrf.mxu0
        %v381 = vadd.f32 0.0, %v380
        %v382 = vpop.f32.mrf.mxu0
        %v383 = vadd.f32 0.0, %v382
        %384 = vmatmul.bf16.gmra.mxu0 %v320
        %v385 = vpop.f32.mrf.mxu0
        %v386 = vadd.f32 0.0, %v385
        %v387 = vpop.f32.mrf.mxu0
        %v388 = vadd.f32 0.0, %v387
        %389 = vdwg.mxu0
        %390 = vmatpush.bf16.msra.mxu0 0
        %391 = vmatpush.bf16.msra.mxu0 0
        %392 = vmatpush.bf16.msra.mxu0 0
        %393 = vmatpush.bf16.msra.mxu0 0
        %394 = vmatpush.bf16.msra.mxu0 0
        %395 = vmatpush.bf16.msra.mxu0 0
        %396 = vmatpush.bf16.msra.mxu0 0
        %397 = vmatpush.bf16.msra.mxu0 %v330
        %398 = vmatmul.bf16.gmra.mxu0 %v311
        %v399 = vpop.f32.mrf.mxu0
        %v400 = vadd.f32 0.0, %v399
        %v401 = vpop.f32.mrf.mxu0
        %v402 = vadd.f32 0.0, %v401
        %403 = vmatmul.bf16.gmra.mxu0 %v314
        %v404 = vpop.f32.mrf.mxu0
        %v405 = vadd.f32 0.0, %v404
        %v406 = vpop.f32.mrf.mxu0
        %v407 = vadd.f32 0.0, %v406
        %408 = vmatmul.bf16.gmra.mxu0 %v317
        %v409 = vpop.f32.mrf.mxu0
        %v410 = vadd.f32 0.0, %v409
        %v411 = vpop.f32.mrf.mxu0
        %v412 = vadd.f32 0.0, %v411
        %413 = vmatmul.bf16.gmra.mxu0 %v320
        %v414 = vpop.f32.mrf.mxu0
        %v415 = vadd.f32 0.0, %v414
        %v416 = vpop.f32.mrf.mxu0
        %v417 = vadd.f32 0.0, %v416
        %418 = vdwg.mxu0
        %v419 = vmax.f32 %v342, 0.0
        %v420 = vmax.f32 %v371, 0.0
        %v421 = vmax.f32 %v400, 0.0
        %v422 = vmax.f32 %v344, 0.0
        %v423 = vmax.f32 %v373, 0.0
        %v424 = vmax.f32 %v402, 0.0
        %v425 = vmax.f32 %v347, 0.0
        %v426 = vmax.f32 %v376, 0.0
        %v427 = vmax.f32 %v405, 0.0
        %v428 = vmax.f32 %v349, 0.0
        %v429 = vmax.f32 %v378, 0.0
        %v430 = vmax.f32 %v407, 0.0
        %v431 = vmax.f32 %v352, 0.0
        %v432 = vmax.f32 %v381, 0.0
        %v433 = vmax.f32 %v410, 0.0
        %v434 = vmax.f32 %v354, 0.0
        %v435 = vmax.f32 %v383, 0.0
        %v436 = vmax.f32 %v412, 0.0
        %v437 = vmax.f32 %v357, 0.0
        %v438 = vmax.f32 %v386, 0.0
        %v439 = vmax.f32 %v415, 0.0
        %v440 = vmax.f32 %v359, 0.0
        %v441 = vmax.f32 %v388, 0.0
        %v442 = vmax.f32 %v417, 0.0
        %v443 = vld [vmem:[%s2] sm:$0xf]
        %v444 = vld [vmem:[%s2 + $0x4] sm:$0xf]
        %v445 = vld [vmem:[%s2 + $0x8] sm:$0xf]
        %v446 = vld [vmem:[%s2 + $0xc] sm:$0xf]
        %v447 = vld [vmem:[%s2 + $0x10] sm:$0xf]
        %v448 = vld [vmem:[%s2 + $0x14] sm:$0xf]
        %v449 = vld [vmem:[%s2 + $0x18] sm:$0xf]
        %v450 = vld [vmem:[%s2 + $0x1c] sm:$0xf]
        %v451 = vld [vmem:[%s2 + $0x20] sm:$0xf]
        %v452 = vld [vmem:[%s2 + $0x24] sm:$0xf]
        %v453 = vld [vmem:[%s2 + $0x28] sm:$0xf]
        %v454 = vld [vmem:[%s2 + $0x2c] sm:$0xf]
        %v455 = vld [vmem:[%s2 + $0x30] sm:$0xf]
        %v456 = vld [vmem:[%s2 + $0x34] sm:$0xf]
        %v457 = vld [vmem:[%s2 + $0x38] sm:$0xf]
        %v458 = vld [vmem:[%s2 + $0x3c] sm:$0xf]
        %v459 = vpack.c.bf16 %v422, %v419
        %v460 = vpack.c.bf16 %v423, %v420
        %v461 = vpack.c.bf16 %v424, %v421
        %v462 = vpack.c.bf16 %v428, %v425
        %v463 = vpack.c.bf16 %v429, %v426
        %v464 = vpack.c.bf16 %v430, %v427
        %v465 = vpack.c.bf16 %v434, %v431
        %v466 = vpack.c.bf16 %v435, %v432
        %v467 = vpack.c.bf16 %v436, %v433
        %v468 = vpack.c.bf16 %v440, %v437
        %v469 = vpack.c.bf16 %v441, %v438
        %v470 = vpack.c.bf16 %v442, %v439
        %v471 = vld [vmem:[%s3] sm:$0xff]
        %v472 = vld [vmem:[%s3 + $0x8] sm:$0xff]
        %v473 = vld [vmem:[%s3 + $0x10] sm:$0xff]
        %v474 = vld [vmem:[%s3 + $0x18] sm:$0xff]
        %v475 = vld [vmem:[%s3 + $0x20] sm:$0xff]
        %v476 = vld [vmem:[%s3 + $0x28] sm:$0xff]
        %v477 = vld [vmem:[%s3 + $0x30] sm:$0xff]
        %v478 = vld [vmem:[%s3 + $0x38] sm:$0xff]
        %v479 = vld [vmem:[%s3 + $0x40] sm:$0xff]
        %v480 = vld [vmem:[%s3 + $0x48] sm:$0xff]
        %v481 = vld [vmem:[%s3 + $0x50] sm:$0xff]
        %v482 = vld [vmem:[%s3 + $0x58] sm:$0xff]
        %v483 = vld [vmem:[%s3 + $0x60] sm:$0xff]
        %v484 = vld [vmem:[%s3 + $0x68] sm:$0xff]
        %v485 = vld [vmem:[%s3 + $0x70] sm:$0xff]
        %v486 = vld [vmem:[%s3 + $0x78] sm:$0xff]
        %488 = vset.pattern.permute.xlu0 0
        %489 = vperm.xlu0 %488, %v471
        %v490 = vpop.permute.xlu0 %489
        %493 = vset.pattern.permute.xlu0 0
        %494 = vperm.xlu0 %493, %v472
        %v495 = vpop.permute.xlu0 %494
        %498 = vset.pattern.permute.xlu0 0
        %499 = vperm.xlu0 %498, %v473
        %v500 = vpop.permute.xlu0 %499
        %503 = vset.pattern.permute.xlu0 0
        %504 = vperm.xlu0 %503, %v474
        %v505 = vpop.permute.xlu0 %504
        %508 = vset.pattern.permute.xlu0 0
        %509 = vperm.xlu0 %508, %v475
        %v510 = vpop.permute.xlu0 %509
        %513 = vset.pattern.permute.xlu0 0
        %514 = vperm.xlu0 %513, %v476
        %v515 = vpop.permute.xlu0 %514
        %518 = vset.pattern.permute.xlu0 0
        %519 = vperm.xlu0 %518, %v477
        %v520 = vpop.permute.xlu0 %519
        %523 = vset.pattern.permute.xlu0 0
        %524 = vperm.xlu0 %523, %v478
        %v525 = vpop.permute.xlu0 %524
        %528 = vset.pattern.permute.xlu0 0
        %529 = vperm.xlu0 %528, %v479
        %v530 = vpop.permute.xlu0 %529
        %533 = vset.pattern.permute.xlu0 0
        %534 = vperm.xlu0 %533, %v480
        %v535 = vpop.permute.xlu0 %534
        %538 = vset.pattern.permute.xlu0 0
        %539 = vperm.xlu0 %538, %v481
        %v540 = vpop.permute.xlu0 %539
        %543 = vset.pattern.permute.xlu0 0
        %544 = vperm.xlu0 %543, %v482
        %v545 = vpop.permute.xlu0 %544
        %548 = vset.pattern.permute.xlu0 0
        %549 = vperm.xlu0 %548, %v483
        %v550 = vpop.permute.xlu0 %549
        %553 = vset.pattern.permute.xlu0 0
        %554 = vperm.xlu0 %553, %v484
        %v555 = vpop.permute.xlu0 %554
        %558 = vset.pattern.permute.xlu0 0
        %559 = vperm.xlu0 %558, %v485
        %v560 = vpop.permute.xlu0 %559
        %563 = vset.pattern.permute.xlu0 0
        %564 = vperm.xlu0 %563, %v486
        %v565 = vpop.permute.xlu0 %564
        %v583 = vunpack.c.l.b16 %v443
        %v584 = vunpack.c.l.b16 %v444
        %v585 = vunpack.c.l.b16 %v445
        %v586 = vunpack.c.l.b16 %v446
        %v587 = vunpack.c.l.b16 %v447
        %v588 = vunpack.c.l.b16 %v448
        %v589 = vunpack.c.l.b16 %v449
        %v590 = vunpack.c.l.b16 %v450
        %v591 = vunpack.c.l.b16 %v451
        %v592 = vunpack.c.l.b16 %v452
        %v593 = vunpack.c.l.b16 %v453
        %v594 = vunpack.c.l.b16 %v454
        %v595 = vunpack.c.l.b16 %v455
        %v596 = vunpack.c.l.b16 %v456
        %v597 = vunpack.c.l.b16 %v457
        %v598 = vunpack.c.l.b16 %v458
        %v599 = vpack.c.b16 %v584, %v583
        %v600 = vpack.c.b16 %v586, %v585
        %v601 = vpack.c.b16 %v588, %v587
        %v602 = vpack.c.b16 %v590, %v589
        %v603 = vpack.c.b16 %v592, %v591
        %v604 = vpack.c.b16 %v594, %v593
        %v605 = vpack.c.b16 %v596, %v595
        %v606 = vpack.c.b16 %v598, %v597
        %vm607 = vcmask 523264
        %v609 = vsel %vm607, %v599, 0
        %v612 = vsel %vm607, %v600, 0
        %v615 = vsel %vm607, %v601, 0
        %v618 = vsel %vm607, %v602, 0
        %v621 = vsel %vm607, %v603, 0
        %v624 = vsel %vm607, %v604, 0
        %v627 = vsel %vm607, %v605, 0
        %v630 = vsel %vm607, %v606, 0
        %632 = vmatpush.bf16.msra.mxu0 0
        %633 = vmatpush.bf16.msra.mxu0 0
        %634 = vmatpush.bf16.msra.mxu0 0
        %635 = vmatpush.bf16.msra.mxu0 0
        %636 = vmatpush.bf16.msra.mxu0 %v468
        %637 = vmatpush.bf16.msra.mxu0 %v465
        %638 = vmatpush.bf16.msra.mxu0 %v462
        %639 = vmatpush.bf16.msra.mxu0 %v459
        %640 = vmatmul.bf16.gmra.mxu0 %v609
        %v641 = vpop.f32.mrf.mxu0
        %v642 = vadd.f32 %v490, %v641
        %v643 = vpop.f32.mrf.mxu0
        %v644 = vadd.f32 %v495, %v643
        %645 = vmatmul.bf16.gmra.mxu0 %v612
        %v646 = vpop.f32.mrf.mxu0
        %v647 = vadd.f32 %v500, %v646
        %v648 = vpop.f32.mrf.mxu0
        %v649 = vadd.f32 %v505, %v648
        %650 = vmatmul.bf16.gmra.mxu0 %v615
        %v651 = vpop.f32.mrf.mxu0
        %v652 = vadd.f32 %v510, %v651
        %v653 = vpop.f32.mrf.mxu0
        %v654 = vadd.f32 %v515, %v653
        %655 = vmatmul.bf16.gmra.mxu0 %v618
        %v656 = vpop.f32.mrf.mxu0
        %v657 = vadd.f32 %v520, %v656
        %v658 = vpop.f32.mrf.mxu0
        %v659 = vadd.f32 %v525, %v658
        %660 = vmatmul.bf16.gmra.mxu0 %v621
        %v661 = vpop.f32.mrf.mxu0
        %v662 = vadd.f32 %v530, %v661
        %v663 = vpop.f32.mrf.mxu0
        %v664 = vadd.f32 %v535, %v663
        %665 = vmatmul.bf16.gmra.mxu0 %v624
        %v666 = vpop.f32.mrf.mxu0
        %v667 = vadd.f32 %v540, %v666
        %v668 = vpop.f32.mrf.mxu0
        %v669 = vadd.f32 %v545, %v668
        %670 = vmatmul.bf16.gmra.mxu0 %v627
        %v671 = vpop.f32.mrf.mxu0
        %v672 = vadd.f32 %v550, %v671
        %v673 = vpop.f32.mrf.mxu0
        %v674 = vadd.f32 %v555, %v673
        %675 = vmatmul.bf16.gmra.mxu0 %v630
        %v676 = vpop.f32.mrf.mxu0
        %v677 = vadd.f32 %v560, %v676
        %v678 = vpop.f32.mrf.mxu0
        %v679 = vadd.f32 %v565, %v678
        %680 = vdwg.mxu0
        %681 = vmatpush.bf16.msra.mxu0 0
        %682 = vmatpush.bf16.msra.mxu0 0
        %683 = vmatpush.bf16.msra.mxu0 0
        %684 = vmatpush.bf16.msra.mxu0 0
        %685 = vmatpush.bf16.msra.mxu0 %v469
        %686 = vmatpush.bf16.msra.mxu0 %v466
        %687 = vmatpush.bf16.msra.mxu0 %v463
        %688 = vmatpush.bf16.msra.mxu0 %v460
        %689 = vmatmul.bf16.gmra.mxu0 %v609
        %v690 = vpop.f32.mrf.mxu0
        %v691 = vadd.f32 %v490, %v690
        %v692 = vpop.f32.mrf.mxu0
        %v693 = vadd.f32 %v495, %v692
        %694 = vmatmul.bf16.gmra.mxu0 %v612
        %v695 = vpop.f32.mrf.mxu0
        %v696 = vadd.f32 %v500, %v695
        %v697 = vpop.f32.mrf.mxu0
        %v698 = vadd.f32 %v505, %v697
        %699 = vmatmul.bf16.gmra.mxu0 %v615
        %v700 = vpop.f32.mrf.mxu0
        %v701 = vadd.f32 %v510, %v700
        %v702 = vpop.f32.mrf.mxu0
        %v703 = vadd.f32 %v515, %v702
        %704 = vmatmul.bf16.gmra.mxu0 %v618
        %v705 = vpop.f32.mrf.mxu0
        %v706 = vadd.f32 %v520, %v705
        %v707 = vpop.f32.mrf.mxu0
        %v708 = vadd.f32 %v525, %v707
        %709 = vmatmul.bf16.gmra.mxu0 %v621
        %v710 = vpop.f32.mrf.mxu0
        %v711 = vadd.f32 %v530, %v710
        %v712 = vpop.f32.mrf.mxu0
        %v713 = vadd.f32 %v535, %v712
        %714 = vmatmul.bf16.gmra.mxu0 %v624
        %v715 = vpop.f32.mrf.mxu0
        %v716 = vadd.f32 %v540, %v715
        %v717 = vpop.f32.mrf.mxu0
        %v718 = vadd.f32 %v545, %v717
        %719 = vmatmul.bf16.gmra.mxu0 %v627
        %v720 = vpop.f32.mrf.mxu0
        %v721 = vadd.f32 %v550, %v720
        %v722 = vpop.f32.mrf.mxu0
        %v723 = vadd.f32 %v555, %v722
        %724 = vmatmul.bf16.gmra.mxu0 %v630
        %v725 = vpop.f32.mrf.mxu0
        %v726 = vadd.f32 %v560, %v725
        %v727 = vpop.f32.mrf.mxu0
        %v728 = vadd.f32 %v565, %v727
        %729 = vdwg.mxu0
        %730 = vmatpush.bf16.msra.mxu0 0
        %731 = vmatpush.bf16.msra.mxu0 0
        %732 = vmatpush.bf16.msra.mxu0 0
        %733 = vmatpush.bf16.msra.mxu0 0
        %734 = vmatpush.bf16.msra.mxu0 %v470
        %735 = vmatpush.bf16.msra.mxu0 %v467
        %736 = vmatpush.bf16.msra.mxu0 %v464
        %737 = vmatpush.bf16.msra.mxu0 %v461
        %738 = vmatmul.bf16.gmra.mxu0 %v609
        %v739 = vpop.f32.mrf.mxu0
        %v740 = vadd.f32 %v490, %v739
        %v741 = vpop.f32.mrf.mxu0
        %v742 = vadd.f32 %v495, %v741
        %743 = vmatmul.bf16.gmra.mxu0 %v612
        %v744 = vpop.f32.mrf.mxu0
        %v745 = vadd.f32 %v500, %v744
        %v746 = vpop.f32.mrf.mxu0
        %v747 = vadd.f32 %v505, %v746
        %748 = vmatmul.bf16.gmra.mxu0 %v615
        %v749 = vpop.f32.mrf.mxu0
        %v750 = vadd.f32 %v510, %v749
        %v751 = vpop.f32.mrf.mxu0
        %v752 = vadd.f32 %v515, %v751
        %753 = vmatmul.bf16.gmra.mxu0 %v618
        %v754 = vpop.f32.mrf.mxu0
        %v755 = vadd.f32 %v520, %v754
        %v756 = vpop.f32.mrf.mxu0
        %v757 = vadd.f32 %v525, %v756
        %758 = vmatmul.bf16.gmra.mxu0 %v621
        %v759 = vpop.f32.mrf.mxu0
        %v760 = vadd.f32 %v530, %v759
        %v761 = vpop.f32.mrf.mxu0
        %v762 = vadd.f32 %v535, %v761
        %763 = vmatmul.bf16.gmra.mxu0 %v624
        %v764 = vpop.f32.mrf.mxu0
        %v765 = vadd.f32 %v540, %v764
        %v766 = vpop.f32.mrf.mxu0
        %v767 = vadd.f32 %v545, %v766
        %768 = vmatmul.bf16.gmra.mxu0 %v627
        %v769 = vpop.f32.mrf.mxu0
        %v770 = vadd.f32 %v550, %v769
        %v771 = vpop.f32.mrf.mxu0
        %v772 = vadd.f32 %v555, %v771
        %773 = vmatmul.bf16.gmra.mxu0 %v630
        %v774 = vpop.f32.mrf.mxu0
        %v775 = vadd.f32 %v560, %v774
        %v776 = vpop.f32.mrf.mxu0
        %v777 = vadd.f32 %v565, %v776
        %778 = vdwg.mxu0
        %v779 = vmax.f32 %v642, 0.0
        %v780 = vmax.f32 %v691, 0.0
        %v781 = vmax.f32 %v740, 0.0
        %v782 = vmax.f32 %v644, 0.0
        %v783 = vmax.f32 %v693, 0.0
        %v784 = vmax.f32 %v742, 0.0
        %v785 = vmax.f32 %v647, 0.0
        %v786 = vmax.f32 %v696, 0.0
        %v787 = vmax.f32 %v745, 0.0
        %v788 = vmax.f32 %v649, 0.0
        %v789 = vmax.f32 %v698, 0.0
        %v790 = vmax.f32 %v747, 0.0
        %v791 = vmax.f32 %v652, 0.0
        %v792 = vmax.f32 %v701, 0.0
        %v793 = vmax.f32 %v750, 0.0
        %v794 = vmax.f32 %v654, 0.0
        %v795 = vmax.f32 %v703, 0.0
        %v796 = vmax.f32 %v752, 0.0
        %v797 = vmax.f32 %v657, 0.0
        %v798 = vmax.f32 %v706, 0.0
        %v799 = vmax.f32 %v755, 0.0
        %v800 = vmax.f32 %v659, 0.0
        %v801 = vmax.f32 %v708, 0.0
        %v802 = vmax.f32 %v757, 0.0
        %v803 = vmax.f32 %v662, 0.0
        %v804 = vmax.f32 %v711, 0.0
        %v805 = vmax.f32 %v760, 0.0
        %v806 = vmax.f32 %v664, 0.0
        %v807 = vmax.f32 %v713, 0.0
        %v808 = vmax.f32 %v762, 0.0
        %v809 = vmax.f32 %v667, 0.0
        %v810 = vmax.f32 %v716, 0.0
        %v811 = vmax.f32 %v765, 0.0
        %v812 = vmax.f32 %v669, 0.0
        %v813 = vmax.f32 %v718, 0.0
        %v814 = vmax.f32 %v767, 0.0
        %v815 = vmax.f32 %v672, 0.0
        %v816 = vmax.f32 %v721, 0.0
        %v817 = vmax.f32 %v770, 0.0
        %v818 = vmax.f32 %v674, 0.0
        %v819 = vmax.f32 %v723, 0.0
        %v820 = vmax.f32 %v772, 0.0
        %v821 = vmax.f32 %v677, 0.0
        %v822 = vmax.f32 %v726, 0.0
        %v823 = vmax.f32 %v775, 0.0
        %v824 = vmax.f32 %v679, 0.0
        %v825 = vmax.f32 %v728, 0.0
        %v826 = vmax.f32 %v777, 0.0
        %v827 = vld [vmem:[#allocation3] sm:$0xf]
        %v828 = vld [vmem:[#allocation3 + $0x4] sm:$0xf]
        %v829 = vld [vmem:[#allocation3 + $0x8] sm:$0xf]
        %v830 = vld [vmem:[#allocation3 + $0xc] sm:$0xf]
        %v831 = vld [vmem:[#allocation3 + $0x10] sm:$0xf]
        %v832 = vld [vmem:[#allocation3 + $0x14] sm:$0xf]
        %v833 = vld [vmem:[#allocation3 + $0x18] sm:$0xf]
        %v834 = vld [vmem:[#allocation3 + $0x1c] sm:$0xf]
        %v835 = vld [vmem:[#allocation3 + $0x20] sm:$0xf]
        %v836 = vld [vmem:[#allocation3 + $0x24] sm:$0xf]
        %v837 = vld [vmem:[#allocation3 + $0x28] sm:$0xf]
        %v838 = vld [vmem:[#allocation3 + $0x2c] sm:$0xf]
        %v839 = vld [vmem:[#allocation3 + $0x30] sm:$0xf]
        %v840 = vld [vmem:[#allocation3 + $0x34] sm:$0xf]
        %v841 = vld [vmem:[#allocation3 + $0x38] sm:$0xf]
        %v842 = vld [vmem:[#allocation3 + $0x3c] sm:$0xf]
        %v843 = vld [vmem:[#allocation3 + $0x40] sm:$0xf]
        %v844 = vld [vmem:[#allocation3 + $0x44] sm:$0xf]
        %v845 = vld [vmem:[#allocation3 + $0x48] sm:$0xf]
        %v846 = vld [vmem:[#allocation3 + $0x4c] sm:$0xf]
        %v847 = vld [vmem:[#allocation3 + $0x50] sm:$0xf]
        %v848 = vld [vmem:[#allocation3 + $0x54] sm:$0xf]
        %v849 = vld [vmem:[#allocation3 + $0x58] sm:$0xf]
        %v850 = vld [vmem:[#allocation3 + $0x5c] sm:$0xf]
        %v851 = vld [vmem:[#allocation3 + $0x60] sm:$0xf]
        %v852 = vld [vmem:[#allocation3 + $0x64] sm:$0xf]
        %v853 = vld [vmem:[#allocation3 + $0x68] sm:$0xf]
        %v854 = vld [vmem:[#allocation3 + $0x6c] sm:$0xf]
        %v855 = vld [vmem:[#allocation3 + $0x70] sm:$0xf]
        %v856 = vld [vmem:[#allocation3 + $0x74] sm:$0xf]
        %v857 = vld [vmem:[#allocation3 + $0x78] sm:$0xf]
        %v858 = vld [vmem:[#allocation3 + $0x7c] sm:$0xf]
        %v859 = vld [vmem:[#allocation3 + $0x80] sm:$0xf]
        %v860 = vld [vmem:[#allocation3 + $0x84] sm:$0xf]
        %v861 = vld [vmem:[#allocation3 + $0x88] sm:$0xf]
        %v862 = vld [vmem:[#allocation3 + $0x8c] sm:$0xf]
        %v863 = vld [vmem:[#allocation3 + $0x90] sm:$0xf]
        %v864 = vld [vmem:[#allocation3 + $0x94] sm:$0xf]
        %v865 = vld [vmem:[#allocation3 + $0x98] sm:$0xf]
        %v866 = vld [vmem:[#allocation3 + $0x9c] sm:$0xf]
        %v867 = vld [vmem:[#allocation3 + $0xa0] sm:$0xf]
        %v868 = vld [vmem:[#allocation3 + $0xa4] sm:$0xf]
        %v869 = vld [vmem:[#allocation3 + $0xa8] sm:$0xf]
        %v870 = vld [vmem:[#allocation3 + $0xac] sm:$0xf]
        %v871 = vld [vmem:[#allocation3 + $0xb0] sm:$0xf]
        %v872 = vld [vmem:[#allocation3 + $0xb4] sm:$0xf]
        %v873 = vld [vmem:[#allocation3 + $0xb8] sm:$0xf]
        %v874 = vld [vmem:[#allocation3 + $0xbc] sm:$0xf]
        %v875 = vld [vmem:[#allocation3 + $0xc0] sm:$0xf]
        %v876 = vld [vmem:[#allocation3 + $0xc4] sm:$0xf]
        %v877 = vld [vmem:[#allocation3 + $0xc8] sm:$0xf]
        %v878 = vld [vmem:[#allocation3 + $0xcc] sm:$0xf]
        %v879 = vld [vmem:[#allocation3 + $0xd0] sm:$0xf]
        %v880 = vld [vmem:[#allocation3 + $0xd4] sm:$0xf]
        %v881 = vld [vmem:[#allocation3 + $0xd8] sm:$0xf]
        %v882 = vld [vmem:[#allocation3 + $0xdc] sm:$0xf]
        %v883 = vld [vmem:[#allocation3 + $0xe0] sm:$0xf]
        %v884 = vld [vmem:[#allocation3 + $0xe4] sm:$0xf]
        %v885 = vld [vmem:[#allocation3 + $0xe8] sm:$0xf]
        %v886 = vld [vmem:[#allocation3 + $0xec] sm:$0xf]
        %v887 = vld [vmem:[#allocation3 + $0xf0] sm:$0xf]
        %v888 = vld [vmem:[#allocation3 + $0xf4] sm:$0xf]
        %v889 = vld [vmem:[#allocation3 + $0xf8] sm:$0xf]
        %v890 = vld [vmem:[#allocation3 + $0xfc] sm:$0xf]
        %v891 = vld [vmem:[#allocation3 + $0x100] sm:$0xf]
        %v892 = vld [vmem:[#allocation3 + $0x104] sm:$0xf]
        %v893 = vld [vmem:[#allocation3 + $0x108] sm:$0xf]
        %v894 = vld [vmem:[#allocation3 + $0x10c] sm:$0xf]
        %v895 = vld [vmem:[#allocation3 + $0x110] sm:$0xf]
        %v896 = vld [vmem:[#allocation3 + $0x114] sm:$0xf]
        %v897 = vld [vmem:[#allocation3 + $0x118] sm:$0xf]
        %v898 = vld [vmem:[#allocation3 + $0x11c] sm:$0xf]
        %v899 = vld [vmem:[#allocation3 + $0x120] sm:$0xf]
        %v900 = vld [vmem:[#allocation3 + $0x124] sm:$0xf]
        %v901 = vld [vmem:[#allocation3 + $0x128] sm:$0xf]
        %v902 = vld [vmem:[#allocation3 + $0x12c] sm:$0xf]
        %v903 = vld [vmem:[#allocation3 + $0x130] sm:$0xf]
        %v904 = vld [vmem:[#allocation3 + $0x134] sm:$0xf]
        %v905 = vld [vmem:[#allocation3 + $0x138] sm:$0xf]
        %v906 = vld [vmem:[#allocation3 + $0x13c] sm:$0xf]
        %v907 = vld [vmem:[#allocation3 + $0x140] sm:$0xf]
        %v908 = vld [vmem:[#allocation3 + $0x144] sm:$0xf]
        %v909 = vld [vmem:[#allocation3 + $0x148] sm:$0xf]
        %v910 = vld [vmem:[#allocation3 + $0x14c] sm:$0xf]
        %v911 = vld [vmem:[#allocation3 + $0x150] sm:$0xf]
        %v912 = vld [vmem:[#allocation3 + $0x154] sm:$0xf]
        %v913 = vld [vmem:[#allocation3 + $0x158] sm:$0xf]
        %v914 = vld [vmem:[#allocation3 + $0x15c] sm:$0xf]
        %v915 = vld [vmem:[#allocation3 + $0x160] sm:$0xf]
        %v916 = vld [vmem:[#allocation3 + $0x164] sm:$0xf]
        %v917 = vld [vmem:[#allocation3 + $0x168] sm:$0xf]
        %v918 = vld [vmem:[#allocation3 + $0x16c] sm:$0xf]
        %v919 = vld [vmem:[#allocation3 + $0x170] sm:$0xf]
        %v920 = vld [vmem:[#allocation3 + $0x174] sm:$0xf]
        %v921 = vld [vmem:[#allocation3 + $0x178] sm:$0xf]
        %v922 = vld [vmem:[#allocation3 + $0x17c] sm:$0xf]
        %v923 = vld [vmem:[#allocation3 + $0x180] sm:$0xf]
        %v924 = vld [vmem:[#allocation3 + $0x184] sm:$0xf]
        %v925 = vld [vmem:[#allocation3 + $0x188] sm:$0xf]
        %v926 = vld [vmem:[#allocation3 + $0x18c] sm:$0xf]
        %v927 = vld [vmem:[#allocation3 + $0x190] sm:$0xf]
        %v928 = vld [vmem:[#allocation3 + $0x194] sm:$0xf]
        %v929 = vld [vmem:[#allocation3 + $0x198] sm:$0xf]
        %v930 = vld [vmem:[#allocation3 + $0x19c] sm:$0xf]
        %v931 = vld [vmem:[#allocation3 + $0x1a0] sm:$0xf]
        %v932 = vld [vmem:[#allocation3 + $0x1a4] sm:$0xf]
        %v933 = vld [vmem:[#allocation3 + $0x1a8] sm:$0xf]
        %v934 = vld [vmem:[#allocation3 + $0x1ac] sm:$0xf]
        %v935 = vld [vmem:[#allocation3 + $0x1b0] sm:$0xf]
        %v936 = vld [vmem:[#allocation3 + $0x1b4] sm:$0xf]
        %v937 = vld [vmem:[#allocation3 + $0x1b8] sm:$0xf]
        %v938 = vld [vmem:[#allocation3 + $0x1bc] sm:$0xf]
        %v939 = vld [vmem:[#allocation3 + $0x1c0] sm:$0xf]
        %v940 = vld [vmem:[#allocation3 + $0x1c4] sm:$0xf]
        %v941 = vld [vmem:[#allocation3 + $0x1c8] sm:$0xf]
        %v942 = vld [vmem:[#allocation3 + $0x1cc] sm:$0xf]
        %v943 = vld [vmem:[#allocation3 + $0x1d0] sm:$0xf]
        %v944 = vld [vmem:[#allocation3 + $0x1d4] sm:$0xf]
        %v945 = vld [vmem:[#allocation3 + $0x1d8] sm:$0xf]
        %v946 = vld [vmem:[#allocation3 + $0x1dc] sm:$0xf]
        %v947 = vld [vmem:[#allocation3 + $0x1e0] sm:$0xf]
        %v948 = vld [vmem:[#allocation3 + $0x1e4] sm:$0xf]
        %v949 = vld [vmem:[#allocation3 + $0x1e8] sm:$0xf]
        %v950 = vld [vmem:[#allocation3 + $0x1ec] sm:$0xf]
        %v951 = vld [vmem:[#allocation3 + $0x1f0] sm:$0xf]
        %v952 = vld [vmem:[#allocation3 + $0x1f4] sm:$0xf]
        %v953 = vld [vmem:[#allocation3 + $0x1f8] sm:$0xf]
        %v954 = vld [vmem:[#allocation3 + $0x1fc] sm:$0xf]
        %v955 = vpack.c.bf16 %v782, %v779
        %v956 = vpack.c.bf16 %v783, %v780
        %v957 = vpack.c.bf16 %v784, %v781
        %v958 = vpack.c.bf16 %v788, %v785
        %v959 = vpack.c.bf16 %v789, %v786
        %v960 = vpack.c.bf16 %v790, %v787
        %v961 = vpack.c.bf16 %v794, %v791
        %v962 = vpack.c.bf16 %v795, %v792
        %v963 = vpack.c.bf16 %v796, %v793
        %v964 = vpack.c.bf16 %v800, %v797
        %v965 = vpack.c.bf16 %v801, %v798
        %v966 = vpack.c.bf16 %v802, %v799
        %v967 = vpack.c.bf16 %v806, %v803
        %v968 = vpack.c.bf16 %v807, %v804
        %v969 = vpack.c.bf16 %v808, %v805
        %v970 = vpack.c.bf16 %v812, %v809
        %v971 = vpack.c.bf16 %v813, %v810
        %v972 = vpack.c.bf16 %v814, %v811
        %v973 = vpack.c.bf16 %v818, %v815
        %v974 = vpack.c.bf16 %v819, %v816
        %v975 = vpack.c.bf16 %v820, %v817
        %v976 = vpack.c.bf16 %v824, %v821
        %v977 = vpack.c.bf16 %v825, %v822
        %v978 = vpack.c.bf16 %v826, %v823
        %v1107 = vunpack.c.l.b16 %v827
        %v1108 = vunpack.c.l.b16 %v828
        %v1109 = vunpack.c.l.b16 %v829
        %v1110 = vunpack.c.l.b16 %v830
        %v1111 = vunpack.c.l.b16 %v831
        %v1112 = vunpack.c.l.b16 %v832
        %v1113 = vunpack.c.l.b16 %v833
        %v1114 = vunpack.c.l.b16 %v834
        %v1115 = vunpack.c.l.b16 %v835
        %v1116 = vunpack.c.l.b16 %v836
        %v1117 = vunpack.c.l.b16 %v837
        %v1118 = vunpack.c.l.b16 %v838
        %v1119 = vunpack.c.l.b16 %v839
        %v1120 = vunpack.c.l.b16 %v840
        %v1121 = vunpack.c.l.b16 %v841
        %v1122 = vunpack.c.l.b16 %v842
        %v1123 = vunpack.c.l.b16 %v843
        %v1124 = vunpack.c.l.b16 %v844
        %v1125 = vunpack.c.l.b16 %v845
        %v1126 = vunpack.c.l.b16 %v846
        %v1127 = vunpack.c.l.b16 %v847
        %v1128 = vunpack.c.l.b16 %v848
        %v1129 = vunpack.c.l.b16 %v849
        %v1130 = vunpack.c.l.b16 %v850
        %v1131 = vunpack.c.l.b16 %v851
        %v1132 = vunpack.c.l.b16 %v852
        %v1133 = vunpack.c.l.b16 %v853
        %v1134 = vunpack.c.l.b16 %v854
        %v1135 = vunpack.c.l.b16 %v855
        %v1136 = vunpack.c.l.b16 %v856
        %v1137 = vunpack.c.l.b16 %v857
        %v1138 = vunpack.c.l.b16 %v858
        %v1139 = vunpack.c.l.b16 %v859
        %v1140 = vunpack.c.l.b16 %v860
        %v1141 = vunpack.c.l.b16 %v861
        %v1142 = vunpack.c.l.b16 %v862
        %v1143 = vunpack.c.l.b16 %v863
        %v1144 = vunpack.c.l.b16 %v864
        %v1145 = vunpack.c.l.b16 %v865
        %v1146 = vunpack.c.l.b16 %v866
        %v1147 = vunpack.c.l.b16 %v867
        %v1148 = vunpack.c.l.b16 %v868
        %v1149 = vunpack.c.l.b16 %v869
        %v1150 = vunpack.c.l.b16 %v870
        %v1151 = vunpack.c.l.b16 %v871
        %v1152 = vunpack.c.l.b16 %v872
        %v1153 = vunpack.c.l.b16 %v873
        %v1154 = vunpack.c.l.b16 %v874
        %v1155 = vunpack.c.l.b16 %v875
        %v1156 = vunpack.c.l.b16 %v876
        %v1157 = vunpack.c.l.b16 %v877
        %v1158 = vunpack.c.l.b16 %v878
        %v1159 = vunpack.c.l.b16 %v879
        %v1160 = vunpack.c.l.b16 %v880
        %v1161 = vunpack.c.l.b16 %v881
        %v1162 = vunpack.c.l.b16 %v882
        %v1163 = vunpack.c.l.b16 %v883
        %v1164 = vunpack.c.l.b16 %v884
        %v1165 = vunpack.c.l.b16 %v885
        %v1166 = vunpack.c.l.b16 %v886
        %v1167 = vunpack.c.l.b16 %v887
        %v1168 = vunpack.c.l.b16 %v888
        %v1169 = vunpack.c.l.b16 %v889
        %v1170 = vunpack.c.l.b16 %v890
        %v1171 = vunpack.c.l.b16 %v891
        %v1172 = vunpack.c.l.b16 %v892
        %v1173 = vunpack.c.l.b16 %v893
        %v1174 = vunpack.c.l.b16 %v894
        %v1175 = vunpack.c.l.b16 %v895
        %v1176 = vunpack.c.l.b16 %v896
        %v1177 = vunpack.c.l.b16 %v897
        %v1178 = vunpack.c.l.b16 %v898
        %v1179 = vunpack.c.l.b16 %v899
        %v1180 = vunpack.c.l.b16 %v900
        %v1181 = vunpack.c.l.b16 %v901
        %v1182 = vunpack.c.l.b16 %v902
        %v1183 = vunpack.c.l.b16 %v903
        %v1184 = vunpack.c.l.b16 %v904
        %v1185 = vunpack.c.l.b16 %v905
        %v1186 = vunpack.c.l.b16 %v906
        %v1187 = vunpack.c.l.b16 %v907
        %v1188 = vunpack.c.l.b16 %v908
        %v1189 = vunpack.c.l.b16 %v909
        %v1190 = vunpack.c.l.b16 %v910
        %v1191 = vunpack.c.l.b16 %v911
        %v1192 = vunpack.c.l.b16 %v912
        %v1193 = vunpack.c.l.b16 %v913
        %v1194 = vunpack.c.l.b16 %v914
        %v1195 = vunpack.c.l.b16 %v915
        %v1196 = vunpack.c.l.b16 %v916
        %v1197 = vunpack.c.l.b16 %v917
        %v1198 = vunpack.c.l.b16 %v918
        %v1199 = vunpack.c.l.b16 %v919
        %v1200 = vunpack.c.l.b16 %v920
        %v1201 = vunpack.c.l.b16 %v921
        %v1202 = vunpack.c.l.b16 %v922
        %v1203 = vunpack.c.l.b16 %v923
        %v1204 = vunpack.c.l.b16 %v924
        %v1205 = vunpack.c.l.b16 %v925
        %v1206 = vunpack.c.l.b16 %v926
        %v1207 = vunpack.c.l.b16 %v927
        %v1208 = vunpack.c.l.b16 %v928
        %v1209 = vunpack.c.l.b16 %v929
        %v1210 = vunpack.c.l.b16 %v930
        %v1211 = vunpack.c.l.b16 %v931
        %v1212 = vunpack.c.l.b16 %v932
        %v1213 = vunpack.c.l.b16 %v933
        %v1214 = vunpack.c.l.b16 %v934
        %v1215 = vunpack.c.l.b16 %v935
        %v1216 = vunpack.c.l.b16 %v936
        %v1217 = vunpack.c.l.b16 %v937
        %v1218 = vunpack.c.l.b16 %v938
        %v1219 = vunpack.c.l.b16 %v939
        %v1220 = vunpack.c.l.b16 %v940
        %v1221 = vunpack.c.l.b16 %v941
        %v1222 = vunpack.c.l.b16 %v942
        %v1223 = vunpack.c.l.b16 %v943
        %v1224 = vunpack.c.l.b16 %v944
        %v1225 = vunpack.c.l.b16 %v945
        %v1226 = vunpack.c.l.b16 %v946
        %v1227 = vunpack.c.l.b16 %v947
        %v1228 = vunpack.c.l.b16 %v948
        %v1229 = vunpack.c.l.b16 %v949
        %v1230 = vunpack.c.l.b16 %v950
        %v1231 = vunpack.c.l.b16 %v951
        %v1232 = vunpack.c.l.b16 %v952
        %v1233 = vunpack.c.l.b16 %v953
        %v1234 = vunpack.c.l.b16 %v954
        %v1235 = vpack.c.b16 %v1108, %v1107
        %v1236 = vpack.c.b16 %v1110, %v1109
        %v1237 = vpack.c.b16 %v1112, %v1111
        %v1238 = vpack.c.b16 %v1114, %v1113
        %v1239 = vpack.c.b16 %v1116, %v1115
        %v1240 = vpack.c.b16 %v1118, %v1117
        %v1241 = vpack.c.b16 %v1120, %v1119
        %v1242 = vpack.c.b16 %v1122, %v1121
        %v1243 = vpack.c.b16 %v1124, %v1123
        %v1244 = vpack.c.b16 %v1126, %v1125
        %v1245 = vpack.c.b16 %v1128, %v1127
        %v1246 = vpack.c.b16 %v1130, %v1129
        %v1247 = vpack.c.b16 %v1132, %v1131
        %v1248 = vpack.c.b16 %v1134, %v1133
        %v1249 = vpack.c.b16 %v1136, %v1135
        %v1250 = vpack.c.b16 %v1138, %v1137
        %v1251 = vpack.c.b16 %v1140, %v1139
        %v1252 = vpack.c.b16 %v1142, %v1141
        %v1253 = vpack.c.b16 %v1144, %v1143
        %v1254 = vpack.c.b16 %v1146, %v1145
        %v1255 = vpack.c.b16 %v1148, %v1147
        %v1256 = vpack.c.b16 %v1150, %v1149
        %v1257 = vpack.c.b16 %v1152, %v1151
        %v1258 = vpack.c.b16 %v1154, %v1153
        %v1259 = vpack.c.b16 %v1156, %v1155
        %v1260 = vpack.c.b16 %v1158, %v1157
        %v1261 = vpack.c.b16 %v1160, %v1159
        %v1262 = vpack.c.b16 %v1162, %v1161
        %v1263 = vpack.c.b16 %v1164, %v1163
        %v1264 = vpack.c.b16 %v1166, %v1165
        %v1265 = vpack.c.b16 %v1168, %v1167
        %v1266 = vpack.c.b16 %v1170, %v1169
        %v1267 = vpack.c.b16 %v1172, %v1171
        %v1268 = vpack.c.b16 %v1174, %v1173
        %v1269 = vpack.c.b16 %v1176, %v1175
        %v1270 = vpack.c.b16 %v1178, %v1177
        %v1271 = vpack.c.b16 %v1180, %v1179
        %v1272 = vpack.c.b16 %v1182, %v1181
        %v1273 = vpack.c.b16 %v1184, %v1183
        %v1274 = vpack.c.b16 %v1186, %v1185
        %v1275 = vpack.c.b16 %v1188, %v1187
        %v1276 = vpack.c.b16 %v1190, %v1189
        %v1277 = vpack.c.b16 %v1192, %v1191
        %v1278 = vpack.c.b16 %v1194, %v1193
        %v1279 = vpack.c.b16 %v1196, %v1195
        %v1280 = vpack.c.b16 %v1198, %v1197
        %v1281 = vpack.c.b16 %v1200, %v1199
        %v1282 = vpack.c.b16 %v1202, %v1201
        %v1283 = vpack.c.b16 %v1204, %v1203
        %v1284 = vpack.c.b16 %v1206, %v1205
        %v1285 = vpack.c.b16 %v1208, %v1207
        %v1286 = vpack.c.b16 %v1210, %v1209
        %v1287 = vpack.c.b16 %v1212, %v1211
        %v1288 = vpack.c.b16 %v1214, %v1213
        %v1289 = vpack.c.b16 %v1216, %v1215
        %v1290 = vpack.c.b16 %v1218, %v1217
        %v1291 = vpack.c.b16 %v1220, %v1219
        %v1292 = vpack.c.b16 %v1222, %v1221
        %v1293 = vpack.c.b16 %v1224, %v1223
        %v1294 = vpack.c.b16 %v1226, %v1225
        %v1295 = vpack.c.b16 %v1228, %v1227
        %v1296 = vpack.c.b16 %v1230, %v1229
        %v1297 = vpack.c.b16 %v1232, %v1231
        %v1298 = vpack.c.b16 %v1234, %v1233
        %1363 = vmatpush.bf16.msra.mxu0 %v976
        %1364 = vmatpush.bf16.msra.mxu0 %v973
        %1365 = vmatpush.bf16.msra.mxu0 %v970
        %1366 = vmatpush.bf16.msra.mxu0 %v967
        %1367 = vmatpush.bf16.msra.mxu0 %v964
        %1368 = vmatpush.bf16.msra.mxu0 %v961
        %1369 = vmatpush.bf16.msra.mxu0 %v958
        %1370 = vmatpush.bf16.msra.mxu0 %v955
        %1371 = vmatmul.bf16.gmra.mxu0 %v1235
        %v1372 = vpop.f32.mrf.mxu0
        %v1373 = vadd.f32 0.0, %v1372
        %v1374 = vpop.f32.mrf.mxu0
        %v1375 = vadd.f32 0.0, %v1374
        %1376 = vmatmul.bf16.gmra.mxu0 %v1236
        %v1377 = vpop.f32.mrf.mxu0
        %v1378 = vadd.f32 0.0, %v1377
        %v1379 = vpop.f32.mrf.mxu0
        %v1380 = vadd.f32 0.0, %v1379
        %1381 = vmatmul.bf16.gmra.mxu0 %v1237
        %v1382 = vpop.f32.mrf.mxu0
        %v1383 = vadd.f32 0.0, %v1382
        %v1384 = vpop.f32.mrf.mxu0
        %v1385 = vadd.f32 0.0, %v1384
        %1386 = vmatmul.bf16.gmra.mxu0 %v1238
        %v1387 = vpop.f32.mrf.mxu0
        %v1388 = vadd.f32 0.0, %v1387
        %v1389 = vpop.f32.mrf.mxu0
        %v1390 = vadd.f32 0.0, %v1389
        %1391 = vmatmul.bf16.gmra.mxu0 %v1239
        %v1392 = vpop.f32.mrf.mxu0
        %v1393 = vadd.f32 0.0, %v1392
        %v1394 = vpop.f32.mrf.mxu0
        %v1395 = vadd.f32 0.0, %v1394
        %1396 = vmatmul.bf16.gmra.mxu0 %v1240
        %v1397 = vpop.f32.mrf.mxu0
        %v1398 = vadd.f32 0.0, %v1397
        %v1399 = vpop.f32.mrf.mxu0
        %v1400 = vadd.f32 0.0, %v1399
        %1401 = vmatmul.bf16.gmra.mxu0 %v1241
        %v1402 = vpop.f32.mrf.mxu0
        %v1403 = vadd.f32 0.0, %v1402
        %v1404 = vpop.f32.mrf.mxu0
        %v1405 = vadd.f32 0.0, %v1404
        %1406 = vmatmul.bf16.gmra.mxu0 %v1242
        %v1407 = vpop.f32.mrf.mxu0
        %v1408 = vadd.f32 0.0, %v1407
        %v1409 = vpop.f32.mrf.mxu0
        %v1410 = vadd.f32 0.0, %v1409
        %1411 = vmatmul.bf16.gmra.mxu0 %v1243
        %v1412 = vpop.f32.mrf.mxu0
        %v1413 = vadd.f32 0.0, %v1412
        %v1414 = vpop.f32.mrf.mxu0
        %v1415 = vadd.f32 0.0, %v1414
        %1416 = vmatmul.bf16.gmra.mxu0 %v1244
        %v1417 = vpop.f32.mrf.mxu0
        %v1418 = vadd.f32 0.0, %v1417
        %v1419 = vpop.f32.mrf.mxu0
        %v1420 = vadd.f32 0.0, %v1419
        %1421 = vmatmul.bf16.gmra.mxu0 %v1245
        %v1422 = vpop.f32.mrf.mxu0
        %v1423 = vadd.f32 0.0, %v1422
        %v1424 = vpop.f32.mrf.mxu0
        %v1425 = vadd.f32 0.0, %v1424
        %1426 = vmatmul.bf16.gmra.mxu0 %v1246
        %v1427 = vpop.f32.mrf.mxu0
        %v1428 = vadd.f32 0.0, %v1427
        %v1429 = vpop.f32.mrf.mxu0
        %v1430 = vadd.f32 0.0, %v1429
        %1431 = vmatmul.bf16.gmra.mxu0 %v1247
        %v1432 = vpop.f32.mrf.mxu0
        %v1433 = vadd.f32 0.0, %v1432
        %v1434 = vpop.f32.mrf.mxu0
        %v1435 = vadd.f32 0.0, %v1434
        %1436 = vmatmul.bf16.gmra.mxu0 %v1248
        %v1437 = vpop.f32.mrf.mxu0
        %v1438 = vadd.f32 0.0, %v1437
        %v1439 = vpop.f32.mrf.mxu0
        %v1440 = vadd.f32 0.0, %v1439
        %1441 = vmatmul.bf16.gmra.mxu0 %v1249
        %v1442 = vpop.f32.mrf.mxu0
        %v1443 = vadd.f32 0.0, %v1442
        %v1444 = vpop.f32.mrf.mxu0
        %v1445 = vadd.f32 0.0, %v1444
        %1446 = vmatmul.bf16.gmra.mxu0 %v1250
        %v1447 = vpop.f32.mrf.mxu0
        %v1448 = vadd.f32 0.0, %v1447
        %v1449 = vpop.f32.mrf.mxu0
        %v1450 = vadd.f32 0.0, %v1449
        %1451 = vmatmul.bf16.gmra.mxu0 %v1251
        %v1452 = vpop.f32.mrf.mxu0
        %v1453 = vadd.f32 0.0, %v1452
        %v1454 = vpop.f32.mrf.mxu0
        %v1455 = vadd.f32 0.0, %v1454
        %1456 = vmatmul.bf16.gmra.mxu0 %v1252
        %v1457 = vpop.f32.mrf.mxu0
        %v1458 = vadd.f32 0.0, %v1457
        %v1459 = vpop.f32.mrf.mxu0
        %v1460 = vadd.f32 0.0, %v1459
        %1461 = vmatmul.bf16.gmra.mxu0 %v1253
        %v1462 = vpop.f32.mrf.mxu0
        %v1463 = vadd.f32 0.0, %v1462
        %v1464 = vpop.f32.mrf.mxu0
        %v1465 = vadd.f32 0.0, %v1464
        %1466 = vmatmul.bf16.gmra.mxu0 %v1254
        %v1467 = vpop.f32.mrf.mxu0
        %v1468 = vadd.f32 0.0, %v1467
        %v1469 = vpop.f32.mrf.mxu0
        %v1470 = vadd.f32 0.0, %v1469
        %1471 = vmatmul.bf16.gmra.mxu0 %v1255
        %v1472 = vpop.f32.mrf.mxu0
        %v1473 = vadd.f32 0.0, %v1472
        %v1474 = vpop.f32.mrf.mxu0
        %v1475 = vadd.f32 0.0, %v1474
        %1476 = vmatmul.bf16.gmra.mxu0 %v1256
        %v1477 = vpop.f32.mrf.mxu0
        %v1478 = vadd.f32 0.0, %v1477
        %v1479 = vpop.f32.mrf.mxu0
        %v1480 = vadd.f32 0.0, %v1479
        %1481 = vmatmul.bf16.gmra.mxu0 %v1257
        %v1482 = vpop.f32.mrf.mxu0
        %v1483 = vadd.f32 0.0, %v1482
        %v1484 = vpop.f32.mrf.mxu0
        %v1485 = vadd.f32 0.0, %v1484
        %1486 = vmatmul.bf16.gmra.mxu0 %v1258
        %v1487 = vpop.f32.mrf.mxu0
        %v1488 = vadd.f32 0.0, %v1487
        %v1489 = vpop.f32.mrf.mxu0
        %v1490 = vadd.f32 0.0, %v1489
        %1491 = vmatmul.bf16.gmra.mxu0 %v1259
        %v1492 = vpop.f32.mrf.mxu0
        %v1493 = vadd.f32 0.0, %v1492
        %v1494 = vpop.f32.mrf.mxu0
        %v1495 = vadd.f32 0.0, %v1494
        %1496 = vmatmul.bf16.gmra.mxu0 %v1260
        %v1497 = vpop.f32.mrf.mxu0
        %v1498 = vadd.f32 0.0, %v1497
        %v1499 = vpop.f32.mrf.mxu0
        %v1500 = vadd.f32 0.0, %v1499
        %1501 = vmatmul.bf16.gmra.mxu0 %v1261
        %v1502 = vpop.f32.mrf.mxu0
        %v1503 = vadd.f32 0.0, %v1502
        %v1504 = vpop.f32.mrf.mxu0
        %v1505 = vadd.f32 0.0, %v1504
        %1506 = vmatmul.bf16.gmra.mxu0 %v1262
        %v1507 = vpop.f32.mrf.mxu0
        %v1508 = vadd.f32 0.0, %v1507
        %v1509 = vpop.f32.mrf.mxu0
        %v1510 = vadd.f32 0.0, %v1509
        %1511 = vmatmul.bf16.gmra.mxu0 %v1263
        %v1512 = vpop.f32.mrf.mxu0
        %v1513 = vadd.f32 0.0, %v1512
        %v1514 = vpop.f32.mrf.mxu0
        %v1515 = vadd.f32 0.0, %v1514
        %1516 = vmatmul.bf16.gmra.mxu0 %v1264
        %v1517 = vpop.f32.mrf.mxu0
        %v1518 = vadd.f32 0.0, %v1517
        %v1519 = vpop.f32.mrf.mxu0
        %v1520 = vadd.f32 0.0, %v1519
        %1521 = vmatmul.bf16.gmra.mxu0 %v1265
        %v1522 = vpop.f32.mrf.mxu0
        %v1523 = vadd.f32 0.0, %v1522
        %v1524 = vpop.f32.mrf.mxu0
        %v1525 = vadd.f32 0.0, %v1524
        %1526 = vmatmul.bf16.gmra.mxu0 %v1266
        %v1527 = vpop.f32.mrf.mxu0
        %v1528 = vadd.f32 0.0, %v1527
        %v1529 = vpop.f32.mrf.mxu0
        %v1530 = vadd.f32 0.0, %v1529
        %1531 = vmatmul.bf16.gmra.mxu0 %v1267
        %v1532 = vpop.f32.mrf.mxu0
        %v1533 = vadd.f32 0.0, %v1532
        %v1534 = vpop.f32.mrf.mxu0
        %v1535 = vadd.f32 0.0, %v1534
        %1536 = vmatmul.bf16.gmra.mxu0 %v1268
        %v1537 = vpop.f32.mrf.mxu0
        %v1538 = vadd.f32 0.0, %v1537
        %v1539 = vpop.f32.mrf.mxu0
        %v1540 = vadd.f32 0.0, %v1539
        %1541 = vmatmul.bf16.gmra.mxu0 %v1269
        %v1542 = vpop.f32.mrf.mxu0
        %v1543 = vadd.f32 0.0, %v1542
        %v1544 = vpop.f32.mrf.mxu0
        %v1545 = vadd.f32 0.0, %v1544
        %1546 = vmatmul.bf16.gmra.mxu0 %v1270
        %v1547 = vpop.f32.mrf.mxu0
        %v1548 = vadd.f32 0.0, %v1547
        %v1549 = vpop.f32.mrf.mxu0
        %v1550 = vadd.f32 0.0, %v1549
        %1551 = vmatmul.bf16.gmra.mxu0 %v1271
        %v1552 = vpop.f32.mrf.mxu0
        %v1553 = vadd.f32 0.0, %v1552
        %v1554 = vpop.f32.mrf.mxu0
        %v1555 = vadd.f32 0.0, %v1554
        %1556 = vmatmul.bf16.gmra.mxu0 %v1272
        %v1557 = vpop.f32.mrf.mxu0
        %v1558 = vadd.f32 0.0, %v1557
        %v1559 = vpop.f32.mrf.mxu0
        %v1560 = vadd.f32 0.0, %v1559
        %1561 = vmatmul.bf16.gmra.mxu0 %v1273
        %v1562 = vpop.f32.mrf.mxu0
        %v1563 = vadd.f32 0.0, %v1562
        %v1564 = vpop.f32.mrf.mxu0
        %v1565 = vadd.f32 0.0, %v1564
        %1566 = vmatmul.bf16.gmra.mxu0 %v1274
        %v1567 = vpop.f32.mrf.mxu0
        %v1568 = vadd.f32 0.0, %v1567
        %v1569 = vpop.f32.mrf.mxu0
        %v1570 = vadd.f32 0.0, %v1569
        %1571 = vmatmul.bf16.gmra.mxu0 %v1275
        %v1572 = vpop.f32.mrf.mxu0
        %v1573 = vadd.f32 0.0, %v1572
        %v1574 = vpop.f32.mrf.mxu0
        %v1575 = vadd.f32 0.0, %v1574
        %1576 = vmatmul.bf16.gmra.mxu0 %v1276
        %v1577 = vpop.f32.mrf.mxu0
        %v1578 = vadd.f32 0.0, %v1577
        %v1579 = vpop.f32.mrf.mxu0
        %v1580 = vadd.f32 0.0, %v1579
        %1581 = vmatmul.bf16.gmra.mxu0 %v1277
        %v1582 = vpop.f32.mrf.mxu0
        %v1583 = vadd.f32 0.0, %v1582
        %v1584 = vpop.f32.mrf.mxu0
        %v1585 = vadd.f32 0.0, %v1584
        %1586 = vmatmul.bf16.gmra.mxu0 %v1278
        %v1587 = vpop.f32.mrf.mxu0
        %v1588 = vadd.f32 0.0, %v1587
        %v1589 = vpop.f32.mrf.mxu0
        %v1590 = vadd.f32 0.0, %v1589
        %1591 = vmatmul.bf16.gmra.mxu0 %v1279
        %v1592 = vpop.f32.mrf.mxu0
        %v1593 = vadd.f32 0.0, %v1592
        %v1594 = vpop.f32.mrf.mxu0
        %v1595 = vadd.f32 0.0, %v1594
        %1596 = vmatmul.bf16.gmra.mxu0 %v1280
        %v1597 = vpop.f32.mrf.mxu0
        %v1598 = vadd.f32 0.0, %v1597
        %v1599 = vpop.f32.mrf.mxu0
        %v1600 = vadd.f32 0.0, %v1599
        %1601 = vmatmul.bf16.gmra.mxu0 %v1281
        %v1602 = vpop.f32.mrf.mxu0
        %v1603 = vadd.f32 0.0, %v1602
        %v1604 = vpop.f32.mrf.mxu0
        %v1605 = vadd.f32 0.0, %v1604
        %1606 = vmatmul.bf16.gmra.mxu0 %v1282
        %v1607 = vpop.f32.mrf.mxu0
        %v1608 = vadd.f32 0.0, %v1607
        %v1609 = vpop.f32.mrf.mxu0
        %v1610 = vadd.f32 0.0, %v1609
        %1611 = vmatmul.bf16.gmra.mxu0 %v1283
        %v1612 = vpop.f32.mrf.mxu0
        %v1613 = vadd.f32 0.0, %v1612
        %v1614 = vpop.f32.mrf.mxu0
        %v1615 = vadd.f32 0.0, %v1614
        %1616 = vmatmul.bf16.gmra.mxu0 %v1284
        %v1617 = vpop.f32.mrf.mxu0
        %v1618 = vadd.f32 0.0, %v1617
        %v1619 = vpop.f32.mrf.mxu0
        %v1620 = vadd.f32 0.0, %v1619
        %1621 = vmatmul.bf16.gmra.mxu0 %v1285
        %v1622 = vpop.f32.mrf.mxu0
        %v1623 = vadd.f32 0.0, %v1622
        %v1624 = vpop.f32.mrf.mxu0
        %v1625 = vadd.f32 0.0, %v1624
        %1626 = vmatmul.bf16.gmra.mxu0 %v1286
        %v1627 = vpop.f32.mrf.mxu0
        %v1628 = vadd.f32 0.0, %v1627
        %v1629 = vpop.f32.mrf.mxu0
        %v1630 = vadd.f32 0.0, %v1629
        %1631 = vmatmul.bf16.gmra.mxu0 %v1287
        %v1632 = vpop.f32.mrf.mxu0
        %v1633 = vadd.f32 0.0, %v1632
        %v1634 = vpop.f32.mrf.mxu0
        %v1635 = vadd.f32 0.0, %v1634
        %1636 = vmatmul.bf16.gmra.mxu0 %v1288
        %v1637 = vpop.f32.mrf.mxu0
        %v1638 = vadd.f32 0.0, %v1637
        %v1639 = vpop.f32.mrf.mxu0
        %v1640 = vadd.f32 0.0, %v1639
        %1641 = vmatmul.bf16.gmra.mxu0 %v1289
        %v1642 = vpop.f32.mrf.mxu0
        %v1643 = vadd.f32 0.0, %v1642
        %v1644 = vpop.f32.mrf.mxu0
        %v1645 = vadd.f32 0.0, %v1644
        %1646 = vmatmul.bf16.gmra.mxu0 %v1290
        %v1647 = vpop.f32.mrf.mxu0
        %v1648 = vadd.f32 0.0, %v1647
        %v1649 = vpop.f32.mrf.mxu0
        %v1650 = vadd.f32 0.0, %v1649
        %1651 = vmatmul.bf16.gmra.mxu0 %v1291
        %v1652 = vpop.f32.mrf.mxu0
        %v1653 = vadd.f32 0.0, %v1652
        %v1654 = vpop.f32.mrf.mxu0
        %v1655 = vadd.f32 0.0, %v1654
        %1656 = vmatmul.bf16.gmra.mxu0 %v1292
        %v1657 = vpop.f32.mrf.mxu0
        %v1658 = vadd.f32 0.0, %v1657
        %v1659 = vpop.f32.mrf.mxu0
        %v1660 = vadd.f32 0.0, %v1659
        %1661 = vmatmul.bf16.gmra.mxu0 %v1293
        %v1662 = vpop.f32.mrf.mxu0
        %v1663 = vadd.f32 0.0, %v1662
        %v1664 = vpop.f32.mrf.mxu0
        %v1665 = vadd.f32 0.0, %v1664
        %1666 = vmatmul.bf16.gmra.mxu0 %v1294
        %v1667 = vpop.f32.mrf.mxu0
        %v1668 = vadd.f32 0.0, %v1667
        %v1669 = vpop.f32.mrf.mxu0
        %v1670 = vadd.f32 0.0, %v1669
        %1671 = vmatmul.bf16.gmra.mxu0 %v1295
        %v1672 = vpop.f32.mrf.mxu0
        %v1673 = vadd.f32 0.0, %v1672
        %v1674 = vpop.f32.mrf.mxu0
        %v1675 = vadd.f32 0.0, %v1674
        %1676 = vmatmul.bf16.gmra.mxu0 %v1296
        %v1677 = vpop.f32.mrf.mxu0
        %v1678 = vadd.f32 0.0, %v1677
        %v1679 = vpop.f32.mrf.mxu0
        %v1680 = vadd.f32 0.0, %v1679
        %1681 = vmatmul.bf16.gmra.mxu0 %v1297
        %v1682 = vpop.f32.mrf.mxu0
        %v1683 = vadd.f32 0.0, %v1682
        %v1684 = vpop.f32.mrf.mxu0
        %v1685 = vadd.f32 0.0, %v1684
        %1686 = vmatmul.bf16.gmra.mxu0 %v1298
        %v1687 = vpop.f32.mrf.mxu0
        %v1688 = vadd.f32 0.0, %v1687
        %v1689 = vpop.f32.mrf.mxu0
        %v1690 = vadd.f32 0.0, %v1689
        %1691 = vdwg.mxu0
        %1692 = vmatpush.bf16.msra.mxu0 %v977
        %1693 = vmatpush.bf16.msra.mxu0 %v974
        %1694 = vmatpush.bf16.msra.mxu0 %v971
        %1695 = vmatpush.bf16.msra.mxu0 %v968
        %1696 = vmatpush.bf16.msra.mxu0 %v965
        %1697 = vmatpush.bf16.msra.mxu0 %v962
        %1698 = vmatpush.bf16.msra.mxu0 %v959
        %1699 = vmatpush.bf16.msra.mxu0 %v956
        %1700 = vmatmul.bf16.gmra.mxu0 %v1235
        %v1701 = vpop.f32.mrf.mxu0
        %v1702 = vadd.f32 0.0, %v1701
        %v1703 = vpop.f32.mrf.mxu0
        %v1704 = vadd.f32 0.0, %v1703
        %1705 = vmatmul.bf16.gmra.mxu0 %v1236
        %v1706 = vpop.f32.mrf.mxu0
        %v1707 = vadd.f32 0.0, %v1706
        %v1708 = vpop.f32.mrf.mxu0
        %v1709 = vadd.f32 0.0, %v1708
        %1710 = vmatmul.bf16.gmra.mxu0 %v1237
        %v1711 = vpop.f32.mrf.mxu0
        %v1712 = vadd.f32 0.0, %v1711
        %v1713 = vpop.f32.mrf.mxu0
        %v1714 = vadd.f32 0.0, %v1713
        %1715 = vmatmul.bf16.gmra.mxu0 %v1238
        %v1716 = vpop.f32.mrf.mxu0
        %v1717 = vadd.f32 0.0, %v1716
        %v1718 = vpop.f32.mrf.mxu0
        %v1719 = vadd.f32 0.0, %v1718
        %1720 = vmatmul.bf16.gmra.mxu0 %v1239
        %v1721 = vpop.f32.mrf.mxu0
        %v1722 = vadd.f32 0.0, %v1721
        %v1723 = vpop.f32.mrf.mxu0
        %v1724 = vadd.f32 0.0, %v1723
        %1725 = vmatmul.bf16.gmra.mxu0 %v1240
        %v1726 = vpop.f32.mrf.mxu0
        %v1727 = vadd.f32 0.0, %v1726
        %v1728 = vpop.f32.mrf.mxu0
        %v1729 = vadd.f32 0.0, %v1728
        %1730 = vmatmul.bf16.gmra.mxu0 %v1241
        %v1731 = vpop.f32.mrf.mxu0
        %v1732 = vadd.f32 0.0, %v1731
        %v1733 = vpop.f32.mrf.mxu0
        %v1734 = vadd.f32 0.0, %v1733
        %1735 = vmatmul.bf16.gmra.mxu0 %v1242
        %v1736 = vpop.f32.mrf.mxu0
        %v1737 = vadd.f32 0.0, %v1736
        %v1738 = vpop.f32.mrf.mxu0
        %v1739 = vadd.f32 0.0, %v1738
        %1740 = vmatmul.bf16.gmra.mxu0 %v1243
        %v1741 = vpop.f32.mrf.mxu0
        %v1742 = vadd.f32 0.0, %v1741
        %v1743 = vpop.f32.mrf.mxu0
        %v1744 = vadd.f32 0.0, %v1743
        %1745 = vmatmul.bf16.gmra.mxu0 %v1244
        %v1746 = vpop.f32.mrf.mxu0
        %v1747 = vadd.f32 0.0, %v1746
        %v1748 = vpop.f32.mrf.mxu0
        %v1749 = vadd.f32 0.0, %v1748
        %1750 = vmatmul.bf16.gmra.mxu0 %v1245
        %v1751 = vpop.f32.mrf.mxu0
        %v1752 = vadd.f32 0.0, %v1751
        %v1753 = vpop.f32.mrf.mxu0
        %v1754 = vadd.f32 0.0, %v1753
        %1755 = vmatmul.bf16.gmra.mxu0 %v1246
        %v1756 = vpop.f32.mrf.mxu0
        %v1757 = vadd.f32 0.0, %v1756
        %v1758 = vpop.f32.mrf.mxu0
        %v1759 = vadd.f32 0.0, %v1758
        %1760 = vmatmul.bf16.gmra.mxu0 %v1247
        %v1761 = vpop.f32.mrf.mxu0
        %v1762 = vadd.f32 0.0, %v1761
        %v1763 = vpop.f32.mrf.mxu0
        %v1764 = vadd.f32 0.0, %v1763
        %1765 = vmatmul.bf16.gmra.mxu0 %v1248
        %v1766 = vpop.f32.mrf.mxu0
        %v1767 = vadd.f32 0.0, %v1766
        %v1768 = vpop.f32.mrf.mxu0
        %v1769 = vadd.f32 0.0, %v1768
        %1770 = vmatmul.bf16.gmra.mxu0 %v1249
        %v1771 = vpop.f32.mrf.mxu0
        %v1772 = vadd.f32 0.0, %v1771
        %v1773 = vpop.f32.mrf.mxu0
        %v1774 = vadd.f32 0.0, %v1773
        %1775 = vmatmul.bf16.gmra.mxu0 %v1250
        %v1776 = vpop.f32.mrf.mxu0
        %v1777 = vadd.f32 0.0, %v1776
        %v1778 = vpop.f32.mrf.mxu0
        %v1779 = vadd.f32 0.0, %v1778
        %1780 = vmatmul.bf16.gmra.mxu0 %v1251
        %v1781 = vpop.f32.mrf.mxu0
        %v1782 = vadd.f32 0.0, %v1781
        %v1783 = vpop.f32.mrf.mxu0
        %v1784 = vadd.f32 0.0, %v1783
        %1785 = vmatmul.bf16.gmra.mxu0 %v1252
        %v1786 = vpop.f32.mrf.mxu0
        %v1787 = vadd.f32 0.0, %v1786
        %v1788 = vpop.f32.mrf.mxu0
        %v1789 = vadd.f32 0.0, %v1788
        %1790 = vmatmul.bf16.gmra.mxu0 %v1253
        %v1791 = vpop.f32.mrf.mxu0
        %v1792 = vadd.f32 0.0, %v1791
        %v1793 = vpop.f32.mrf.mxu0
        %v1794 = vadd.f32 0.0, %v1793
        %1795 = vmatmul.bf16.gmra.mxu0 %v1254
        %v1796 = vpop.f32.mrf.mxu0
        %v1797 = vadd.f32 0.0, %v1796
        %v1798 = vpop.f32.mrf.mxu0
        %v1799 = vadd.f32 0.0, %v1798
        %1800 = vmatmul.bf16.gmra.mxu0 %v1255
        %v1801 = vpop.f32.mrf.mxu0
        %v1802 = vadd.f32 0.0, %v1801
        %v1803 = vpop.f32.mrf.mxu0
        %v1804 = vadd.f32 0.0, %v1803
        %1805 = vmatmul.bf16.gmra.mxu0 %v1256
        %v1806 = vpop.f32.mrf.mxu0
        %v1807 = vadd.f32 0.0, %v1806
        %v1808 = vpop.f32.mrf.mxu0
        %v1809 = vadd.f32 0.0, %v1808
        %1810 = vmatmul.bf16.gmra.mxu0 %v1257
        %v1811 = vpop.f32.mrf.mxu0
        %v1812 = vadd.f32 0.0, %v1811
        %v1813 = vpop.f32.mrf.mxu0
        %v1814 = vadd.f32 0.0, %v1813
        %1815 = vmatmul.bf16.gmra.mxu0 %v1258
        %v1816 = vpop.f32.mrf.mxu0
        %v1817 = vadd.f32 0.0, %v1816
        %v1818 = vpop.f32.mrf.mxu0
        %v1819 = vadd.f32 0.0, %v1818
        %1820 = vmatmul.bf16.gmra.mxu0 %v1259
        %v1821 = vpop.f32.mrf.mxu0
        %v1822 = vadd.f32 0.0, %v1821
        %v1823 = vpop.f32.mrf.mxu0
        %v1824 = vadd.f32 0.0, %v1823
        %1825 = vmatmul.bf16.gmra.mxu0 %v1260
        %v1826 = vpop.f32.mrf.mxu0
        %v1827 = vadd.f32 0.0, %v1826
        %v1828 = vpop.f32.mrf.mxu0
        %v1829 = vadd.f32 0.0, %v1828
        %1830 = vmatmul.bf16.gmra.mxu0 %v1261
        %v1831 = vpop.f32.mrf.mxu0
        %v1832 = vadd.f32 0.0, %v1831
        %v1833 = vpop.f32.mrf.mxu0
        %v1834 = vadd.f32 0.0, %v1833
        %1835 = vmatmul.bf16.gmra.mxu0 %v1262
        %v1836 = vpop.f32.mrf.mxu0
        %v1837 = vadd.f32 0.0, %v1836
        %v1838 = vpop.f32.mrf.mxu0
        %v1839 = vadd.f32 0.0, %v1838
        %1840 = vmatmul.bf16.gmra.mxu0 %v1263
        %v1841 = vpop.f32.mrf.mxu0
        %v1842 = vadd.f32 0.0, %v1841
        %v1843 = vpop.f32.mrf.mxu0
        %v1844 = vadd.f32 0.0, %v1843
        %1845 = vmatmul.bf16.gmra.mxu0 %v1264
        %v1846 = vpop.f32.mrf.mxu0
        %v1847 = vadd.f32 0.0, %v1846
        %v1848 = vpop.f32.mrf.mxu0
        %v1849 = vadd.f32 0.0, %v1848
        %1850 = vmatmul.bf16.gmra.mxu0 %v1265
        %v1851 = vpop.f32.mrf.mxu0
        %v1852 = vadd.f32 0.0, %v1851
        %v1853 = vpop.f32.mrf.mxu0
        %v1854 = vadd.f32 0.0, %v1853
        %1855 = vmatmul.bf16.gmra.mxu0 %v1266
        %v1856 = vpop.f32.mrf.mxu0
        %v1857 = vadd.f32 0.0, %v1856
        %v1858 = vpop.f32.mrf.mxu0
        %v1859 = vadd.f32 0.0, %v1858
        %1860 = vmatmul.bf16.gmra.mxu0 %v1267
        %v1861 = vpop.f32.mrf.mxu0
        %v1862 = vadd.f32 0.0, %v1861
        %v1863 = vpop.f32.mrf.mxu0
        %v1864 = vadd.f32 0.0, %v1863
        %1865 = vmatmul.bf16.gmra.mxu0 %v1268
        %v1866 = vpop.f32.mrf.mxu0
        %v1867 = vadd.f32 0.0, %v1866
        %v1868 = vpop.f32.mrf.mxu0
        %v1869 = vadd.f32 0.0, %v1868
        %1870 = vmatmul.bf16.gmra.mxu0 %v1269
        %v1871 = vpop.f32.mrf.mxu0
        %v1872 = vadd.f32 0.0, %v1871
        %v1873 = vpop.f32.mrf.mxu0
        %v1874 = vadd.f32 0.0, %v1873
        %1875 = vmatmul.bf16.gmra.mxu0 %v1270
        %v1876 = vpop.f32.mrf.mxu0
        %v1877 = vadd.f32 0.0, %v1876
        %v1878 = vpop.f32.mrf.mxu0
        %v1879 = vadd.f32 0.0, %v1878
        %1880 = vmatmul.bf16.gmra.mxu0 %v1271
        %v1881 = vpop.f32.mrf.mxu0
        %v1882 = vadd.f32 0.0, %v1881
        %v1883 = vpop.f32.mrf.mxu0
        %v1884 = vadd.f32 0.0, %v1883
        %1885 = vmatmul.bf16.gmra.mxu0 %v1272
        %v1886 = vpop.f32.mrf.mxu0
        %v1887 = vadd.f32 0.0, %v1886
        %v1888 = vpop.f32.mrf.mxu0
        %v1889 = vadd.f32 0.0, %v1888
        %1890 = vmatmul.bf16.gmra.mxu0 %v1273
        %v1891 = vpop.f32.mrf.mxu0
        %v1892 = vadd.f32 0.0, %v1891
        %v1893 = vpop.f32.mrf.mxu0
        %v1894 = vadd.f32 0.0, %v1893
        %1895 = vmatmul.bf16.gmra.mxu0 %v1274
        %v1896 = vpop.f32.mrf.mxu0
        %v1897 = vadd.f32 0.0, %v1896
        %v1898 = vpop.f32.mrf.mxu0
        %v1899 = vadd.f32 0.0, %v1898
        %1900 = vmatmul.bf16.gmra.mxu0 %v1275
        %v1901 = vpop.f32.mrf.mxu0
        %v1902 = vadd.f32 0.0, %v1901
        %v1903 = vpop.f32.mrf.mxu0
        %v1904 = vadd.f32 0.0, %v1903
        %1905 = vmatmul.bf16.gmra.mxu0 %v1276
        %v1906 = vpop.f32.mrf.mxu0
        %v1907 = vadd.f32 0.0, %v1906
        %v1908 = vpop.f32.mrf.mxu0
        %v1909 = vadd.f32 0.0, %v1908
        %1910 = vmatmul.bf16.gmra.mxu0 %v1277
        %v1911 = vpop.f32.mrf.mxu0
        %v1912 = vadd.f32 0.0, %v1911
        %v1913 = vpop.f32.mrf.mxu0
        %v1914 = vadd.f32 0.0, %v1913
        %1915 = vmatmul.bf16.gmra.mxu0 %v1278
        %v1916 = vpop.f32.mrf.mxu0
        %v1917 = vadd.f32 0.0, %v1916
        %v1918 = vpop.f32.mrf.mxu0
        %v1919 = vadd.f32 0.0, %v1918
        %1920 = vmatmul.bf16.gmra.mxu0 %v1279
        %v1921 = vpop.f32.mrf.mxu0
        %v1922 = vadd.f32 0.0, %v1921
        %v1923 = vpop.f32.mrf.mxu0
        %v1924 = vadd.f32 0.0, %v1923
        %1925 = vmatmul.bf16.gmra.mxu0 %v1280
        %v1926 = vpop.f32.mrf.mxu0
        %v1927 = vadd.f32 0.0, %v1926
        %v1928 = vpop.f32.mrf.mxu0
        %v1929 = vadd.f32 0.0, %v1928
        %1930 = vmatmul.bf16.gmra.mxu0 %v1281
        %v1931 = vpop.f32.mrf.mxu0
        %v1932 = vadd.f32 0.0, %v1931
        %v1933 = vpop.f32.mrf.mxu0
        %v1934 = vadd.f32 0.0, %v1933
        %1935 = vmatmul.bf16.gmra.mxu0 %v1282
        %v1936 = vpop.f32.mrf.mxu0
        %v1937 = vadd.f32 0.0, %v1936
        %v1938 = vpop.f32.mrf.mxu0
        %v1939 = vadd.f32 0.0, %v1938
        %1940 = vmatmul.bf16.gmra.mxu0 %v1283
        %v1941 = vpop.f32.mrf.mxu0
        %v1942 = vadd.f32 0.0, %v1941
        %v1943 = vpop.f32.mrf.mxu0
        %v1944 = vadd.f32 0.0, %v1943
        %1945 = vmatmul.bf16.gmra.mxu0 %v1284
        %v1946 = vpop.f32.mrf.mxu0
        %v1947 = vadd.f32 0.0, %v1946
        %v1948 = vpop.f32.mrf.mxu0
        %v1949 = vadd.f32 0.0, %v1948
        %1950 = vmatmul.bf16.gmra.mxu0 %v1285
        %v1951 = vpop.f32.mrf.mxu0
        %v1952 = vadd.f32 0.0, %v1951
        %v1953 = vpop.f32.mrf.mxu0
        %v1954 = vadd.f32 0.0, %v1953
        %1955 = vmatmul.bf16.gmra.mxu0 %v1286
        %v1956 = vpop.f32.mrf.mxu0
        %v1957 = vadd.f32 0.0, %v1956
        %v1958 = vpop.f32.mrf.mxu0
        %v1959 = vadd.f32 0.0, %v1958
        %1960 = vmatmul.bf16.gmra.mxu0 %v1287
        %v1961 = vpop.f32.mrf.mxu0
        %v1962 = vadd.f32 0.0, %v1961
        %v1963 = vpop.f32.mrf.mxu0
        %v1964 = vadd.f32 0.0, %v1963
        %1965 = vmatmul.bf16.gmra.mxu0 %v1288
        %v1966 = vpop.f32.mrf.mxu0
        %v1967 = vadd.f32 0.0, %v1966
        %v1968 = vpop.f32.mrf.mxu0
        %v1969 = vadd.f32 0.0, %v1968
        %1970 = vmatmul.bf16.gmra.mxu0 %v1289
        %v1971 = vpop.f32.mrf.mxu0
        %v1972 = vadd.f32 0.0, %v1971
        %v1973 = vpop.f32.mrf.mxu0
        %v1974 = vadd.f32 0.0, %v1973
        %1975 = vmatmul.bf16.gmra.mxu0 %v1290
        %v1976 = vpop.f32.mrf.mxu0
        %v1977 = vadd.f32 0.0, %v1976
        %v1978 = vpop.f32.mrf.mxu0
        %v1979 = vadd.f32 0.0, %v1978
        %1980 = vmatmul.bf16.gmra.mxu0 %v1291
        %v1981 = vpop.f32.mrf.mxu0
        %v1982 = vadd.f32 0.0, %v1981
        %v1983 = vpop.f32.mrf.mxu0
        %v1984 = vadd.f32 0.0, %v1983
        %1985 = vmatmul.bf16.gmra.mxu0 %v1292
        %v1986 = vpop.f32.mrf.mxu0
        %v1987 = vadd.f32 0.0, %v1986
        %v1988 = vpop.f32.mrf.mxu0
        %v1989 = vadd.f32 0.0, %v1988
        %1990 = vmatmul.bf16.gmra.mxu0 %v1293
        %v1991 = vpop.f32.mrf.mxu0
        %v1992 = vadd.f32 0.0, %v1991
        %v1993 = vpop.f32.mrf.mxu0
        %v1994 = vadd.f32 0.0, %v1993
        %1995 = vmatmul.bf16.gmra.mxu0 %v1294
        %v1996 = vpop.f32.mrf.mxu0
        %v1997 = vadd.f32 0.0, %v1996
        %v1998 = vpop.f32.mrf.mxu0
        %v1999 = vadd.f32 0.0, %v1998
        %2000 = vmatmul.bf16.gmra.mxu0 %v1295
        %v2001 = vpop.f32.mrf.mxu0
        %v2002 = vadd.f32 0.0, %v2001
        %v2003 = vpop.f32.mrf.mxu0
        %v2004 = vadd.f32 0.0, %v2003
        %2005 = vmatmul.bf16.gmra.mxu0 %v1296
        %v2006 = vpop.f32.mrf.mxu0
        %v2007 = vadd.f32 0.0, %v2006
        %v2008 = vpop.f32.mrf.mxu0
        %v2009 = vadd.f32 0.0, %v2008
        %2010 = vmatmul.bf16.gmra.mxu0 %v1297
        %v2011 = vpop.f32.mrf.mxu0
        %v2012 = vadd.f32 0.0, %v2011
        %v2013 = vpop.f32.mrf.mxu0
        %v2014 = vadd.f32 0.0, %v2013
        %2015 = vmatmul.bf16.gmra.mxu0 %v1298
        %v2016 = vpop.f32.mrf.mxu0
        %v2017 = vadd.f32 0.0, %v2016
        %v2018 = vpop.f32.mrf.mxu0
        %v2019 = vadd.f32 0.0, %v2018
        %2020 = vdwg.mxu0
        %2021 = vmatpush.bf16.msra.mxu0 %v978
        %2022 = vmatpush.bf16.msra.mxu0 %v975
        %2023 = vmatpush.bf16.msra.mxu0 %v972
        %2024 = vmatpush.bf16.msra.mxu0 %v969
        %2025 = vmatpush.bf16.msra.mxu0 %v966
        %2026 = vmatpush.bf16.msra.mxu0 %v963
        %2027 = vmatpush.bf16.msra.mxu0 %v960
        %2028 = vmatpush.bf16.msra.mxu0 %v957
        %2029 = vmatmul.bf16.gmra.mxu0 %v1235
        %v2030 = vpop.f32.mrf.mxu0
        %v2031 = vadd.f32 0.0, %v2030
        %v2032 = vpop.f32.mrf.mxu0
        %v2033 = vadd.f32 0.0, %v2032
        %2034 = vmatmul.bf16.gmra.mxu0 %v1236
        %v2035 = vpop.f32.mrf.mxu0
        %v2036 = vadd.f32 0.0, %v2035
        %v2037 = vpop.f32.mrf.mxu0
        %v2038 = vadd.f32 0.0, %v2037
        %2039 = vmatmul.bf16.gmra.mxu0 %v1237
        %v2040 = vpop.f32.mrf.mxu0
        %v2041 = vadd.f32 0.0, %v2040
        %v2042 = vpop.f32.mrf.mxu0
        %v2043 = vadd.f32 0.0, %v2042
        %2044 = vmatmul.bf16.gmra.mxu0 %v1238
        %v2045 = vpop.f32.mrf.mxu0
        %v2046 = vadd.f32 0.0, %v2045
        %v2047 = vpop.f32.mrf.mxu0
        %v2048 = vadd.f32 0.0, %v2047
        %2049 = vmatmul.bf16.gmra.mxu0 %v1239
        %v2050 = vpop.f32.mrf.mxu0
        %v2051 = vadd.f32 0.0, %v2050
        %v2052 = vpop.f32.mrf.mxu0
        %v2053 = vadd.f32 0.0, %v2052
        %2054 = vmatmul.bf16.gmra.mxu0 %v1240
        %v2055 = vpop.f32.mrf.mxu0
        %v2056 = vadd.f32 0.0, %v2055
        %v2057 = vpop.f32.mrf.mxu0
        %v2058 = vadd.f32 0.0, %v2057
        %2059 = vmatmul.bf16.gmra.mxu0 %v1241
        %v2060 = vpop.f32.mrf.mxu0
        %v2061 = vadd.f32 0.0, %v2060
        %v2062 = vpop.f32.mrf.mxu0
        %v2063 = vadd.f32 0.0, %v2062
        %2064 = vmatmul.bf16.gmra.mxu0 %v1242
        %v2065 = vpop.f32.mrf.mxu0
        %v2066 = vadd.f32 0.0, %v2065
        %v2067 = vpop.f32.mrf.mxu0
        %v2068 = vadd.f32 0.0, %v2067
        %2069 = vmatmul.bf16.gmra.mxu0 %v1243
        %v2070 = vpop.f32.mrf.mxu0
        %v2071 = vadd.f32 0.0, %v2070
        %v2072 = vpop.f32.mrf.mxu0
        %v2073 = vadd.f32 0.0, %v2072
        %2074 = vmatmul.bf16.gmra.mxu0 %v1244
        %v2075 = vpop.f32.mrf.mxu0
        %v2076 = vadd.f32 0.0, %v2075
        %v2077 = vpop.f32.mrf.mxu0
        %v2078 = vadd.f32 0.0, %v2077
        %2079 = vmatmul.bf16.gmra.mxu0 %v1245
        %v2080 = vpop.f32.mrf.mxu0
        %v2081 = vadd.f32 0.0, %v2080
        %v2082 = vpop.f32.mrf.mxu0
        %v2083 = vadd.f32 0.0, %v2082
        %2084 = vmatmul.bf16.gmra.mxu0 %v1246
        %v2085 = vpop.f32.mrf.mxu0
        %v2086 = vadd.f32 0.0, %v2085
        %v2087 = vpop.f32.mrf.mxu0
        %v2088 = vadd.f32 0.0, %v2087
        %2089 = vmatmul.bf16.gmra.mxu0 %v1247
        %v2090 = vpop.f32.mrf.mxu0
        %v2091 = vadd.f32 0.0, %v2090
        %v2092 = vpop.f32.mrf.mxu0
        %v2093 = vadd.f32 0.0, %v2092
        %2094 = vmatmul.bf16.gmra.mxu0 %v1248
        %v2095 = vpop.f32.mrf.mxu0
        %v2096 = vadd.f32 0.0, %v2095
        %v2097 = vpop.f32.mrf.mxu0
        %v2098 = vadd.f32 0.0, %v2097
        %2099 = vmatmul.bf16.gmra.mxu0 %v1249
        %v2100 = vpop.f32.mrf.mxu0
        %v2101 = vadd.f32 0.0, %v2100
        %v2102 = vpop.f32.mrf.mxu0
        %v2103 = vadd.f32 0.0, %v2102
        %2104 = vmatmul.bf16.gmra.mxu0 %v1250
        %v2105 = vpop.f32.mrf.mxu0
        %v2106 = vadd.f32 0.0, %v2105
        %v2107 = vpop.f32.mrf.mxu0
        %v2108 = vadd.f32 0.0, %v2107
        %2109 = vmatmul.bf16.gmra.mxu0 %v1251
        %v2110 = vpop.f32.mrf.mxu0
        %v2111 = vadd.f32 0.0, %v2110
        %v2112 = vpop.f32.mrf.mxu0
        %v2113 = vadd.f32 0.0, %v2112
        %2114 = vmatmul.bf16.gmra.mxu0 %v1252
        %v2115 = vpop.f32.mrf.mxu0
        %v2116 = vadd.f32 0.0, %v2115
        %v2117 = vpop.f32.mrf.mxu0
        %v2118 = vadd.f32 0.0, %v2117
        %2119 = vmatmul.bf16.gmra.mxu0 %v1253
        %v2120 = vpop.f32.mrf.mxu0
        %v2121 = vadd.f32 0.0, %v2120
        %v2122 = vpop.f32.mrf.mxu0
        %v2123 = vadd.f32 0.0, %v2122
        %2124 = vmatmul.bf16.gmra.mxu0 %v1254
        %v2125 = vpop.f32.mrf.mxu0
        %v2126 = vadd.f32 0.0, %v2125
        %v2127 = vpop.f32.mrf.mxu0
        %v2128 = vadd.f32 0.0, %v2127
        %2129 = vmatmul.bf16.gmra.mxu0 %v1255
        %v2130 = vpop.f32.mrf.mxu0
        %v2131 = vadd.f32 0.0, %v2130
        %v2132 = vpop.f32.mrf.mxu0
        %v2133 = vadd.f32 0.0, %v2132
        %2134 = vmatmul.bf16.gmra.mxu0 %v1256
        %v2135 = vpop.f32.mrf.mxu0
        %v2136 = vadd.f32 0.0, %v2135
        %v2137 = vpop.f32.mrf.mxu0
        %v2138 = vadd.f32 0.0, %v2137
        %2139 = vmatmul.bf16.gmra.mxu0 %v1257
        %v2140 = vpop.f32.mrf.mxu0
        %v2141 = vadd.f32 0.0, %v2140
        %v2142 = vpop.f32.mrf.mxu0
        %v2143 = vadd.f32 0.0, %v2142
        %2144 = vmatmul.bf16.gmra.mxu0 %v1258
        %v2145 = vpop.f32.mrf.mxu0
        %v2146 = vadd.f32 0.0, %v2145
        %v2147 = vpop.f32.mrf.mxu0
        %v2148 = vadd.f32 0.0, %v2147
        %2149 = vmatmul.bf16.gmra.mxu0 %v1259
        %v2150 = vpop.f32.mrf.mxu0
        %v2151 = vadd.f32 0.0, %v2150
        %v2152 = vpop.f32.mrf.mxu0
        %v2153 = vadd.f32 0.0, %v2152
        %2154 = vmatmul.bf16.gmra.mxu0 %v1260
        %v2155 = vpop.f32.mrf.mxu0
        %v2156 = vadd.f32 0.0, %v2155
        %v2157 = vpop.f32.mrf.mxu0
        %v2158 = vadd.f32 0.0, %v2157
        %2159 = vmatmul.bf16.gmra.mxu0 %v1261
        %v2160 = vpop.f32.mrf.mxu0
        %v2161 = vadd.f32 0.0, %v2160
        %v2162 = vpop.f32.mrf.mxu0
        %v2163 = vadd.f32 0.0, %v2162
        %2164 = vmatmul.bf16.gmra.mxu0 %v1262
        %v2165 = vpop.f32.mrf.mxu0
        %v2166 = vadd.f32 0.0, %v2165
        %v2167 = vpop.f32.mrf.mxu0
        %v2168 = vadd.f32 0.0, %v2167
        %2169 = vmatmul.bf16.gmra.mxu0 %v1263
        %v2170 = vpop.f32.mrf.mxu0
        %v2171 = vadd.f32 0.0, %v2170
        %v2172 = vpop.f32.mrf.mxu0
        %v2173 = vadd.f32 0.0, %v2172
        %2174 = vmatmul.bf16.gmra.mxu0 %v1264
        %v2175 = vpop.f32.mrf.mxu0
        %v2176 = vadd.f32 0.0, %v2175
        %v2177 = vpop.f32.mrf.mxu0
        %v2178 = vadd.f32 0.0, %v2177
        %2179 = vmatmul.bf16.gmra.mxu0 %v1265
        %v2180 = vpop.f32.mrf.mxu0
        %v2181 = vadd.f32 0.0, %v2180
        %v2182 = vpop.f32.mrf.mxu0
        %v2183 = vadd.f32 0.0, %v2182
        %2184 = vmatmul.bf16.gmra.mxu0 %v1266
        %v2185 = vpop.f32.mrf.mxu0
        %v2186 = vadd.f32 0.0, %v2185
        %v2187 = vpop.f32.mrf.mxu0
        %v2188 = vadd.f32 0.0, %v2187
        %2189 = vmatmul.bf16.gmra.mxu0 %v1267
        %v2190 = vpop.f32.mrf.mxu0
        %v2191 = vadd.f32 0.0, %v2190
        %v2192 = vpop.f32.mrf.mxu0
        %v2193 = vadd.f32 0.0, %v2192
        %2194 = vmatmul.bf16.gmra.mxu0 %v1268
        %v2195 = vpop.f32.mrf.mxu0
        %v2196 = vadd.f32 0.0, %v2195
        %v2197 = vpop.f32.mrf.mxu0
        %v2198 = vadd.f32 0.0, %v2197
        %2199 = vmatmul.bf16.gmra.mxu0 %v1269
        %v2200 = vpop.f32.mrf.mxu0
        %v2201 = vadd.f32 0.0, %v2200
        %v2202 = vpop.f32.mrf.mxu0
        %v2203 = vadd.f32 0.0, %v2202
        %2204 = vmatmul.bf16.gmra.mxu0 %v1270
        %v2205 = vpop.f32.mrf.mxu0
        %v2206 = vadd.f32 0.0, %v2205
        %v2207 = vpop.f32.mrf.mxu0
        %v2208 = vadd.f32 0.0, %v2207
        %2209 = vmatmul.bf16.gmra.mxu0 %v1271
        %v2210 = vpop.f32.mrf.mxu0
        %v2211 = vadd.f32 0.0, %v2210
        %v2212 = vpop.f32.mrf.mxu0
        %v2213 = vadd.f32 0.0, %v2212
        %2214 = vmatmul.bf16.gmra.mxu0 %v1272
        %v2215 = vpop.f32.mrf.mxu0
        %v2216 = vadd.f32 0.0, %v2215
        %v2217 = vpop.f32.mrf.mxu0
        %v2218 = vadd.f32 0.0, %v2217
        %2219 = vmatmul.bf16.gmra.mxu0 %v1273
        %v2220 = vpop.f32.mrf.mxu0
        %v2221 = vadd.f32 0.0, %v2220
        %v2222 = vpop.f32.mrf.mxu0
        %v2223 = vadd.f32 0.0, %v2222
        %2224 = vmatmul.bf16.gmra.mxu0 %v1274
        %v2225 = vpop.f32.mrf.mxu0
        %v2226 = vadd.f32 0.0, %v2225
        %v2227 = vpop.f32.mrf.mxu0
        %v2228 = vadd.f32 0.0, %v2227
        %2229 = vmatmul.bf16.gmra.mxu0 %v1275
        %v2230 = vpop.f32.mrf.mxu0
        %v2231 = vadd.f32 0.0, %v2230
        %v2232 = vpop.f32.mrf.mxu0
        %v2233 = vadd.f32 0.0, %v2232
        %2234 = vmatmul.bf16.gmra.mxu0 %v1276
        %v2235 = vpop.f32.mrf.mxu0
        %v2236 = vadd.f32 0.0, %v2235
        %v2237 = vpop.f32.mrf.mxu0
        %v2238 = vadd.f32 0.0, %v2237
        %2239 = vmatmul.bf16.gmra.mxu0 %v1277
        %v2240 = vpop.f32.mrf.mxu0
        %v2241 = vadd.f32 0.0, %v2240
        %v2242 = vpop.f32.mrf.mxu0
        %v2243 = vadd.f32 0.0, %v2242
        %2244 = vmatmul.bf16.gmra.mxu0 %v1278
        %v2245 = vpop.f32.mrf.mxu0
        %v2246 = vadd.f32 0.0, %v2245
        %v2247 = vpop.f32.mrf.mxu0
        %v2248 = vadd.f32 0.0, %v2247
        %2249 = vmatmul.bf16.gmra.mxu0 %v1279
        %v2250 = vpop.f32.mrf.mxu0
        %v2251 = vadd.f32 0.0, %v2250
        %v2252 = vpop.f32.mrf.mxu0
        %v2253 = vadd.f32 0.0, %v2252
        %2254 = vmatmul.bf16.gmra.mxu0 %v1280
        %v2255 = vpop.f32.mrf.mxu0
        %v2256 = vadd.f32 0.0, %v2255
        %v2257 = vpop.f32.mrf.mxu0
        %v2258 = vadd.f32 0.0, %v2257
        %2259 = vmatmul.bf16.gmra.mxu0 %v1281
        %v2260 = vpop.f32.mrf.mxu0
        %v2261 = vadd.f32 0.0, %v2260
        %v2262 = vpop.f32.mrf.mxu0
        %v2263 = vadd.f32 0.0, %v2262
        %2264 = vmatmul.bf16.gmra.mxu0 %v1282
        %v2265 = vpop.f32.mrf.mxu0
        %v2266 = vadd.f32 0.0, %v2265
        %v2267 = vpop.f32.mrf.mxu0
        %v2268 = vadd.f32 0.0, %v2267
        %2269 = vmatmul.bf16.gmra.mxu0 %v1283
        %v2270 = vpop.f32.mrf.mxu0
        %v2271 = vadd.f32 0.0, %v2270
        %v2272 = vpop.f32.mrf.mxu0
        %v2273 = vadd.f32 0.0, %v2272
        %2274 = vmatmul.bf16.gmra.mxu0 %v1284
        %v2275 = vpop.f32.mrf.mxu0
        %v2276 = vadd.f32 0.0, %v2275
        %v2277 = vpop.f32.mrf.mxu0
        %v2278 = vadd.f32 0.0, %v2277
        %2279 = vmatmul.bf16.gmra.mxu0 %v1285
        %v2280 = vpop.f32.mrf.mxu0
        %v2281 = vadd.f32 0.0, %v2280
        %v2282 = vpop.f32.mrf.mxu0
        %v2283 = vadd.f32 0.0, %v2282
        %2284 = vmatmul.bf16.gmra.mxu0 %v1286
        %v2285 = vpop.f32.mrf.mxu0
        %v2286 = vadd.f32 0.0, %v2285
        %v2287 = vpop.f32.mrf.mxu0
        %v2288 = vadd.f32 0.0, %v2287
        %2289 = vmatmul.bf16.gmra.mxu0 %v1287
        %v2290 = vpop.f32.mrf.mxu0
        %v2291 = vadd.f32 0.0, %v2290
        %v2292 = vpop.f32.mrf.mxu0
        %v2293 = vadd.f32 0.0, %v2292
        %2294 = vmatmul.bf16.gmra.mxu0 %v1288
        %v2295 = vpop.f32.mrf.mxu0
        %v2296 = vadd.f32 0.0, %v2295
        %v2297 = vpop.f32.mrf.mxu0
        %v2298 = vadd.f32 0.0, %v2297
        %2299 = vmatmul.bf16.gmra.mxu0 %v1289
        %v2300 = vpop.f32.mrf.mxu0
        %v2301 = vadd.f32 0.0, %v2300
        %v2302 = vpop.f32.mrf.mxu0
        %v2303 = vadd.f32 0.0, %v2302
        %2304 = vmatmul.bf16.gmra.mxu0 %v1290
        %v2305 = vpop.f32.mrf.mxu0
        %v2306 = vadd.f32 0.0, %v2305
        %v2307 = vpop.f32.mrf.mxu0
        %v2308 = vadd.f32 0.0, %v2307
        %2309 = vmatmul.bf16.gmra.mxu0 %v1291
        %v2310 = vpop.f32.mrf.mxu0
        %v2311 = vadd.f32 0.0, %v2310
        %v2312 = vpop.f32.mrf.mxu0
        %v2313 = vadd.f32 0.0, %v2312
        %2314 = vmatmul.bf16.gmra.mxu0 %v1292
        %v2315 = vpop.f32.mrf.mxu0
        %v2316 = vadd.f32 0.0, %v2315
        %v2317 = vpop.f32.mrf.mxu0
        %v2318 = vadd.f32 0.0, %v2317
        %2319 = vmatmul.bf16.gmra.mxu0 %v1293
        %v2320 = vpop.f32.mrf.mxu0
        %v2321 = vadd.f32 0.0, %v2320
        %v2322 = vpop.f32.mrf.mxu0
        %v2323 = vadd.f32 0.0, %v2322
        %2324 = vmatmul.bf16.gmra.mxu0 %v1294
        %v2325 = vpop.f32.mrf.mxu0
        %v2326 = vadd.f32 0.0, %v2325
        %v2327 = vpop.f32.mrf.mxu0
        %v2328 = vadd.f32 0.0, %v2327
        %2329 = vmatmul.bf16.gmra.mxu0 %v1295
        %v2330 = vpop.f32.mrf.mxu0
        %v2331 = vadd.f32 0.0, %v2330
        %v2332 = vpop.f32.mrf.mxu0
        %v2333 = vadd.f32 0.0, %v2332
        %2334 = vmatmul.bf16.gmra.mxu0 %v1296
        %v2335 = vpop.f32.mrf.mxu0
        %v2336 = vadd.f32 0.0, %v2335
        %v2337 = vpop.f32.mrf.mxu0
        %v2338 = vadd.f32 0.0, %v2337
        %2339 = vmatmul.bf16.gmra.mxu0 %v1297
        %v2340 = vpop.f32.mrf.mxu0
        %v2341 = vadd.f32 0.0, %v2340
        %v2342 = vpop.f32.mrf.mxu0
        %v2343 = vadd.f32 0.0, %v2342
        %2344 = vmatmul.bf16.gmra.mxu0 %v1298
        %v2345 = vpop.f32.mrf.mxu0
        %v2346 = vadd.f32 0.0, %v2345
        %v2347 = vpop.f32.mrf.mxu0
        %v2348 = vadd.f32 0.0, %v2347
        %2349 = vdwg.mxu0
        %v2350 = vmax.f32 %v1373, %v1702
        %v2351 = vmax.f32 %v1375, %v1704
        %v2352 = vmax.f32 %v1378, %v1707
        %v2353 = vmax.f32 %v1380, %v1709
        %v2354 = vmax.f32 %v1383, %v1712
        %v2355 = vmax.f32 %v1385, %v1714
        %v2356 = vmax.f32 %v1388, %v1717
        %v2357 = vmax.f32 %v1390, %v1719
        %v2358 = vmax.f32 %v1393, %v1722
        %v2359 = vmax.f32 %v1395, %v1724
        %v2360 = vmax.f32 %v1398, %v1727
        %v2361 = vmax.f32 %v1400, %v1729
        %v2362 = vmax.f32 %v1403, %v1732
        %v2363 = vmax.f32 %v1405, %v1734
        %v2364 = vmax.f32 %v1408, %v1737
        %v2365 = vmax.f32 %v1410, %v1739
        %v2366 = vmax.f32 %v1413, %v1742
        %v2367 = vmax.f32 %v1415, %v1744
        %v2368 = vmax.f32 %v1418, %v1747
        %v2369 = vmax.f32 %v1420, %v1749
        %v2370 = vmax.f32 %v1423, %v1752
        %v2371 = vmax.f32 %v1425, %v1754
        %v2372 = vmax.f32 %v1428, %v1757
        %v2373 = vmax.f32 %v1430, %v1759
        %v2374 = vmax.f32 %v1433, %v1762
        %v2375 = vmax.f32 %v1435, %v1764
        %v2376 = vmax.f32 %v1438, %v1767
        %v2377 = vmax.f32 %v1440, %v1769
        %v2378 = vmax.f32 %v1443, %v1772
        %v2379 = vmax.f32 %v1445, %v1774
        %v2380 = vmax.f32 %v1448, %v1777
        %v2381 = vmax.f32 %v1450, %v1779
        %v2382 = vmax.f32 %v1453, %v1782
        %v2383 = vmax.f32 %v1455, %v1784
        %v2384 = vmax.f32 %v1458, %v1787
        %v2385 = vmax.f32 %v1460, %v1789
        %v2386 = vmax.f32 %v1463, %v1792
        %v2387 = vmax.f32 %v1465, %v1794
        %v2388 = vmax.f32 %v1468, %v1797
        %v2389 = vmax.f32 %v1470, %v1799
        %v2390 = vmax.f32 %v1473, %v1802
        %v2391 = vmax.f32 %v1475, %v1804
        %v2392 = vmax.f32 %v1478, %v1807
        %v2393 = vmax.f32 %v1480, %v1809
        %v2394 = vmax.f32 %v1483, %v1812
        %v2395 = vmax.f32 %v1485, %v1814
        %v2396 = vmax.f32 %v1488, %v1817
        %v2397 = vmax.f32 %v1490, %v1819
        %v2398 = vmax.f32 %v1493, %v1822
        %v2399 = vmax.f32 %v1495, %v1824
        %v2400 = vmax.f32 %v1498, %v1827
        %v2401 = vmax.f32 %v1500, %v1829
        %v2402 = vmax.f32 %v1503, %v1832
        %v2403 = vmax.f32 %v1505, %v1834
        %v2404 = vmax.f32 %v1508, %v1837
        %v2405 = vmax.f32 %v1510, %v1839
        %v2406 = vmax.f32 %v1513, %v1842
        %v2407 = vmax.f32 %v1515, %v1844
        %v2408 = vmax.f32 %v1518, %v1847
        %v2409 = vmax.f32 %v1520, %v1849
        %v2410 = vmax.f32 %v1523, %v1852
        %v2411 = vmax.f32 %v1525, %v1854
        %v2412 = vmax.f32 %v1528, %v1857
        %v2413 = vmax.f32 %v1530, %v1859
        %v2414 = vmax.f32 %v1533, %v1862
        %v2415 = vmax.f32 %v1535, %v1864
        %v2416 = vmax.f32 %v1538, %v1867
        %v2417 = vmax.f32 %v1540, %v1869
        %v2418 = vmax.f32 %v1543, %v1872
        %v2419 = vmax.f32 %v1545, %v1874
        %v2420 = vmax.f32 %v1548, %v1877
        %v2421 = vmax.f32 %v1550, %v1879
        %v2422 = vmax.f32 %v1553, %v1882
        %v2423 = vmax.f32 %v1555, %v1884
        %v2424 = vmax.f32 %v1558, %v1887
        %v2425 = vmax.f32 %v1560, %v1889
        %v2426 = vmax.f32 %v1563, %v1892
        %v2427 = vmax.f32 %v1565, %v1894
        %v2428 = vmax.f32 %v1568, %v1897
        %v2429 = vmax.f32 %v1570, %v1899
        %v2430 = vmax.f32 %v1573, %v1902
        %v2431 = vmax.f32 %v1575, %v1904
        %v2432 = vmax.f32 %v1578, %v1907
        %v2433 = vmax.f32 %v1580, %v1909
        %v2434 = vmax.f32 %v1583, %v1912
        %v2435 = vmax.f32 %v1585, %v1914
        %v2436 = vmax.f32 %v1588, %v1917
        %v2437 = vmax.f32 %v1590, %v1919
        %v2438 = vmax.f32 %v1593, %v1922
        %v2439 = vmax.f32 %v1595, %v1924
        %v2440 = vmax.f32 %v1598, %v1927
        %v2441 = vmax.f32 %v1600, %v1929
        %v2442 = vmax.f32 %v1603, %v1932
        %v2443 = vmax.f32 %v1605, %v1934
        %v2444 = vmax.f32 %v1608, %v1937
        %v2445 = vmax.f32 %v1610, %v1939
        %v2446 = vmax.f32 %v1613, %v1942
        %v2447 = vmax.f32 %v1615, %v1944
        %v2448 = vmax.f32 %v1618, %v1947
        %v2449 = vmax.f32 %v1620, %v1949
        %v2450 = vmax.f32 %v1623, %v1952
        %v2451 = vmax.f32 %v1625, %v1954
        %v2452 = vmax.f32 %v1628, %v1957
        %v2453 = vmax.f32 %v1630, %v1959
        %v2454 = vmax.f32 %v1633, %v1962
        %v2455 = vmax.f32 %v1635, %v1964
        %v2456 = vmax.f32 %v1638, %v1967
        %v2457 = vmax.f32 %v1640, %v1969
        %v2458 = vmax.f32 %v1643, %v1972
        %v2459 = vmax.f32 %v1645, %v1974
        %v2460 = vmax.f32 %v1648, %v1977
        %v2461 = vmax.f32 %v1650, %v1979
        %v2462 = vmax.f32 %v1653, %v1982
        %v2463 = vmax.f32 %v1655, %v1984
        %v2464 = vmax.f32 %v1658, %v1987
        %v2465 = vmax.f32 %v1660, %v1989
        %v2466 = vmax.f32 %v1663, %v1992
        %v2467 = vmax.f32 %v1665, %v1994
        %v2468 = vmax.f32 %v1668, %v1997
        %v2469 = vmax.f32 %v1670, %v1999
        %v2470 = vmax.f32 %v1673, %v2002
        %v2471 = vmax.f32 %v1675, %v2004
        %v2472 = vmax.f32 %v1678, %v2007
        %v2473 = vmax.f32 %v1680, %v2009
        %v2474 = vmax.f32 %v1683, %v2012
        %v2475 = vmax.f32 %v1685, %v2014
        %v2476 = vmax.f32 %v1688, %v2017
        %v2477 = vmax.f32 %v1690, %v2019
        %v2478 = vmax.f32 %v2350, %v2031
        %v2479 = vmax.f32 %v2351, %v2033
        %v2480 = vmax.f32 %v2352, %v2036
        %v2481 = vmax.f32 %v2353, %v2038
        %v2482 = vmax.f32 %v2354, %v2041
        %v2483 = vmax.f32 %v2355, %v2043
        %v2484 = vmax.f32 %v2356, %v2046
        %v2485 = vmax.f32 %v2357, %v2048
        %v2486 = vmax.f32 %v2358, %v2051
        %v2487 = vmax.f32 %v2359, %v2053
        %v2488 = vmax.f32 %v2360, %v2056
        %v2489 = vmax.f32 %v2361, %v2058
        %v2490 = vmax.f32 %v2362, %v2061
        %v2491 = vmax.f32 %v2363, %v2063
        %v2492 = vmax.f32 %v2364, %v2066
        %v2493 = vmax.f32 %v2365, %v2068
        %v2494 = vmax.f32 %v2366, %v2071
        %v2495 = vmax.f32 %v2367, %v2073
        %v2496 = vmax.f32 %v2368, %v2076
        %v2497 = vmax.f32 %v2369, %v2078
        %v2498 = vmax.f32 %v2370, %v2081
        %v2499 = vmax.f32 %v2371, %v2083
        %v2500 = vmax.f32 %v2372, %v2086
        %v2501 = vmax.f32 %v2373, %v2088
        %v2502 = vmax.f32 %v2374, %v2091
        %v2503 = vmax.f32 %v2375, %v2093
        %v2504 = vmax.f32 %v2376, %v2096
        %v2505 = vmax.f32 %v2377, %v2098
        %v2506 = vmax.f32 %v2378, %v2101
        %v2507 = vmax.f32 %v2379, %v2103
        %v2508 = vmax.f32 %v2380, %v2106
        %v2509 = vmax.f32 %v2381, %v2108
        %v2510 = vmax.f32 %v2382, %v2111
        %v2511 = vmax.f32 %v2383, %v2113
        %v2512 = vmax.f32 %v2384, %v2116
        %v2513 = vmax.f32 %v2385, %v2118
        %v2514 = vmax.f32 %v2386, %v2121
        %v2515 = vmax.f32 %v2387, %v2123
        %v2516 = vmax.f32 %v2388, %v2126
        %v2517 = vmax.f32 %v2389, %v2128
        %v2518 = vmax.f32 %v2390, %v2131
        %v2519 = vmax.f32 %v2391, %v2133
        %v2520 = vmax.f32 %v2392, %v2136
        %v2521 = vmax.f32 %v2393, %v2138
        %v2522 = vmax.f32 %v2394, %v2141
        %v2523 = vmax.f32 %v2395, %v2143
        %v2524 = vmax.f32 %v2396, %v2146
        %v2525 = vmax.f32 %v2397, %v2148
        %v2526 = vmax.f32 %v2398, %v2151
        %v2527 = vmax.f32 %v2399, %v2153
        %v2528 = vmax.f32 %v2400, %v2156
        %v2529 = vmax.f32 %v2401, %v2158
        %v2530 = vmax.f32 %v2402, %v2161
        %v2531 = vmax.f32 %v2403, %v2163
        %v2532 = vmax.f32 %v2404, %v2166
        %v2533 = vmax.f32 %v2405, %v2168
        %v2534 = vmax.f32 %v2406, %v2171
        %v2535 = vmax.f32 %v2407, %v2173
        %v2536 = vmax.f32 %v2408, %v2176
        %v2537 = vmax.f32 %v2409, %v2178
        %v2538 = vmax.f32 %v2410, %v2181
        %v2539 = vmax.f32 %v2411, %v2183
        %v2540 = vmax.f32 %v2412, %v2186
        %v2541 = vmax.f32 %v2413, %v2188
        %v2542 = vmax.f32 %v2414, %v2191
        %v2543 = vmax.f32 %v2415, %v2193
        %v2544 = vmax.f32 %v2416, %v2196
        %v2545 = vmax.f32 %v2417, %v2198
        %v2546 = vmax.f32 %v2418, %v2201
        %v2547 = vmax.f32 %v2419, %v2203
        %v2548 = vmax.f32 %v2420, %v2206
        %v2549 = vmax.f32 %v2421, %v2208
        %v2550 = vmax.f32 %v2422, %v2211
        %v2551 = vmax.f32 %v2423, %v2213
        %v2552 = vmax.f32 %v2424, %v2216
        %v2553 = vmax.f32 %v2425, %v2218
        %v2554 = vmax.f32 %v2426, %v2221
        %v2555 = vmax.f32 %v2427, %v2223
        %v2556 = vmax.f32 %v2428, %v2226
        %v2557 = vmax.f32 %v2429, %v2228
        %v2558 = vmax.f32 %v2430, %v2231
        %v2559 = vmax.f32 %v2431, %v2233
        %v2560 = vmax.f32 %v2432, %v2236
        %v2561 = vmax.f32 %v2433, %v2238
        %v2562 = vmax.f32 %v2434, %v2241
        %v2563 = vmax.f32 %v2435, %v2243
        %v2564 = vmax.f32 %v2436, %v2246
        %v2565 = vmax.f32 %v2437, %v2248
        %v2566 = vmax.f32 %v2438, %v2251
        %v2567 = vmax.f32 %v2439, %v2253
        %v2568 = vmax.f32 %v2440, %v2256
        %v2569 = vmax.f32 %v2441, %v2258
        %v2570 = vmax.f32 %v2442, %v2261
        %v2571 = vmax.f32 %v2443, %v2263
        %v2572 = vmax.f32 %v2444, %v2266
        %v2573 = vmax.f32 %v2445, %v2268
        %v2574 = vmax.f32 %v2446, %v2271
        %v2575 = vmax.f32 %v2447, %v2273
        %v2576 = vmax.f32 %v2448, %v2276
        %v2577 = vmax.f32 %v2449, %v2278
        %v2578 = vmax.f32 %v2450, %v2281
        %v2579 = vmax.f32 %v2451, %v2283
        %v2580 = vmax.f32 %v2452, %v2286
        %v2581 = vmax.f32 %v2453, %v2288
        %v2582 = vmax.f32 %v2454, %v2291
        %v2583 = vmax.f32 %v2455, %v2293
        %v2584 = vmax.f32 %v2456, %v2296
        %v2585 = vmax.f32 %v2457, %v2298
        %v2586 = vmax.f32 %v2458, %v2301
        %v2587 = vmax.f32 %v2459, %v2303
        %v2588 = vmax.f32 %v2460, %v2306
        %v2589 = vmax.f32 %v2461, %v2308
        %v2590 = vmax.f32 %v2462, %v2311
        %v2591 = vmax.f32 %v2463, %v2313
        %v2592 = vmax.f32 %v2464, %v2316
        %v2593 = vmax.f32 %v2465, %v2318
        %v2594 = vmax.f32 %v2466, %v2321
        %v2595 = vmax.f32 %v2467, %v2323
        %v2596 = vmax.f32 %v2468, %v2326
        %v2597 = vmax.f32 %v2469, %v2328
        %v2598 = vmax.f32 %v2470, %v2331
        %v2599 = vmax.f32 %v2471, %v2333
        %v2600 = vmax.f32 %v2472, %v2336
        %v2601 = vmax.f32 %v2473, %v2338
        %v2602 = vmax.f32 %v2474, %v2341
        %v2603 = vmax.f32 %v2475, %v2343
        %v2604 = vmax.f32 %v2476, %v2346
        %v2605 = vmax.f32 %v2477, %v2348
        %p2606 = scmp.eq.s32.totalorder %s22, 0
        // Predicated region
        $region45: #{tpu_custom_call.1} parent=39 // pred_check
          %p2607 = pneg %p2606
        $region46: #{tpu_custom_call.1} parent=39 // pred_check_branch
          %2609 = sbr.rel (%p2607) target = $region48
        $region47: #{tpu_custom_call.1} parent=39 // pred_region
          %2610 = vst [vmem:[#allocation2] sm:$0xff] %v2478
          %2611 = vst [vmem:[#allocation2 + $0x8] sm:$0xff] %v2479
          %2612 = vst [vmem:[#allocation2 + $0x10] sm:$0xff] %v2480
          %2613 = vst [vmem:[#allocation2 + $0x18] sm:$0xff] %v2481
          %2614 = vst [vmem:[#allocation2 + $0x20] sm:$0xff] %v2482
          %2615 = vst [vmem:[#allocation2 + $0x28] sm:$0xff] %v2483
          %2616 = vst [vmem:[#allocation2 + $0x30] sm:$0xff] %v2484
          %2617 = vst [vmem:[#allocation2 + $0x38] sm:$0xff] %v2485
          %2618 = vst [vmem:[#allocation2 + $0x40] sm:$0xff] %v2486
          %2619 = vst [vmem:[#allocation2 + $0x48] sm:$0xff] %v2487
          %2620 = vst [vmem:[#allocation2 + $0x50] sm:$0xff] %v2488
          %2621 = vst [vmem:[#allocation2 + $0x58] sm:$0xff] %v2489
          %2622 = vst [vmem:[#allocation2 + $0x60] sm:$0xff] %v2490
          %2623 = vst [vmem:[#allocation2 + $0x68] sm:$0xff] %v2491
          %2624 = vst [vmem:[#allocation2 + $0x70] sm:$0xff] %v2492
          %2625 = vst [vmem:[#allocation2 + $0x78] sm:$0xff] %v2493
          %2626 = vst [vmem:[#allocation2 + $0x80] sm:$0xff] %v2494
          %2627 = vst [vmem:[#allocation2 + $0x88] sm:$0xff] %v2495
          %2628 = vst [vmem:[#allocation2 + $0x90] sm:$0xff] %v2496
          %2629 = vst [vmem:[#allocation2 + $0x98] sm:$0xff] %v2497
          %2630 = vst [vmem:[#allocation2 + $0xa0] sm:$0xff] %v2498
          %2631 = vst [vmem:[#allocation2 + $0xa8] sm:$0xff] %v2499
          %2632 = vst [vmem:[#allocation2 + $0xb0] sm:$0xff] %v2500
          %2633 = vst [vmem:[#allocation2 + $0xb8] sm:$0xff] %v2501
          %2634 = vst [vmem:[#allocation2 + $0xc0] sm:$0xff] %v2502
          %2635 = vst [vmem:[#allocation2 + $0xc8] sm:$0xff] %v2503
          %2636 = vst [vmem:[#allocation2 + $0xd0] sm:$0xff] %v2504
          %2637 = vst [vmem:[#allocation2 + $0xd8] sm:$0xff] %v2505
          %2638 = vst [vmem:[#allocation2 + $0xe0] sm:$0xff] %v2506
          %2639 = vst [vmem:[#allocation2 + $0xe8] sm:$0xff] %v2507
          %2640 = vst [vmem:[#allocation2 + $0xf0] sm:$0xff] %v2508
          %2641 = vst [vmem:[#allocation2 + $0xf8] sm:$0xff] %v2509
          %2642 = vst [vmem:[#allocation2 + $0x100] sm:$0xff] %v2510
          %2643 = vst [vmem:[#allocation2 + $0x108] sm:$0xff] %v2511
          %2644 = vst [vmem:[#allocation2 + $0x110] sm:$0xff] %v2512
          %2645 = vst [vmem:[#allocation2 + $0x118] sm:$0xff] %v2513
          %2646 = vst [vmem:[#allocation2 + $0x120] sm:$0xff] %v2514
          %2647 = vst [vmem:[#allocation2 + $0x128] sm:$0xff] %v2515
          %2648 = vst [vmem:[#allocation2 + $0x130] sm:$0xff] %v2516
          %2649 = vst [vmem:[#allocation2 + $0x138] sm:$0xff] %v2517
          %2650 = vst [vmem:[#allocation2 + $0x140] sm:$0xff] %v2518
          %2651 = vst [vmem:[#allocation2 + $0x148] sm:$0xff] %v2519
          %2652 = vst [vmem:[#allocation2 + $0x150] sm:$0xff] %v2520
          %2653 = vst [vmem:[#allocation2 + $0x158] sm:$0xff] %v2521
          %2654 = vst [vmem:[#allocation2 + $0x160] sm:$0xff] %v2522
          %2655 = vst [vmem:[#allocation2 + $0x168] sm:$0xff] %v2523
          %2656 = vst [vmem:[#allocation2 + $0x170] sm:$0xff] %v2524
          %2657 = vst [vmem:[#allocation2 + $0x178] sm:$0xff] %v2525
          %2658 = vst [vmem:[#allocation2 + $0x180] sm:$0xff] %v2526
          %2659 = vst [vmem:[#allocation2 + $0x188] sm:$0xff] %v2527
          %2660 = vst [vmem:[#allocation2 + $0x190] sm:$0xff] %v2528
          %2661 = vst [vmem:[#allocation2 + $0x198] sm:$0xff] %v2529
          %2662 = vst [vmem:[#allocation2 + $0x1a0] sm:$0xff] %v2530
          %2663 = vst [vmem:[#allocation2 + $0x1a8] sm:$0xff] %v2531
          %2664 = vst [vmem:[#allocation2 + $0x1b0] sm:$0xff] %v2532
          %2665 = vst [vmem:[#allocation2 + $0x1b8] sm:$0xff] %v2533
          %2666 = vst [vmem:[#allocation2 + $0x1c0] sm:$0xff] %v2534
          %2667 = vst [vmem:[#allocation2 + $0x1c8] sm:$0xff] %v2535
          %2668 = vst [vmem:[#allocation2 + $0x1d0] sm:$0xff] %v2536
          %2669 = vst [vmem:[#allocation2 + $0x1d8] sm:$0xff] %v2537
          %2670 = vst [vmem:[#allocation2 + $0x1e0] sm:$0xff] %v2538
          %2671 = vst [vmem:[#allocation2 + $0x1e8] sm:$0xff] %v2539
          %2672 = vst [vmem:[#allocation2 + $0x1f0] sm:$0xff] %v2540
          %2673 = vst [vmem:[#allocation2 + $0x1f8] sm:$0xff] %v2541
          %2674 = vst [vmem:[#allocation2 + $0x200] sm:$0xff] %v2542
          %2675 = vst [vmem:[#allocation2 + $0x208] sm:$0xff] %v2543
          %2676 = vst [vmem:[#allocation2 + $0x210] sm:$0xff] %v2544
          %2677 = vst [vmem:[#allocation2 + $0x218] sm:$0xff] %v2545
          %2678 = vst [vmem:[#allocation2 + $0x220] sm:$0xff] %v2546
          %2679 = vst [vmem:[#allocation2 + $0x228] sm:$0xff] %v2547
          %2680 = vst [vmem:[#allocation2 + $0x230] sm:$0xff] %v2548
          %2681 = vst [vmem:[#allocation2 + $0x238] sm:$0xff] %v2549
          %2682 = vst [vmem:[#allocation2 + $0x240] sm:$0xff] %v2550
          %2683 = vst [vmem:[#allocation2 + $0x248] sm:$0xff] %v2551
          %2684 = vst [vmem:[#allocation2 + $0x250] sm:$0xff] %v2552
          %2685 = vst [vmem:[#allocation2 + $0x258] sm:$0xff] %v2553
          %2686 = vst [vmem:[#allocation2 + $0x260] sm:$0xff] %v2554
          %2687 = vst [vmem:[#allocation2 + $0x268] sm:$0xff] %v2555
          %2688 = vst [vmem:[#allocation2 + $0x270] sm:$0xff] %v2556
          %2689 = vst [vmem:[#allocation2 + $0x278] sm:$0xff] %v2557
          %2690 = vst [vmem:[#allocation2 + $0x280] sm:$0xff] %v2558
          %2691 = vst [vmem:[#allocation2 + $0x288] sm:$0xff] %v2559
          %2692 = vst [vmem:[#allocation2 + $0x290] sm:$0xff] %v2560
          %2693 = vst [vmem:[#allocation2 + $0x298] sm:$0xff] %v2561
          %2694 = vst [vmem:[#allocation2 + $0x2a0] sm:$0xff] %v2562
          %2695 = vst [vmem:[#allocation2 + $0x2a8] sm:$0xff] %v2563
          %2696 = vst [vmem:[#allocation2 + $0x2b0] sm:$0xff] %v2564
          %2697 = vst [vmem:[#allocation2 + $0x2b8] sm:$0xff] %v2565
          %2698 = vst [vmem:[#allocation2 + $0x2c0] sm:$0xff] %v2566
          %2699 = vst [vmem:[#allocation2 + $0x2c8] sm:$0xff] %v2567
          %2700 = vst [vmem:[#allocation2 + $0x2d0] sm:$0xff] %v2568
          %2701 = vst [vmem:[#allocation2 + $0x2d8] sm:$0xff] %v2569
          %2702 = vst [vmem:[#allocation2 + $0x2e0] sm:$0xff] %v2570
          %2703 = vst [vmem:[#allocation2 + $0x2e8] sm:$0xff] %v2571
          %2704 = vst [vmem:[#allocation2 + $0x2f0] sm:$0xff] %v2572
          %2705 = vst [vmem:[#allocation2 + $0x2f8] sm:$0xff] %v2573
          %2706 = vst [vmem:[#allocation2 + $0x300] sm:$0xff] %v2574
          %2707 = vst [vmem:[#allocation2 + $0x308] sm:$0xff] %v2575
          %2708 = vst [vmem:[#allocation2 + $0x310] sm:$0xff] %v2576
          %2709 = vst [vmem:[#allocation2 + $0x318] sm:$0xff] %v2577
          %2710 = vst [vmem:[#allocation2 + $0x320] sm:$0xff] %v2578
          %2711 = vst [vmem:[#allocation2 + $0x328] sm:$0xff] %v2579
          %2712 = vst [vmem:[#allocation2 + $0x330] sm:$0xff] %v2580
          %2713 = vst [vmem:[#allocation2 + $0x338] sm:$0xff] %v2581
          %2714 = vst [vmem:[#allocation2 + $0x340] sm:$0xff] %v2582
          %2715 = vst [vmem:[#allocation2 + $0x348] sm:$0xff] %v2583
          %2716 = vst [vmem:[#allocation2 + $0x350] sm:$0xff] %v2584
          %2717 = vst [vmem:[#allocation2 + $0x358] sm:$0xff] %v2585
          %2718 = vst [vmem:[#allocation2 + $0x360] sm:$0xff] %v2586
          %2719 = vst [vmem:[#allocation2 + $0x368] sm:$0xff] %v2587
          %2720 = vst [vmem:[#allocation2 + $0x370] sm:$0xff] %v2588
          %2721 = vst [vmem:[#allocation2 + $0x378] sm:$0xff] %v2589
          %2722 = vst [vmem:[#allocation2 + $0x380] sm:$0xff] %v2590
          %2723 = vst [vmem:[#allocation2 + $0x388] sm:$0xff] %v2591
          %2724 = vst [vmem:[#allocation2 + $0x390] sm:$0xff] %v2592
          %2725 = vst [vmem:[#allocation2 + $0x398] sm:$0xff] %v2593
          %2726 = vst [vmem:[#allocation2 + $0x3a0] sm:$0xff] %v2594
          %2727 = vst [vmem:[#allocation2 + $0x3a8] sm:$0xff] %v2595
          %2728 = vst [vmem:[#allocation2 + $0x3b0] sm:$0xff] %v2596
          %2729 = vst [vmem:[#allocation2 + $0x3b8] sm:$0xff] %v2597
          %2730 = vst [vmem:[#allocation2 + $0x3c0] sm:$0xff] %v2598
          %2731 = vst [vmem:[#allocation2 + $0x3c8] sm:$0xff] %v2599
          %2732 = vst [vmem:[#allocation2 + $0x3d0] sm:$0xff] %v2600
          %2733 = vst [vmem:[#allocation2 + $0x3d8] sm:$0xff] %v2601
          %2734 = vst [vmem:[#allocation2 + $0x3e0] sm:$0xff] %v2602
          %2735 = vst [vmem:[#allocation2 + $0x3e8] sm:$0xff] %v2603
          %2736 = vst [vmem:[#allocation2 + $0x3f0] sm:$0xff] %v2604
          %2737 = vst [vmem:[#allocation2 + $0x3f8] sm:$0xff] %v2605
        $region48: #{tpu_custom_call.1} parent=39 // pred_fallthru
          _
        %p2738 = scmp.gt.s32.totalorder %s22, 0
        // Predicated region
        $region49: #{tpu_custom_call.1} parent=39 // pred_check
          %p2739 = pneg %p2738
        $region50: #{tpu_custom_call.1} parent=39 // pred_check_branch
          %2741 = sbr.rel (%p2739) target = $region52
        $region51: #{tpu_custom_call.1} parent=39 // pred_region
          %v2742 = vld [vmem:[#allocation2] sm:$0xff]
          %v2743 = vld [vmem:[#allocation2 + $0x8] sm:$0xff]
          %v2744 = vld [vmem:[#allocation2 + $0x10] sm:$0xff]
          %v2745 = vld [vmem:[#allocation2 + $0x18] sm:$0xff]
          %v2746 = vld [vmem:[#allocation2 + $0x20] sm:$0xff]
          %v2747 = vld [vmem:[#allocation2 + $0x28] sm:$0xff]
          %v2748 = vld [vmem:[#allocation2 + $0x30] sm:$0xff]
          %v2749 = vld [vmem:[#allocation2 + $0x38] sm:$0xff]
          %v2750 = vld [vmem:[#allocation2 + $0x40] sm:$0xff]
          %v2751 = vld [vmem:[#allocation2 + $0x48] sm:$0xff]
          %v2752 = vld [vmem:[#allocation2 + $0x50] sm:$0xff]
          %v2753 = vld [vmem:[#allocation2 + $0x58] sm:$0xff]
          %v2754 = vld [vmem:[#allocation2 + $0x60] sm:$0xff]
          %v2755 = vld [vmem:[#allocation2 + $0x68] sm:$0xff]
          %v2756 = vld [vmem:[#allocation2 + $0x70] sm:$0xff]
          %v2757 = vld [vmem:[#allocation2 + $0x78] sm:$0xff]
          %v2758 = vld [vmem:[#allocation2 + $0x80] sm:$0xff]
          %v2759 = vld [vmem:[#allocation2 + $0x88] sm:$0xff]
          %v2760 = vld [vmem:[#allocation2 + $0x90] sm:$0xff]
          %v2761 = vld [vmem:[#allocation2 + $0x98] sm:$0xff]
          %v2762 = vld [vmem:[#allocation2 + $0xa0] sm:$0xff]
          %v2763 = vld [vmem:[#allocation2 + $0xa8] sm:$0xff]
          %v2764 = vld [vmem:[#allocation2 + $0xb0] sm:$0xff]
          %v2765 = vld [vmem:[#allocation2 + $0xb8] sm:$0xff]
          %v2766 = vld [vmem:[#allocation2 + $0xc0] sm:$0xff]
          %v2767 = vld [vmem:[#allocation2 + $0xc8] sm:$0xff]
          %v2768 = vld [vmem:[#allocation2 + $0xd0] sm:$0xff]
          %v2769 = vld [vmem:[#allocation2 + $0xd8] sm:$0xff]
          %v2770 = vld [vmem:[#allocation2 + $0xe0] sm:$0xff]
          %v2771 = vld [vmem:[#allocation2 + $0xe8] sm:$0xff]
          %v2772 = vld [vmem:[#allocation2 + $0xf0] sm:$0xff]
          %v2773 = vld [vmem:[#allocation2 + $0xf8] sm:$0xff]
          %v2774 = vld [vmem:[#allocation2 + $0x100] sm:$0xff]
          %v2775 = vld [vmem:[#allocation2 + $0x108] sm:$0xff]
          %v2776 = vld [vmem:[#allocation2 + $0x110] sm:$0xff]
          %v2777 = vld [vmem:[#allocation2 + $0x118] sm:$0xff]
          %v2778 = vld [vmem:[#allocation2 + $0x120] sm:$0xff]
          %v2779 = vld [vmem:[#allocation2 + $0x128] sm:$0xff]
          %v2780 = vld [vmem:[#allocation2 + $0x130] sm:$0xff]
          %v2781 = vld [vmem:[#allocation2 + $0x138] sm:$0xff]
          %v2782 = vld [vmem:[#allocation2 + $0x140] sm:$0xff]
          %v2783 = vld [vmem:[#allocation2 + $0x148] sm:$0xff]
          %v2784 = vld [vmem:[#allocation2 + $0x150] sm:$0xff]
          %v2785 = vld [vmem:[#allocation2 + $0x158] sm:$0xff]
          %v2786 = vld [vmem:[#allocation2 + $0x160] sm:$0xff]
          %v2787 = vld [vmem:[#allocation2 + $0x168] sm:$0xff]
          %v2788 = vld [vmem:[#allocation2 + $0x170] sm:$0xff]
          %v2789 = vld [vmem:[#allocation2 + $0x178] sm:$0xff]
          %v2790 = vld [vmem:[#allocation2 + $0x180] sm:$0xff]
          %v2791 = vld [vmem:[#allocation2 + $0x188] sm:$0xff]
          %v2792 = vld [vmem:[#allocation2 + $0x190] sm:$0xff]
          %v2793 = vld [vmem:[#allocation2 + $0x198] sm:$0xff]
          %v2794 = vld [vmem:[#allocation2 + $0x1a0] sm:$0xff]
          %v2795 = vld [vmem:[#allocation2 + $0x1a8] sm:$0xff]
          %v2796 = vld [vmem:[#allocation2 + $0x1b0] sm:$0xff]
          %v2797 = vld [vmem:[#allocation2 + $0x1b8] sm:$0xff]
          %v2798 = vld [vmem:[#allocation2 + $0x1c0] sm:$0xff]
          %v2799 = vld [vmem:[#allocation2 + $0x1c8] sm:$0xff]
          %v2800 = vld [vmem:[#allocation2 + $0x1d0] sm:$0xff]
          %v2801 = vld [vmem:[#allocation2 + $0x1d8] sm:$0xff]
          %v2802 = vld [vmem:[#allocation2 + $0x1e0] sm:$0xff]
          %v2803 = vld [vmem:[#allocation2 + $0x1e8] sm:$0xff]
          %v2804 = vld [vmem:[#allocation2 + $0x1f0] sm:$0xff]
          %v2805 = vld [vmem:[#allocation2 + $0x1f8] sm:$0xff]
          %v2806 = vld [vmem:[#allocation2 + $0x200] sm:$0xff]
          %v2807 = vld [vmem:[#allocation2 + $0x208] sm:$0xff]
          %v2808 = vld [vmem:[#allocation2 + $0x210] sm:$0xff]
          %v2809 = vld [vmem:[#allocation2 + $0x218] sm:$0xff]
          %v2810 = vld [vmem:[#allocation2 + $0x220] sm:$0xff]
          %v2811 = vld [vmem:[#allocation2 + $0x228] sm:$0xff]
          %v2812 = vld [vmem:[#allocation2 + $0x230] sm:$0xff]
          %v2813 = vld [vmem:[#allocation2 + $0x238] sm:$0xff]
          %v2814 = vld [vmem:[#allocation2 + $0x240] sm:$0xff]
          %v2815 = vld [vmem:[#allocation2 + $0x248] sm:$0xff]
          %v2816 = vld [vmem:[#allocation2 + $0x250] sm:$0xff]
          %v2817 = vld [vmem:[#allocation2 + $0x258] sm:$0xff]
          %v2818 = vld [vmem:[#allocation2 + $0x260] sm:$0xff]
          %v2819 = vld [vmem:[#allocation2 + $0x268] sm:$0xff]
          %v2820 = vld [vmem:[#allocation2 + $0x270] sm:$0xff]
          %v2821 = vld [vmem:[#allocation2 + $0x278] sm:$0xff]
          %v2822 = vld [vmem:[#allocation2 + $0x280] sm:$0xff]
          %v2823 = vld [vmem:[#allocation2 + $0x288] sm:$0xff]
          %v2824 = vld [vmem:[#allocation2 + $0x290] sm:$0xff]
          %v2825 = vld [vmem:[#allocation2 + $0x298] sm:$0xff]
          %v2826 = vld [vmem:[#allocation2 + $0x2a0] sm:$0xff]
          %v2827 = vld [vmem:[#allocation2 + $0x2a8] sm:$0xff]
          %v2828 = vld [vmem:[#allocation2 + $0x2b0] sm:$0xff]
          %v2829 = vld [vmem:[#allocation2 + $0x2b8] sm:$0xff]
          %v2830 = vld [vmem:[#allocation2 + $0x2c0] sm:$0xff]
          %v2831 = vld [vmem:[#allocation2 + $0x2c8] sm:$0xff]
          %v2832 = vld [vmem:[#allocation2 + $0x2d0] sm:$0xff]
          %v2833 = vld [vmem:[#allocation2 + $0x2d8] sm:$0xff]
          %v2834 = vld [vmem:[#allocation2 + $0x2e0] sm:$0xff]
          %v2835 = vld [vmem:[#allocation2 + $0x2e8] sm:$0xff]
          %v2836 = vld [vmem:[#allocation2 + $0x2f0] sm:$0xff]
          %v2837 = vld [vmem:[#allocation2 + $0x2f8] sm:$0xff]
          %v2838 = vld [vmem:[#allocation2 + $0x300] sm:$0xff]
          %v2839 = vld [vmem:[#allocation2 + $0x308] sm:$0xff]
          %v2840 = vld [vmem:[#allocation2 + $0x310] sm:$0xff]
          %v2841 = vld [vmem:[#allocation2 + $0x318] sm:$0xff]
          %v2842 = vld [vmem:[#allocation2 + $0x320] sm:$0xff]
          %v2843 = vld [vmem:[#allocation2 + $0x328] sm:$0xff]
          %v2844 = vld [vmem:[#allocation2 + $0x330] sm:$0xff]
          %v2845 = vld [vmem:[#allocation2 + $0x338] sm:$0xff]
          %v2846 = vld [vmem:[#allocation2 + $0x340] sm:$0xff]
          %v2847 = vld [vmem:[#allocation2 + $0x348] sm:$0xff]
          %v2848 = vld [vmem:[#allocation2 + $0x350] sm:$0xff]
          %v2849 = vld [vmem:[#allocation2 + $0x358] sm:$0xff]
          %v2850 = vld [vmem:[#allocation2 + $0x360] sm:$0xff]
          %v2851 = vld [vmem:[#allocation2 + $0x368] sm:$0xff]
          %v2852 = vld [vmem:[#allocation2 + $0x370] sm:$0xff]
          %v2853 = vld [vmem:[#allocation2 + $0x378] sm:$0xff]
          %v2854 = vld [vmem:[#allocation2 + $0x380] sm:$0xff]
          %v2855 = vld [vmem:[#allocation2 + $0x388] sm:$0xff]
          %v2856 = vld [vmem:[#allocation2 + $0x390] sm:$0xff]
          %v2857 = vld [vmem:[#allocation2 + $0x398] sm:$0xff]
          %v2858 = vld [vmem:[#allocation2 + $0x3a0] sm:$0xff]
          %v2859 = vld [vmem:[#allocation2 + $0x3a8] sm:$0xff]
          %v2860 = vld [vmem:[#allocation2 + $0x3b0] sm:$0xff]
          %v2861 = vld [vmem:[#allocation2 + $0x3b8] sm:$0xff]
          %v2862 = vld [vmem:[#allocation2 + $0x3c0] sm:$0xff]
          %v2863 = vld [vmem:[#allocation2 + $0x3c8] sm:$0xff]
          %v2864 = vld [vmem:[#allocation2 + $0x3d0] sm:$0xff]
          %v2865 = vld [vmem:[#allocation2 + $0x3d8] sm:$0xff]
          %v2866 = vld [vmem:[#allocation2 + $0x3e0] sm:$0xff]
          %v2867 = vld [vmem:[#allocation2 + $0x3e8] sm:$0xff]
          %v2868 = vld [vmem:[#allocation2 + $0x3f0] sm:$0xff]
          %v2869 = vld [vmem:[#allocation2 + $0x3f8] sm:$0xff]
          %v2870 = vmax.f32 %v2742, %v2478
          %v2871 = vmax.f32 %v2743, %v2479
          %v2872 = vmax.f32 %v2744, %v2480
          %v2873 = vmax.f32 %v2745, %v2481
          %v2874 = vmax.f32 %v2746, %v2482
          %v2875 = vmax.f32 %v2747, %v2483
          %v2876 = vmax.f32 %v2748, %v2484
          %v2877 = vmax.f32 %v2749, %v2485
          %v2878 = vmax.f32 %v2750, %v2486
          %v2879 = vmax.f32 %v2751, %v2487
          %v2880 = vmax.f32 %v2752, %v2488
          %v2881 = vmax.f32 %v2753, %v2489
          %v2882 = vmax.f32 %v2754, %v2490
          %v2883 = vmax.f32 %v2755, %v2491
          %v2884 = vmax.f32 %v2756, %v2492
          %v2885 = vmax.f32 %v2757, %v2493
          %v2886 = vmax.f32 %v2758, %v2494
          %v2887 = vmax.f32 %v2759, %v2495
          %v2888 = vmax.f32 %v2760, %v2496
          %v2889 = vmax.f32 %v2761, %v2497
          %v2890 = vmax.f32 %v2762, %v2498
          %v2891 = vmax.f32 %v2763, %v2499
          %v2892 = vmax.f32 %v2764, %v2500
          %v2893 = vmax.f32 %v2765, %v2501
          %v2894 = vmax.f32 %v2766, %v2502
          %v2895 = vmax.f32 %v2767, %v2503
          %v2896 = vmax.f32 %v2768, %v2504
          %v2897 = vmax.f32 %v2769, %v2505
          %v2898 = vmax.f32 %v2770, %v2506
          %v2899 = vmax.f32 %v2771, %v2507
          %v2900 = vmax.f32 %v2772, %v2508
          %v2901 = vmax.f32 %v2773, %v2509
          %v2902 = vmax.f32 %v2774, %v2510
          %v2903 = vmax.f32 %v2775, %v2511
          %v2904 = vmax.f32 %v2776, %v2512
          %v2905 = vmax.f32 %v2777, %v2513
          %v2906 = vmax.f32 %v2778, %v2514
          %v2907 = vmax.f32 %v2779, %v2515
          %v2908 = vmax.f32 %v2780, %v2516
          %v2909 = vmax.f32 %v2781, %v2517
          %v2910 = vmax.f32 %v2782, %v2518
          %v2911 = vmax.f32 %v2783, %v2519
          %v2912 = vmax.f32 %v2784, %v2520
          %v2913 = vmax.f32 %v2785, %v2521
          %v2914 = vmax.f32 %v2786, %v2522
          %v2915 = vmax.f32 %v2787, %v2523
          %v2916 = vmax.f32 %v2788, %v2524
          %v2917 = vmax.f32 %v2789, %v2525
          %v2918 = vmax.f32 %v2790, %v2526
          %v2919 = vmax.f32 %v2791, %v2527
          %v2920 = vmax.f32 %v2792, %v2528
          %v2921 = vmax.f32 %v2793, %v2529
          %v2922 = vmax.f32 %v2794, %v2530
          %v2923 = vmax.f32 %v2795, %v2531
          %v2924 = vmax.f32 %v2796, %v2532
          %v2925 = vmax.f32 %v2797, %v2533
          %v2926 = vmax.f32 %v2798, %v2534
          %v2927 = vmax.f32 %v2799, %v2535
          %v2928 = vmax.f32 %v2800, %v2536
          %v2929 = vmax.f32 %v2801, %v2537
          %v2930 = vmax.f32 %v2802, %v2538
          %v2931 = vmax.f32 %v2803, %v2539
          %v2932 = vmax.f32 %v2804, %v2540
          %v2933 = vmax.f32 %v2805, %v2541
          %v2934 = vmax.f32 %v2806, %v2542
          %v2935 = vmax.f32 %v2807, %v2543
          %v2936 = vmax.f32 %v2808, %v2544
          %v2937 = vmax.f32 %v2809, %v2545
          %v2938 = vmax.f32 %v2810, %v2546
          %v2939 = vmax.f32 %v2811, %v2547
          %v2940 = vmax.f32 %v2812, %v2548
          %v2941 = vmax.f32 %v2813, %v2549
          %v2942 = vmax.f32 %v2814, %v2550
          %v2943 = vmax.f32 %v2815, %v2551
          %v2944 = vmax.f32 %v2816, %v2552
          %v2945 = vmax.f32 %v2817, %v2553
          %v2946 = vmax.f32 %v2818, %v2554
          %v2947 = vmax.f32 %v2819, %v2555
          %v2948 = vmax.f32 %v2820, %v2556
          %v2949 = vmax.f32 %v2821, %v2557
          %v2950 = vmax.f32 %v2822, %v2558
          %v2951 = vmax.f32 %v2823, %v2559
          %v2952 = vmax.f32 %v2824, %v2560
          %v2953 = vmax.f32 %v2825, %v2561
          %v2954 = vmax.f32 %v2826, %v2562
          %v2955 = vmax.f32 %v2827, %v2563
          %v2956 = vmax.f32 %v2828, %v2564
          %v2957 = vmax.f32 %v2829, %v2565
          %v2958 = vmax.f32 %v2830, %v2566
          %v2959 = vmax.f32 %v2831, %v2567
          %v2960 = vmax.f32 %v2832, %v2568
          %v2961 = vmax.f32 %v2833, %v2569
          %v2962 = vmax.f32 %v2834, %v2570
          %v2963 = vmax.f32 %v2835, %v2571
          %v2964 = vmax.f32 %v2836, %v2572
          %v2965 = vmax.f32 %v2837, %v2573
          %v2966 = vmax.f32 %v2838, %v2574
          %v2967 = vmax.f32 %v2839, %v2575
          %v2968 = vmax.f32 %v2840, %v2576
          %v2969 = vmax.f32 %v2841, %v2577
          %v2970 = vmax.f32 %v2842, %v2578
          %v2971 = vmax.f32 %v2843, %v2579
          %v2972 = vmax.f32 %v2844, %v2580
          %v2973 = vmax.f32 %v2845, %v2581
          %v2974 = vmax.f32 %v2846, %v2582
          %v2975 = vmax.f32 %v2847, %v2583
          %v2976 = vmax.f32 %v2848, %v2584
          %v2977 = vmax.f32 %v2849, %v2585
          %v2978 = vmax.f32 %v2850, %v2586
          %v2979 = vmax.f32 %v2851, %v2587
          %v2980 = vmax.f32 %v2852, %v2588
          %v2981 = vmax.f32 %v2853, %v2589
          %v2982 = vmax.f32 %v2854, %v2590
          %v2983 = vmax.f32 %v2855, %v2591
          %v2984 = vmax.f32 %v2856, %v2592
          %v2985 = vmax.f32 %v2857, %v2593
          %v2986 = vmax.f32 %v2858, %v2594
          %v2987 = vmax.f32 %v2859, %v2595
          %v2988 = vmax.f32 %v2860, %v2596
          %v2989 = vmax.f32 %v2861, %v2597
          %v2990 = vmax.f32 %v2862, %v2598
          %v2991 = vmax.f32 %v2863, %v2599
          %v2992 = vmax.f32 %v2864, %v2600
          %v2993 = vmax.f32 %v2865, %v2601
          %v2994 = vmax.f32 %v2866, %v2602
          %v2995 = vmax.f32 %v2867, %v2603
          %v2996 = vmax.f32 %v2868, %v2604
          %v2997 = vmax.f32 %v2869, %v2605
          %2998 = vst [vmem:[#allocation2] sm:$0xff] %v2870
          %2999 = vst [vmem:[#allocation2 + $0x8] sm:$0xff] %v2871
          %3000 = vst [vmem:[#allocation2 + $0x10] sm:$0xff] %v2872
          %3001 = vst [vmem:[#allocation2 + $0x18] sm:$0xff] %v2873
          %3002 = vst [vmem:[#allocation2 + $0x20] sm:$0xff] %v2874
          %3003 = vst [vmem:[#allocation2 + $0x28] sm:$0xff] %v2875
          %3004 = vst [vmem:[#allocation2 + $0x30] sm:$0xff] %v2876
          %3005 = vst [vmem:[#allocation2 + $0x38] sm:$0xff] %v2877
          %3006 = vst [vmem:[#allocation2 + $0x40] sm:$0xff] %v2878
          %3007 = vst [vmem:[#allocation2 + $0x48] sm:$0xff] %v2879
          %3008 = vst [vmem:[#allocation2 + $0x50] sm:$0xff] %v2880
          %3009 = vst [vmem:[#allocation2 + $0x58] sm:$0xff] %v2881
          %3010 = vst [vmem:[#allocation2 + $0x60] sm:$0xff] %v2882
          %3011 = vst [vmem:[#allocation2 + $0x68] sm:$0xff] %v2883
          %3012 = vst [vmem:[#allocation2 + $0x70] sm:$0xff] %v2884
          %3013 = vst [vmem:[#allocation2 + $0x78] sm:$0xff] %v2885
          %3014 = vst [vmem:[#allocation2 + $0x80] sm:$0xff] %v2886
          %3015 = vst [vmem:[#allocation2 + $0x88] sm:$0xff] %v2887
          %3016 = vst [vmem:[#allocation2 + $0x90] sm:$0xff] %v2888
          %3017 = vst [vmem:[#allocation2 + $0x98] sm:$0xff] %v2889
          %3018 = vst [vmem:[#allocation2 + $0xa0] sm:$0xff] %v2890
          %3019 = vst [vmem:[#allocation2 + $0xa8] sm:$0xff] %v2891
          %3020 = vst [vmem:[#allocation2 + $0xb0] sm:$0xff] %v2892
          %3021 = vst [vmem:[#allocation2 + $0xb8] sm:$0xff] %v2893
          %3022 = vst [vmem:[#allocation2 + $0xc0] sm:$0xff] %v2894
          %3023 = vst [vmem:[#allocation2 + $0xc8] sm:$0xff] %v2895
          %3024 = vst [vmem:[#allocation2 + $0xd0] sm:$0xff] %v2896
          %3025 = vst [vmem:[#allocation2 + $0xd8] sm:$0xff] %v2897
          %3026 = vst [vmem:[#allocation2 + $0xe0] sm:$0xff] %v2898
          %3027 = vst [vmem:[#allocation2 + $0xe8] sm:$0xff] %v2899
          %3028 = vst [vmem:[#allocation2 + $0xf0] sm:$0xff] %v2900
          %3029 = vst [vmem:[#allocation2 + $0xf8] sm:$0xff] %v2901
          %3030 = vst [vmem:[#allocation2 + $0x100] sm:$0xff] %v2902
          %3031 = vst [vmem:[#allocation2 + $0x108] sm:$0xff] %v2903
          %3032 = vst [vmem:[#allocation2 + $0x110] sm:$0xff] %v2904
          %3033 = vst [vmem:[#allocation2 + $0x118] sm:$0xff] %v2905
          %3034 = vst [vmem:[#allocation2 + $0x120] sm:$0xff] %v2906
          %3035 = vst [vmem:[#allocation2 + $0x128] sm:$0xff] %v2907
          %3036 = vst [vmem:[#allocation2 + $0x130] sm:$0xff] %v2908
          %3037 = vst [vmem:[#allocation2 + $0x138] sm:$0xff] %v2909
          %3038 = vst [vmem:[#allocation2 + $0x140] sm:$0xff] %v2910
          %3039 = vst [vmem:[#allocation2 + $0x148] sm:$0xff] %v2911
          %3040 = vst [vmem:[#allocation2 + $0x150] sm:$0xff] %v2912
          %3041 = vst [vmem:[#allocation2 + $0x158] sm:$0xff] %v2913
          %3042 = vst [vmem:[#allocation2 + $0x160] sm:$0xff] %v2914
          %3043 = vst [vmem:[#allocation2 + $0x168] sm:$0xff] %v2915
          %3044 = vst [vmem:[#allocation2 + $0x170] sm:$0xff] %v2916
          %3045 = vst [vmem:[#allocation2 + $0x178] sm:$0xff] %v2917
          %3046 = vst [vmem:[#allocation2 + $0x180] sm:$0xff] %v2918
          %3047 = vst [vmem:[#allocation2 + $0x188] sm:$0xff] %v2919
          %3048 = vst [vmem:[#allocation2 + $0x190] sm:$0xff] %v2920
          %3049 = vst [vmem:[#allocation2 + $0x198] sm:$0xff] %v2921
          %3050 = vst [vmem:[#allocation2 + $0x1a0] sm:$0xff] %v2922
          %3051 = vst [vmem:[#allocation2 + $0x1a8] sm:$0xff] %v2923
          %3052 = vst [vmem:[#allocation2 + $0x1b0] sm:$0xff] %v2924
          %3053 = vst [vmem:[#allocation2 + $0x1b8] sm:$0xff] %v2925
          %3054 = vst [vmem:[#allocation2 + $0x1c0] sm:$0xff] %v2926
          %3055 = vst [vmem:[#allocation2 + $0x1c8] sm:$0xff] %v2927
          %3056 = vst [vmem:[#allocation2 + $0x1d0] sm:$0xff] %v2928
          %3057 = vst [vmem:[#allocation2 + $0x1d8] sm:$0xff] %v2929
          %3058 = vst [vmem:[#allocation2 + $0x1e0] sm:$0xff] %v2930
          %3059 = vst [vmem:[#allocation2 + $0x1e8] sm:$0xff] %v2931
          %3060 = vst [vmem:[#allocation2 + $0x1f0] sm:$0xff] %v2932
          %3061 = vst [vmem:[#allocation2 + $0x1f8] sm:$0xff] %v2933
          %3062 = vst [vmem:[#allocation2 + $0x200] sm:$0xff] %v2934
          %3063 = vst [vmem:[#allocation2 + $0x208] sm:$0xff] %v2935
          %3064 = vst [vmem:[#allocation2 + $0x210] sm:$0xff] %v2936
          %3065 = vst [vmem:[#allocation2 + $0x218] sm:$0xff] %v2937
          %3066 = vst [vmem:[#allocation2 + $0x220] sm:$0xff] %v2938
          %3067 = vst [vmem:[#allocation2 + $0x228] sm:$0xff] %v2939
          %3068 = vst [vmem:[#allocation2 + $0x230] sm:$0xff] %v2940
          %3069 = vst [vmem:[#allocation2 + $0x238] sm:$0xff] %v2941
          %3070 = vst [vmem:[#allocation2 + $0x240] sm:$0xff] %v2942
          %3071 = vst [vmem:[#allocation2 + $0x248] sm:$0xff] %v2943
          %3072 = vst [vmem:[#allocation2 + $0x250] sm:$0xff] %v2944
          %3073 = vst [vmem:[#allocation2 + $0x258] sm:$0xff] %v2945
          %3074 = vst [vmem:[#allocation2 + $0x260] sm:$0xff] %v2946
          %3075 = vst [vmem:[#allocation2 + $0x268] sm:$0xff] %v2947
          %3076 = vst [vmem:[#allocation2 + $0x270] sm:$0xff] %v2948
          %3077 = vst [vmem:[#allocation2 + $0x278] sm:$0xff] %v2949
          %3078 = vst [vmem:[#allocation2 + $0x280] sm:$0xff] %v2950
          %3079 = vst [vmem:[#allocation2 + $0x288] sm:$0xff] %v2951
          %3080 = vst [vmem:[#allocation2 + $0x290] sm:$0xff] %v2952
          %3081 = vst [vmem:[#allocation2 + $0x298] sm:$0xff] %v2953
          %3082 = vst [vmem:[#allocation2 + $0x2a0] sm:$0xff] %v2954
          %3083 = vst [vmem:[#allocation2 + $0x2a8] sm:$0xff] %v2955
          %3084 = vst [vmem:[#allocation2 + $0x2b0] sm:$0xff] %v2956
          %3085 = vst [vmem:[#allocation2 + $0x2b8] sm:$0xff] %v2957
          %3086 = vst [vmem:[#allocation2 + $0x2c0] sm:$0xff] %v2958
          %3087 = vst [vmem:[#allocation2 + $0x2c8] sm:$0xff] %v2959
          %3088 = vst [vmem:[#allocation2 + $0x2d0] sm:$0xff] %v2960
          %3089 = vst [vmem:[#allocation2 + $0x2d8] sm:$0xff] %v2961
          %3090 = vst [vmem:[#allocation2 + $0x2e0] sm:$0xff] %v2962
          %3091 = vst [vmem:[#allocation2 + $0x2e8] sm:$0xff] %v2963
          %3092 = vst [vmem:[#allocation2 + $0x2f0] sm:$0xff] %v2964
          %3093 = vst [vmem:[#allocation2 + $0x2f8] sm:$0xff] %v2965
          %3094 = vst [vmem:[#allocation2 + $0x300] sm:$0xff] %v2966
          %3095 = vst [vmem:[#allocation2 + $0x308] sm:$0xff] %v2967
          %3096 = vst [vmem:[#allocation2 + $0x310] sm:$0xff] %v2968
          %3097 = vst [vmem:[#allocation2 + $0x318] sm:$0xff] %v2969
          %3098 = vst [vmem:[#allocation2 + $0x320] sm:$0xff] %v2970
          %3099 = vst [vmem:[#allocation2 + $0x328] sm:$0xff] %v2971
          %3100 = vst [vmem:[#allocation2 + $0x330] sm:$0xff] %v2972
          %3101 = vst [vmem:[#allocation2 + $0x338] sm:$0xff] %v2973
          %3102 = vst [vmem:[#allocation2 + $0x340] sm:$0xff] %v2974
          %3103 = vst [vmem:[#allocation2 + $0x348] sm:$0xff] %v2975
          %3104 = vst [vmem:[#allocation2 + $0x350] sm:$0xff] %v2976
          %3105 = vst [vmem:[#allocation2 + $0x358] sm:$0xff] %v2977
          %3106 = vst [vmem:[#allocation2 + $0x360] sm:$0xff] %v2978
          %3107 = vst [vmem:[#allocation2 + $0x368] sm:$0xff] %v2979
          %3108 = vst [vmem:[#allocation2 + $0x370] sm:$0xff] %v2980
          %3109 = vst [vmem:[#allocation2 + $0x378] sm:$0xff] %v2981
          %3110 = vst [vmem:[#allocation2 + $0x380] sm:$0xff] %v2982
          %3111 = vst [vmem:[#allocation2 + $0x388] sm:$0xff] %v2983
          %3112 = vst [vmem:[#allocation2 + $0x390] sm:$0xff] %v2984
          %3113 = vst [vmem:[#allocation2 + $0x398] sm:$0xff] %v2985
          %3114 = vst [vmem:[#allocation2 + $0x3a0] sm:$0xff] %v2986
          %3115 = vst [vmem:[#allocation2 + $0x3a8] sm:$0xff] %v2987
          %3116 = vst [vmem:[#allocation2 + $0x3b0] sm:$0xff] %v2988
          %3117 = vst [vmem:[#allocation2 + $0x3b8] sm:$0xff] %v2989
          %3118 = vst [vmem:[#allocation2 + $0x3c0] sm:$0xff] %v2990
          %3119 = vst [vmem:[#allocation2 + $0x3c8] sm:$0xff] %v2991
          %3120 = vst [vmem:[#allocation2 + $0x3d0] sm:$0xff] %v2992
          %3121 = vst [vmem:[#allocation2 + $0x3d8] sm:$0xff] %v2993
          %3122 = vst [vmem:[#allocation2 + $0x3e0] sm:$0xff] %v2994
          %3123 = vst [vmem:[#allocation2 + $0x3e8] sm:$0xff] %v2995
          %3124 = vst [vmem:[#allocation2 + $0x3f0] sm:$0xff] %v2996
          %3125 = vst [vmem:[#allocation2 + $0x3f8] sm:$0xff] %v2997
        $region52: #{tpu_custom_call.1} parent=39 // pred_fallthru
          _
        // Predicated region
        $region53: #{tpu_custom_call.1} parent=39 // pred_check
          %p3126 = pneg %p2606
        $region54: #{tpu_custom_call.1} parent=39 // pred_check_branch
          %3128 = sbr.rel (%p3126) target = $region56
        $region55: #{tpu_custom_call.1} parent=39 // pred_region
          %v3129 = vld [vmem:[#allocation2] sm:$0xff]
          %v3130 = vld [vmem:[#allocation2 + $0x8] sm:$0xff]
          %v3131 = vld [vmem:[#allocation2 + $0x10] sm:$0xff]
          %v3132 = vld [vmem:[#allocation2 + $0x18] sm:$0xff]
          %v3133 = vld [vmem:[#allocation2 + $0x20] sm:$0xff]
          %v3134 = vld [vmem:[#allocation2 + $0x28] sm:$0xff]
          %v3135 = vld [vmem:[#allocation2 + $0x30] sm:$0xff]
          %v3136 = vld [vmem:[#allocation2 + $0x38] sm:$0xff]
          %v3137 = vld [vmem:[#allocation2 + $0x40] sm:$0xff]
          %v3138 = vld [vmem:[#allocation2 + $0x48] sm:$0xff]
          %v3139 = vld [vmem:[#allocation2 + $0x50] sm:$0xff]
          %v3140 = vld [vmem:[#allocation2 + $0x58] sm:$0xff]
          %v3141 = vld [vmem:[#allocation2 + $0x60] sm:$0xff]
          %v3142 = vld [vmem:[#allocation2 + $0x68] sm:$0xff]
          %v3143 = vld [vmem:[#allocation2 + $0x70] sm:$0xff]
          %v3144 = vld [vmem:[#allocation2 + $0x78] sm:$0xff]
          %v3145 = vld [vmem:[#allocation2 + $0x80] sm:$0xff]
          %v3146 = vld [vmem:[#allocation2 + $0x88] sm:$0xff]
          %v3147 = vld [vmem:[#allocation2 + $0x90] sm:$0xff]
          %v3148 = vld [vmem:[#allocation2 + $0x98] sm:$0xff]
          %v3149 = vld [vmem:[#allocation2 + $0xa0] sm:$0xff]
          %v3150 = vld [vmem:[#allocation2 + $0xa8] sm:$0xff]
          %v3151 = vld [vmem:[#allocation2 + $0xb0] sm:$0xff]
          %v3152 = vld [vmem:[#allocation2 + $0xb8] sm:$0xff]
          %v3153 = vld [vmem:[#allocation2 + $0xc0] sm:$0xff]
          %v3154 = vld [vmem:[#allocation2 + $0xc8] sm:$0xff]
          %v3155 = vld [vmem:[#allocation2 + $0xd0] sm:$0xff]
          %v3156 = vld [vmem:[#allocation2 + $0xd8] sm:$0xff]
          %v3157 = vld [vmem:[#allocation2 + $0xe0] sm:$0xff]
          %v3158 = vld [vmem:[#allocation2 + $0xe8] sm:$0xff]
          %v3159 = vld [vmem:[#allocation2 + $0xf0] sm:$0xff]
          %v3160 = vld [vmem:[#allocation2 + $0xf8] sm:$0xff]
          %v3161 = vld [vmem:[#allocation2 + $0x100] sm:$0xff]
          %v3162 = vld [vmem:[#allocation2 + $0x108] sm:$0xff]
          %v3163 = vld [vmem:[#allocation2 + $0x110] sm:$0xff]
          %v3164 = vld [vmem:[#allocation2 + $0x118] sm:$0xff]
          %v3165 = vld [vmem:[#allocation2 + $0x120] sm:$0xff]
          %v3166 = vld [vmem:[#allocation2 + $0x128] sm:$0xff]
          %v3167 = vld [vmem:[#allocation2 + $0x130] sm:$0xff]
          %v3168 = vld [vmem:[#allocation2 + $0x138] sm:$0xff]
          %v3169 = vld [vmem:[#allocation2 + $0x140] sm:$0xff]
          %v3170 = vld [vmem:[#allocation2 + $0x148] sm:$0xff]
          %v3171 = vld [vmem:[#allocation2 + $0x150] sm:$0xff]
          %v3172 = vld [vmem:[#allocation2 + $0x158] sm:$0xff]
          %v3173 = vld [vmem:[#allocation2 + $0x160] sm:$0xff]
          %v3174 = vld [vmem:[#allocation2 + $0x168] sm:$0xff]
          %v3175 = vld [vmem:[#allocation2 + $0x170] sm:$0xff]
          %v3176 = vld [vmem:[#allocation2 + $0x178] sm:$0xff]
          %v3177 = vld [vmem:[#allocation2 + $0x180] sm:$0xff]
          %v3178 = vld [vmem:[#allocation2 + $0x188] sm:$0xff]
          %v3179 = vld [vmem:[#allocation2 + $0x190] sm:$0xff]
          %v3180 = vld [vmem:[#allocation2 + $0x198] sm:$0xff]
          %v3181 = vld [vmem:[#allocation2 + $0x1a0] sm:$0xff]
          %v3182 = vld [vmem:[#allocation2 + $0x1a8] sm:$0xff]
          %v3183 = vld [vmem:[#allocation2 + $0x1b0] sm:$0xff]
          %v3184 = vld [vmem:[#allocation2 + $0x1b8] sm:$0xff]
          %v3185 = vld [vmem:[#allocation2 + $0x1c0] sm:$0xff]
          %v3186 = vld [vmem:[#allocation2 + $0x1c8] sm:$0xff]
          %v3187 = vld [vmem:[#allocation2 + $0x1d0] sm:$0xff]
          %v3188 = vld [vmem:[#allocation2 + $0x1d8] sm:$0xff]
          %v3189 = vld [vmem:[#allocation2 + $0x1e0] sm:$0xff]
          %v3190 = vld [vmem:[#allocation2 + $0x1e8] sm:$0xff]
          %v3191 = vld [vmem:[#allocation2 + $0x1f0] sm:$0xff]
          %v3192 = vld [vmem:[#allocation2 + $0x1f8] sm:$0xff]
          %v3193 = vld [vmem:[#allocation2 + $0x200] sm:$0xff]
          %v3194 = vld [vmem:[#allocation2 + $0x208] sm:$0xff]
          %v3195 = vld [vmem:[#allocation2 + $0x210] sm:$0xff]
          %v3196 = vld [vmem:[#allocation2 + $0x218] sm:$0xff]
          %v3197 = vld [vmem:[#allocation2 + $0x220] sm:$0xff]
          %v3198 = vld [vmem:[#allocation2 + $0x228] sm:$0xff]
          %v3199 = vld [vmem:[#allocation2 + $0x230] sm:$0xff]
          %v3200 = vld [vmem:[#allocation2 + $0x238] sm:$0xff]
          %v3201 = vld [vmem:[#allocation2 + $0x240] sm:$0xff]
          %v3202 = vld [vmem:[#allocation2 + $0x248] sm:$0xff]
          %v3203 = vld [vmem:[#allocation2 + $0x250] sm:$0xff]
          %v3204 = vld [vmem:[#allocation2 + $0x258] sm:$0xff]
          %v3205 = vld [vmem:[#allocation2 + $0x260] sm:$0xff]
          %v3206 = vld [vmem:[#allocation2 + $0x268] sm:$0xff]
          %v3207 = vld [vmem:[#allocation2 + $0x270] sm:$0xff]
          %v3208 = vld [vmem:[#allocation2 + $0x278] sm:$0xff]
          %v3209 = vld [vmem:[#allocation2 + $0x280] sm:$0xff]
          %v3210 = vld [vmem:[#allocation2 + $0x288] sm:$0xff]
          %v3211 = vld [vmem:[#allocation2 + $0x290] sm:$0xff]
          %v3212 = vld [vmem:[#allocation2 + $0x298] sm:$0xff]
          %v3213 = vld [vmem:[#allocation2 + $0x2a0] sm:$0xff]
          %v3214 = vld [vmem:[#allocation2 + $0x2a8] sm:$0xff]
          %v3215 = vld [vmem:[#allocation2 + $0x2b0] sm:$0xff]
          %v3216 = vld [vmem:[#allocation2 + $0x2b8] sm:$0xff]
          %v3217 = vld [vmem:[#allocation2 + $0x2c0] sm:$0xff]
          %v3218 = vld [vmem:[#allocation2 + $0x2c8] sm:$0xff]
          %v3219 = vld [vmem:[#allocation2 + $0x2d0] sm:$0xff]
          %v3220 = vld [vmem:[#allocation2 + $0x2d8] sm:$0xff]
          %v3221 = vld [vmem:[#allocation2 + $0x2e0] sm:$0xff]
          %v3222 = vld [vmem:[#allocation2 + $0x2e8] sm:$0xff]
          %v3223 = vld [vmem:[#allocation2 + $0x2f0] sm:$0xff]
          %v3224 = vld [vmem:[#allocation2 + $0x2f8] sm:$0xff]
          %v3225 = vld [vmem:[#allocation2 + $0x300] sm:$0xff]
          %v3226 = vld [vmem:[#allocation2 + $0x308] sm:$0xff]
          %v3227 = vld [vmem:[#allocation2 + $0x310] sm:$0xff]
          %v3228 = vld [vmem:[#allocation2 + $0x318] sm:$0xff]
          %v3229 = vld [vmem:[#allocation2 + $0x320] sm:$0xff]
          %v3230 = vld [vmem:[#allocation2 + $0x328] sm:$0xff]
          %v3231 = vld [vmem:[#allocation2 + $0x330] sm:$0xff]
          %v3232 = vld [vmem:[#allocation2 + $0x338] sm:$0xff]
          %v3233 = vld [vmem:[#allocation2 + $0x340] sm:$0xff]
          %v3234 = vld [vmem:[#allocation2 + $0x348] sm:$0xff]
          %v3235 = vld [vmem:[#allocation2 + $0x350] sm:$0xff]
          %v3236 = vld [vmem:[#allocation2 + $0x358] sm:$0xff]
          %v3237 = vld [vmem:[#allocation2 + $0x360] sm:$0xff]
          %v3238 = vld [vmem:[#allocation2 + $0x368] sm:$0xff]
          %v3239 = vld [vmem:[#allocation2 + $0x370] sm:$0xff]
          %v3240 = vld [vmem:[#allocation2 + $0x378] sm:$0xff]
          %v3241 = vld [vmem:[#allocation2 + $0x380] sm:$0xff]
          %v3242 = vld [vmem:[#allocation2 + $0x388] sm:$0xff]
          %v3243 = vld [vmem:[#allocation2 + $0x390] sm:$0xff]
          %v3244 = vld [vmem:[#allocation2 + $0x398] sm:$0xff]
          %v3245 = vld [vmem:[#allocation2 + $0x3a0] sm:$0xff]
          %v3246 = vld [vmem:[#allocation2 + $0x3a8] sm:$0xff]
          %v3247 = vld [vmem:[#allocation2 + $0x3b0] sm:$0xff]
          %v3248 = vld [vmem:[#allocation2 + $0x3b8] sm:$0xff]
          %v3249 = vld [vmem:[#allocation2 + $0x3c0] sm:$0xff]
          %v3250 = vld [vmem:[#allocation2 + $0x3c8] sm:$0xff]
          %v3251 = vld [vmem:[#allocation2 + $0x3d0] sm:$0xff]
          %v3252 = vld [vmem:[#allocation2 + $0x3d8] sm:$0xff]
          %v3253 = vld [vmem:[#allocation2 + $0x3e0] sm:$0xff]
          %v3254 = vld [vmem:[#allocation2 + $0x3e8] sm:$0xff]
          %v3255 = vld [vmem:[#allocation2 + $0x3f0] sm:$0xff]
          %v3256 = vld [vmem:[#allocation2 + $0x3f8] sm:$0xff]
          %3257 = vmax.xlane.f32.xlu0 %v3129
          %v3258 = vpop.xlane.xlu0 %3257
          %3259 = vmax.xlane.f32.xlu0 %v3130
          %v3260 = vpop.xlane.xlu0 %3259
          %3261 = vmax.xlane.f32.xlu0 %v3131
          %v3262 = vpop.xlane.xlu0 %3261
          %3263 = vmax.xlane.f32.xlu0 %v3132
          %v3264 = vpop.xlane.xlu0 %3263
          %3265 = vmax.xlane.f32.xlu0 %v3133
          %v3266 = vpop.xlane.xlu0 %3265
          %3267 = vmax.xlane.f32.xlu0 %v3134
          %v3268 = vpop.xlane.xlu0 %3267
          %3269 = vmax.xlane.f32.xlu0 %v3135
          %v3270 = vpop.xlane.xlu0 %3269
          %3271 = vmax.xlane.f32.xlu0 %v3136
          %v3272 = vpop.xlane.xlu0 %3271
          %3273 = vmax.xlane.f32.xlu0 %v3137
          %v3274 = vpop.xlane.xlu0 %3273
          %3275 = vmax.xlane.f32.xlu0 %v3138
          %v3276 = vpop.xlane.xlu0 %3275
          %3277 = vmax.xlane.f32.xlu0 %v3139
          %v3278 = vpop.xlane.xlu0 %3277
          %3279 = vmax.xlane.f32.xlu0 %v3140
          %v3280 = vpop.xlane.xlu0 %3279
          %3281 = vmax.xlane.f32.xlu0 %v3141
          %v3282 = vpop.xlane.xlu0 %3281
          %3283 = vmax.xlane.f32.xlu0 %v3142
          %v3284 = vpop.xlane.xlu0 %3283
          %3285 = vmax.xlane.f32.xlu0 %v3143
          %v3286 = vpop.xlane.xlu0 %3285
          %3287 = vmax.xlane.f32.xlu0 %v3144
          %v3288 = vpop.xlane.xlu0 %3287
          %3289 = vmax.xlane.f32.xlu0 %v3145
          %v3290 = vpop.xlane.xlu0 %3289
          %3291 = vmax.xlane.f32.xlu0 %v3146
          %v3292 = vpop.xlane.xlu0 %3291
          %3293 = vmax.xlane.f32.xlu0 %v3147
          %v3294 = vpop.xlane.xlu0 %3293
          %3295 = vmax.xlane.f32.xlu0 %v3148
          %v3296 = vpop.xlane.xlu0 %3295
          %3297 = vmax.xlane.f32.xlu0 %v3149
          %v3298 = vpop.xlane.xlu0 %3297
          %3299 = vmax.xlane.f32.xlu0 %v3150
          %v3300 = vpop.xlane.xlu0 %3299
          %3301 = vmax.xlane.f32.xlu0 %v3151
          %v3302 = vpop.xlane.xlu0 %3301
          %3303 = vmax.xlane.f32.xlu0 %v3152
          %v3304 = vpop.xlane.xlu0 %3303
          %3305 = vmax.xlane.f32.xlu0 %v3153
          %v3306 = vpop.xlane.xlu0 %3305
          %3307 = vmax.xlane.f32.xlu0 %v3154
          %v3308 = vpop.xlane.xlu0 %3307
          %3309 = vmax.xlane.f32.xlu0 %v3155
          %v3310 = vpop.xlane.xlu0 %3309
          %3311 = vmax.xlane.f32.xlu0 %v3156
          %v3312 = vpop.xlane.xlu0 %3311
          %3313 = vmax.xlane.f32.xlu0 %v3157
          %v3314 = vpop.xlane.xlu0 %3313
          %3315 = vmax.xlane.f32.xlu0 %v3158
          %v3316 = vpop.xlane.xlu0 %3315
          %3317 = vmax.xlane.f32.xlu0 %v3159
          %v3318 = vpop.xlane.xlu0 %3317
          %3319 = vmax.xlane.f32.xlu0 %v3160
          %v3320 = vpop.xlane.xlu0 %3319
          %3321 = vmax.xlane.f32.xlu0 %v3161
          %v3322 = vpop.xlane.xlu0 %3321
          %3323 = vmax.xlane.f32.xlu0 %v3162
          %v3324 = vpop.xlane.xlu0 %3323
          %3325 = vmax.xlane.f32.xlu0 %v3163
          %v3326 = vpop.xlane.xlu0 %3325
          %3327 = vmax.xlane.f32.xlu0 %v3164
          %v3328 = vpop.xlane.xlu0 %3327
          %3329 = vmax.xlane.f32.xlu0 %v3165
          %v3330 = vpop.xlane.xlu0 %3329
          %3331 = vmax.xlane.f32.xlu0 %v3166
          %v3332 = vpop.xlane.xlu0 %3331
          %3333 = vmax.xlane.f32.xlu0 %v3167
          %v3334 = vpop.xlane.xlu0 %3333
          %3335 = vmax.xlane.f32.xlu0 %v3168
          %v3336 = vpop.xlane.xlu0 %3335
          %3337 = vmax.xlane.f32.xlu0 %v3169
          %v3338 = vpop.xlane.xlu0 %3337
          %3339 = vmax.xlane.f32.xlu0 %v3170
          %v3340 = vpop.xlane.xlu0 %3339
          %3341 = vmax.xlane.f32.xlu0 %v3171
          %v3342 = vpop.xlane.xlu0 %3341
          %3343 = vmax.xlane.f32.xlu0 %v3172
          %v3344 = vpop.xlane.xlu0 %3343
          %3345 = vmax.xlane.f32.xlu0 %v3173
          %v3346 = vpop.xlane.xlu0 %3345
          %3347 = vmax.xlane.f32.xlu0 %v3174
          %v3348 = vpop.xlane.xlu0 %3347
          %3349 = vmax.xlane.f32.xlu0 %v3175
          %v3350 = vpop.xlane.xlu0 %3349
          %3351 = vmax.xlane.f32.xlu0 %v3176
          %v3352 = vpop.xlane.xlu0 %3351
          %3353 = vmax.xlane.f32.xlu0 %v3177
          %v3354 = vpop.xlane.xlu0 %3353
          %3355 = vmax.xlane.f32.xlu0 %v3178
          %v3356 = vpop.xlane.xlu0 %3355
          %3357 = vmax.xlane.f32.xlu0 %v3179
          %v3358 = vpop.xlane.xlu0 %3357
          %3359 = vmax.xlane.f32.xlu0 %v3180
          %v3360 = vpop.xlane.xlu0 %3359
          %3361 = vmax.xlane.f32.xlu0 %v3181
          %v3362 = vpop.xlane.xlu0 %3361
          %3363 = vmax.xlane.f32.xlu0 %v3182
          %v3364 = vpop.xlane.xlu0 %3363
          %3365 = vmax.xlane.f32.xlu0 %v3183
          %v3366 = vpop.xlane.xlu0 %3365
          %3367 = vmax.xlane.f32.xlu0 %v3184
          %v3368 = vpop.xlane.xlu0 %3367
          %3369 = vmax.xlane.f32.xlu0 %v3185
          %v3370 = vpop.xlane.xlu0 %3369
          %3371 = vmax.xlane.f32.xlu0 %v3186
          %v3372 = vpop.xlane.xlu0 %3371
          %3373 = vmax.xlane.f32.xlu0 %v3187
          %v3374 = vpop.xlane.xlu0 %3373
          %3375 = vmax.xlane.f32.xlu0 %v3188
          %v3376 = vpop.xlane.xlu0 %3375
          %3377 = vmax.xlane.f32.xlu0 %v3189
          %v3378 = vpop.xlane.xlu0 %3377
          %3379 = vmax.xlane.f32.xlu0 %v3190
          %v3380 = vpop.xlane.xlu0 %3379
          %3381 = vmax.xlane.f32.xlu0 %v3191
          %v3382 = vpop.xlane.xlu0 %3381
          %3383 = vmax.xlane.f32.xlu0 %v3192
          %v3384 = vpop.xlane.xlu0 %3383
          %3385 = vmax.xlane.f32.xlu0 %v3193
          %v3386 = vpop.xlane.xlu0 %3385
          %3387 = vmax.xlane.f32.xlu0 %v3194
          %v3388 = vpop.xlane.xlu0 %3387
          %3389 = vmax.xlane.f32.xlu0 %v3195
          %v3390 = vpop.xlane.xlu0 %3389
          %3391 = vmax.xlane.f32.xlu0 %v3196
          %v3392 = vpop.xlane.xlu0 %3391
          %3393 = vmax.xlane.f32.xlu0 %v3197
          %v3394 = vpop.xlane.xlu0 %3393
          %3395 = vmax.xlane.f32.xlu0 %v3198
          %v3396 = vpop.xlane.xlu0 %3395
          %3397 = vmax.xlane.f32.xlu0 %v3199
          %v3398 = vpop.xlane.xlu0 %3397
          %3399 = vmax.xlane.f32.xlu0 %v3200
          %v3400 = vpop.xlane.xlu0 %3399
          %3401 = vmax.xlane.f32.xlu0 %v3201
          %v3402 = vpop.xlane.xlu0 %3401
          %3403 = vmax.xlane.f32.xlu0 %v3202
          %v3404 = vpop.xlane.xlu0 %3403
          %3405 = vmax.xlane.f32.xlu0 %v3203
          %v3406 = vpop.xlane.xlu0 %3405
          %3407 = vmax.xlane.f32.xlu0 %v3204
          %v3408 = vpop.xlane.xlu0 %3407
          %3409 = vmax.xlane.f32.xlu0 %v3205
          %v3410 = vpop.xlane.xlu0 %3409
          %3411 = vmax.xlane.f32.xlu0 %v3206
          %v3412 = vpop.xlane.xlu0 %3411
          %3413 = vmax.xlane.f32.xlu0 %v3207
          %v3414 = vpop.xlane.xlu0 %3413
          %3415 = vmax.xlane.f32.xlu0 %v3208
          %v3416 = vpop.xlane.xlu0 %3415
          %3417 = vmax.xlane.f32.xlu0 %v3209
          %v3418 = vpop.xlane.xlu0 %3417
          %3419 = vmax.xlane.f32.xlu0 %v3210
          %v3420 = vpop.xlane.xlu0 %3419
          %3421 = vmax.xlane.f32.xlu0 %v3211
          %v3422 = vpop.xlane.xlu0 %3421
          %3423 = vmax.xlane.f32.xlu0 %v3212
          %v3424 = vpop.xlane.xlu0 %3423
          %3425 = vmax.xlane.f32.xlu0 %v3213
          %v3426 = vpop.xlane.xlu0 %3425
          %3427 = vmax.xlane.f32.xlu0 %v3214
          %v3428 = vpop.xlane.xlu0 %3427
          %3429 = vmax.xlane.f32.xlu0 %v3215
          %v3430 = vpop.xlane.xlu0 %3429
          %3431 = vmax.xlane.f32.xlu0 %v3216
          %v3432 = vpop.xlane.xlu0 %3431
          %3433 = vmax.xlane.f32.xlu0 %v3217
          %v3434 = vpop.xlane.xlu0 %3433
          %3435 = vmax.xlane.f32.xlu0 %v3218
          %v3436 = vpop.xlane.xlu0 %3435
          %3437 = vmax.xlane.f32.xlu0 %v3219
          %v3438 = vpop.xlane.xlu0 %3437
          %3439 = vmax.xlane.f32.xlu0 %v3220
          %v3440 = vpop.xlane.xlu0 %3439
          %3441 = vmax.xlane.f32.xlu0 %v3221
          %v3442 = vpop.xlane.xlu0 %3441
          %3443 = vmax.xlane.f32.xlu0 %v3222
          %v3444 = vpop.xlane.xlu0 %3443
          %3445 = vmax.xlane.f32.xlu0 %v3223
          %v3446 = vpop.xlane.xlu0 %3445
          %3447 = vmax.xlane.f32.xlu0 %v3224
          %v3448 = vpop.xlane.xlu0 %3447
          %3449 = vmax.xlane.f32.xlu0 %v3225
          %v3450 = vpop.xlane.xlu0 %3449
          %3451 = vmax.xlane.f32.xlu0 %v3226
          %v3452 = vpop.xlane.xlu0 %3451
          %3453 = vmax.xlane.f32.xlu0 %v3227
          %v3454 = vpop.xlane.xlu0 %3453
          %3455 = vmax.xlane.f32.xlu0 %v3228
          %v3456 = vpop.xlane.xlu0 %3455
          %3457 = vmax.xlane.f32.xlu0 %v3229
          %v3458 = vpop.xlane.xlu0 %3457
          %3459 = vmax.xlane.f32.xlu0 %v3230
          %v3460 = vpop.xlane.xlu0 %3459
          %3461 = vmax.xlane.f32.xlu0 %v3231
          %v3462 = vpop.xlane.xlu0 %3461
          %3463 = vmax.xlane.f32.xlu0 %v3232
          %v3464 = vpop.xlane.xlu0 %3463
          %3465 = vmax.xlane.f32.xlu0 %v3233
          %v3466 = vpop.xlane.xlu0 %3465
          %3467 = vmax.xlane.f32.xlu0 %v3234
          %v3468 = vpop.xlane.xlu0 %3467
          %3469 = vmax.xlane.f32.xlu0 %v3235
          %v3470 = vpop.xlane.xlu0 %3469
          %3471 = vmax.xlane.f32.xlu0 %v3236
          %v3472 = vpop.xlane.xlu0 %3471
          %3473 = vmax.xlane.f32.xlu0 %v3237
          %v3474 = vpop.xlane.xlu0 %3473
          %3475 = vmax.xlane.f32.xlu0 %v3238
          %v3476 = vpop.xlane.xlu0 %3475
          %3477 = vmax.xlane.f32.xlu0 %v3239
          %v3478 = vpop.xlane.xlu0 %3477
          %3479 = vmax.xlane.f32.xlu0 %v3240
          %v3480 = vpop.xlane.xlu0 %3479
          %3481 = vmax.xlane.f32.xlu0 %v3241
          %v3482 = vpop.xlane.xlu0 %3481
          %3483 = vmax.xlane.f32.xlu0 %v3242
          %v3484 = vpop.xlane.xlu0 %3483
          %3485 = vmax.xlane.f32.xlu0 %v3243
          %v3486 = vpop.xlane.xlu0 %3485
          %3487 = vmax.xlane.f32.xlu0 %v3244
          %v3488 = vpop.xlane.xlu0 %3487
          %3489 = vmax.xlane.f32.xlu0 %v3245
          %v3490 = vpop.xlane.xlu0 %3489
          %3491 = vmax.xlane.f32.xlu0 %v3246
          %v3492 = vpop.xlane.xlu0 %3491
          %3493 = vmax.xlane.f32.xlu0 %v3247
          %v3494 = vpop.xlane.xlu0 %3493
          %3495 = vmax.xlane.f32.xlu0 %v3248
          %v3496 = vpop.xlane.xlu0 %3495
          %3497 = vmax.xlane.f32.xlu0 %v3249
          %v3498 = vpop.xlane.xlu0 %3497
          %3499 = vmax.xlane.f32.xlu0 %v3250
          %v3500 = vpop.xlane.xlu0 %3499
          %3501 = vmax.xlane.f32.xlu0 %v3251
          %v3502 = vpop.xlane.xlu0 %3501
          %3503 = vmax.xlane.f32.xlu0 %v3252
          %v3504 = vpop.xlane.xlu0 %3503
          %3505 = vmax.xlane.f32.xlu0 %v3253
          %v3506 = vpop.xlane.xlu0 %3505
          %3507 = vmax.xlane.f32.xlu0 %v3254
          %v3508 = vpop.xlane.xlu0 %3507
          %3509 = vmax.xlane.f32.xlu0 %v3255
          %v3510 = vpop.xlane.xlu0 %3509
          %3511 = vmax.xlane.f32.xlu0 %v3256
          %v3512 = vpop.xlane.xlu0 %3511
          %vm3513 = vcmask 7168
          %3514 = vst.msk [vmem:[%s269] sm:$0xff] %vm3513, %v3258
          %3515 = vst.msk [vmem:[%s269 + $0x8] sm:$0xff] %vm3513, %v3260
          %3516 = vst.msk [vmem:[%s269 + $0x10] sm:$0xff] %vm3513, %v3262
          %3517 = vst.msk [vmem:[%s269 + $0x18] sm:$0xff] %vm3513, %v3264
          %3518 = vst.msk [vmem:[%s269 + $0x20] sm:$0xff] %vm3513, %v3266
          %3519 = vst.msk [vmem:[%s269 + $0x28] sm:$0xff] %vm3513, %v3268
          %3520 = vst.msk [vmem:[%s269 + $0x30] sm:$0xff] %vm3513, %v3270
          %3521 = vst.msk [vmem:[%s269 + $0x38] sm:$0xff] %vm3513, %v3272
          %3522 = vst.msk [vmem:[%s269 + $0x40] sm:$0xff] %vm3513, %v3274
          %3523 = vst.msk [vmem:[%s269 + $0x48] sm:$0xff] %vm3513, %v3276
          %3524 = vst.msk [vmem:[%s269 + $0x50] sm:$0xff] %vm3513, %v3278
          %3525 = vst.msk [vmem:[%s269 + $0x58] sm:$0xff] %vm3513, %v3280
          %3526 = vst.msk [vmem:[%s269 + $0x60] sm:$0xff] %vm3513, %v3282
          %3527 = vst.msk [vmem:[%s269 + $0x68] sm:$0xff] %vm3513, %v3284
          %3528 = vst.msk [vmem:[%s269 + $0x70] sm:$0xff] %vm3513, %v3286
          %3529 = vst.msk [vmem:[%s269 + $0x78] sm:$0xff] %vm3513, %v3288
          %3530 = vst.msk [vmem:[%s269 + $0x80] sm:$0xff] %vm3513, %v3290
          %3531 = vst.msk [vmem:[%s269 + $0x88] sm:$0xff] %vm3513, %v3292
          %3532 = vst.msk [vmem:[%s269 + $0x90] sm:$0xff] %vm3513, %v3294
          %3533 = vst.msk [vmem:[%s269 + $0x98] sm:$0xff] %vm3513, %v3296
          %3534 = vst.msk [vmem:[%s269 + $0xa0] sm:$0xff] %vm3513, %v3298
          %3535 = vst.msk [vmem:[%s269 + $0xa8] sm:$0xff] %vm3513, %v3300
          %3536 = vst.msk [vmem:[%s269 + $0xb0] sm:$0xff] %vm3513, %v3302
          %3537 = vst.msk [vmem:[%s269 + $0xb8] sm:$0xff] %vm3513, %v3304
          %3538 = vst.msk [vmem:[%s269 + $0xc0] sm:$0xff] %vm3513, %v3306
          %3539 = vst.msk [vmem:[%s269 + $0xc8] sm:$0xff] %vm3513, %v3308
          %3540 = vst.msk [vmem:[%s269 + $0xd0] sm:$0xff] %vm3513, %v3310
          %3541 = vst.msk [vmem:[%s269 + $0xd8] sm:$0xff] %vm3513, %v3312
          %3542 = vst.msk [vmem:[%s269 + $0xe0] sm:$0xff] %vm3513, %v3314
          %3543 = vst.msk [vmem:[%s269 + $0xe8] sm:$0xff] %vm3513, %v3316
          %3544 = vst.msk [vmem:[%s269 + $0xf0] sm:$0xff] %vm3513, %v3318
          %3545 = vst.msk [vmem:[%s269 + $0xf8] sm:$0xff] %vm3513, %v3320
          %3546 = vst.msk [vmem:[%s269 + $0x100] sm:$0xff] %vm3513, %v3322
          %3547 = vst.msk [vmem:[%s269 + $0x108] sm:$0xff] %vm3513, %v3324
          %3548 = vst.msk [vmem:[%s269 + $0x110] sm:$0xff] %vm3513, %v3326
          %3549 = vst.msk [vmem:[%s269 + $0x118] sm:$0xff] %vm3513, %v3328
          %3550 = vst.msk [vmem:[%s269 + $0x120] sm:$0xff] %vm3513, %v3330
          %3551 = vst.msk [vmem:[%s269 + $0x128] sm:$0xff] %vm3513, %v3332
          %3552 = vst.msk [vmem:[%s269 + $0x130] sm:$0xff] %vm3513, %v3334
          %3553 = vst.msk [vmem:[%s269 + $0x138] sm:$0xff] %vm3513, %v3336
          %3554 = vst.msk [vmem:[%s269 + $0x140] sm:$0xff] %vm3513, %v3338
          %3555 = vst.msk [vmem:[%s269 + $0x148] sm:$0xff] %vm3513, %v3340
          %3556 = vst.msk [vmem:[%s269 + $0x150] sm:$0xff] %vm3513, %v3342
          %3557 = vst.msk [vmem:[%s269 + $0x158] sm:$0xff] %vm3513, %v3344
          %3558 = vst.msk [vmem:[%s269 + $0x160] sm:$0xff] %vm3513, %v3346
          %3559 = vst.msk [vmem:[%s269 + $0x168] sm:$0xff] %vm3513, %v3348
          %3560 = vst.msk [vmem:[%s269 + $0x170] sm:$0xff] %vm3513, %v3350
          %3561 = vst.msk [vmem:[%s269 + $0x178] sm:$0xff] %vm3513, %v3352
          %3562 = vst.msk [vmem:[%s269 + $0x180] sm:$0xff] %vm3513, %v3354
          %3563 = vst.msk [vmem:[%s269 + $0x188] sm:$0xff] %vm3513, %v3356
          %3564 = vst.msk [vmem:[%s269 + $0x190] sm:$0xff] %vm3513, %v3358
          %3565 = vst.msk [vmem:[%s269 + $0x198] sm:$0xff] %vm3513, %v3360
          %3566 = vst.msk [vmem:[%s269 + $0x1a0] sm:$0xff] %vm3513, %v3362
          %3567 = vst.msk [vmem:[%s269 + $0x1a8] sm:$0xff] %vm3513, %v3364
          %3568 = vst.msk [vmem:[%s269 + $0x1b0] sm:$0xff] %vm3513, %v3366
          %3569 = vst.msk [vmem:[%s269 + $0x1b8] sm:$0xff] %vm3513, %v3368
          %3570 = vst.msk [vmem:[%s269 + $0x1c0] sm:$0xff] %vm3513, %v3370
          %3571 = vst.msk [vmem:[%s269 + $0x1c8] sm:$0xff] %vm3513, %v3372
          %3572 = vst.msk [vmem:[%s269 + $0x1d0] sm:$0xff] %vm3513, %v3374
          %3573 = vst.msk [vmem:[%s269 + $0x1d8] sm:$0xff] %vm3513, %v3376
          %3574 = vst.msk [vmem:[%s269 + $0x1e0] sm:$0xff] %vm3513, %v3378
          %3575 = vst.msk [vmem:[%s269 + $0x1e8] sm:$0xff] %vm3513, %v3380
          %3576 = vst.msk [vmem:[%s269 + $0x1f0] sm:$0xff] %vm3513, %v3382
          %3577 = vst.msk [vmem:[%s269 + $0x1f8] sm:$0xff] %vm3513, %v3384
          %3578 = vst.msk [vmem:[%s269 + $0x200] sm:$0xff] %vm3513, %v3386
          %3579 = vst.msk [vmem:[%s269 + $0x208] sm:$0xff] %vm3513, %v3388
          %3580 = vst.msk [vmem:[%s269 + $0x210] sm:$0xff] %vm3513, %v3390
          %3581 = vst.msk [vmem:[%s269 + $0x218] sm:$0xff] %vm3513, %v3392
          %3582 = vst.msk [vmem:[%s269 + $0x220] sm:$0xff] %vm3513, %v3394
          %3583 = vst.msk [vmem:[%s269 + $0x228] sm:$0xff] %vm3513, %v3396
          %3584 = vst.msk [vmem:[%s269 + $0x230] sm:$0xff] %vm3513, %v3398
          %3585 = vst.msk [vmem:[%s269 + $0x238] sm:$0xff] %vm3513, %v3400
          %3586 = vst.msk [vmem:[%s269 + $0x240] sm:$0xff] %vm3513, %v3402
          %3587 = vst.msk [vmem:[%s269 + $0x248] sm:$0xff] %vm3513, %v3404
          %3588 = vst.msk [vmem:[%s269 + $0x250] sm:$0xff] %vm3513, %v3406
          %3589 = vst.msk [vmem:[%s269 + $0x258] sm:$0xff] %vm3513, %v3408
          %3590 = vst.msk [vmem:[%s269 + $0x260] sm:$0xff] %vm3513, %v3410
          %3591 = vst.msk [vmem:[%s269 + $0x268] sm:$0xff] %vm3513, %v3412
          %3592 = vst.msk [vmem:[%s269 + $0x270] sm:$0xff] %vm3513, %v3414
          %3593 = vst.msk [vmem:[%s269 + $0x278] sm:$0xff] %vm3513, %v3416
          %3594 = vst.msk [vmem:[%s269 + $0x280] sm:$0xff] %vm3513, %v3418
          %3595 = vst.msk [vmem:[%s269 + $0x288] sm:$0xff] %vm3513, %v3420
          %3596 = vst.msk [vmem:[%s269 + $0x290] sm:$0xff] %vm3513, %v3422
          %3597 = vst.msk [vmem:[%s269 + $0x298] sm:$0xff] %vm3513, %v3424
          %3598 = vst.msk [vmem:[%s269 + $0x2a0] sm:$0xff] %vm3513, %v3426
          %3599 = vst.msk [vmem:[%s269 + $0x2a8] sm:$0xff] %vm3513, %v3428
          %3600 = vst.msk [vmem:[%s269 + $0x2b0] sm:$0xff] %vm3513, %v3430
          %3601 = vst.msk [vmem:[%s269 + $0x2b8] sm:$0xff] %vm3513, %v3432
          %3602 = vst.msk [vmem:[%s269 + $0x2c0] sm:$0xff] %vm3513, %v3434
          %3603 = vst.msk [vmem:[%s269 + $0x2c8] sm:$0xff] %vm3513, %v3436
          %3604 = vst.msk [vmem:[%s269 + $0x2d0] sm:$0xff] %vm3513, %v3438
          %3605 = vst.msk [vmem:[%s269 + $0x2d8] sm:$0xff] %vm3513, %v3440
          %3606 = vst.msk [vmem:[%s269 + $0x2e0] sm:$0xff] %vm3513, %v3442
          %3607 = vst.msk [vmem:[%s269 + $0x2e8] sm:$0xff] %vm3513, %v3444
          %3608 = vst.msk [vmem:[%s269 + $0x2f0] sm:$0xff] %vm3513, %v3446
          %3609 = vst.msk [vmem:[%s269 + $0x2f8] sm:$0xff] %vm3513, %v3448
          %3610 = vst.msk [vmem:[%s269 + $0x300] sm:$0xff] %vm3513, %v3450
          %3611 = vst.msk [vmem:[%s269 + $0x308] sm:$0xff] %vm3513, %v3452
          %3612 = vst.msk [vmem:[%s269 + $0x310] sm:$0xff] %vm3513, %v3454
          %3613 = vst.msk [vmem:[%s269 + $0x318] sm:$0xff] %vm3513, %v3456
          %3614 = vst.msk [vmem:[%s269 + $0x320] sm:$0xff] %vm3513, %v3458
          %3615 = vst.msk [vmem:[%s269 + $0x328] sm:$0xff] %vm3513, %v3460
          %3616 = vst.msk [vmem:[%s269 + $0x330] sm:$0xff] %vm3513, %v3462
          %3617 = vst.msk [vmem:[%s269 + $0x338] sm:$0xff] %vm3513, %v3464
          %3618 = vst.msk [vmem:[%s269 + $0x340] sm:$0xff] %vm3513, %v3466
          %3619 = vst.msk [vmem:[%s269 + $0x348] sm:$0xff] %vm3513, %v3468
          %3620 = vst.msk [vmem:[%s269 + $0x350] sm:$0xff] %vm3513, %v3470
          %3621 = vst.msk [vmem:[%s269 + $0x358] sm:$0xff] %vm3513, %v3472
          %3622 = vst.msk [vmem:[%s269 + $0x360] sm:$0xff] %vm3513, %v3474
          %3623 = vst.msk [vmem:[%s269 + $0x368] sm:$0xff] %vm3513, %v3476
          %3624 = vst.msk [vmem:[%s269 + $0x370] sm:$0xff] %vm3513, %v3478
          %3625 = vst.msk [vmem:[%s269 + $0x378] sm:$0xff] %vm3513, %v3480
          %3626 = vst.msk [vmem:[%s269 + $0x380] sm:$0xff] %vm3513, %v3482
          %3627 = vst.msk [vmem:[%s269 + $0x388] sm:$0xff] %vm3513, %v3484
          %3628 = vst.msk [vmem:[%s269 + $0x390] sm:$0xff] %vm3513, %v3486
          %3629 = vst.msk [vmem:[%s269 + $0x398] sm:$0xff] %vm3513, %v3488
          %3630 = vst.msk [vmem:[%s269 + $0x3a0] sm:$0xff] %vm3513, %v3490
          %3631 = vst.msk [vmem:[%s269 + $0x3a8] sm:$0xff] %vm3513, %v3492
          %3632 = vst.msk [vmem:[%s269 + $0x3b0] sm:$0xff] %vm3513, %v3494
          %3633 = vst.msk [vmem:[%s269 + $0x3b8] sm:$0xff] %vm3513, %v3496
          %3634 = vst.msk [vmem:[%s269 + $0x3c0] sm:$0xff] %vm3513, %v3498
          %3635 = vst.msk [vmem:[%s269 + $0x3c8] sm:$0xff] %vm3513, %v3500
          %3636 = vst.msk [vmem:[%s269 + $0x3d0] sm:$0xff] %vm3513, %v3502
          %3637 = vst.msk [vmem:[%s269 + $0x3d8] sm:$0xff] %vm3513, %v3504
          %3638 = vst.msk [vmem:[%s269 + $0x3e0] sm:$0xff] %vm3513, %v3506
          %3639 = vst.msk [vmem:[%s269 + $0x3e8] sm:$0xff] %vm3513, %v3508
          %3640 = vst.msk [vmem:[%s269 + $0x3f0] sm:$0xff] %vm3513, %v3510
          %3641 = vst.msk [vmem:[%s269 + $0x3f8] sm:$0xff] %vm3513, %v3512
        $region56: #{tpu_custom_call.1} parent=39 // pred_fallthru
          _
        %p3642 = scmp.lt.s32.totalorder %s21, 1
        %s3643 = scalar_select %p3642, %s21, 1
        %s3644 = smul.addr %s3643, 128
        %s3645 = smul.addr %s3644, 8
        %s3646 = scalar_lea.vmem %s5, %s3645
        // Predicated region
        $region57: #{tpu_custom_call.1} parent=39 // pred_check
          %p3647 = pneg %p159
        $region58: #{tpu_custom_call.1} parent=39 // pred_check_branch
          %3649 = sbr.rel (%p3647) target = $region60
        $region59: #{tpu_custom_call.1} parent=39 // pred_region
          _
        $region60: #{tpu_custom_call.1} parent=39 // pred_fallthru
          _
      $region40: #{tpu_custom_call.1} parent=5 // pred_fallthru
        _
      %p3650 = scmp.le.s32.totalorder 2, %s12
      // Predicated region
      $region61: #{tpu_custom_call.1} parent=5 // pred_check
        %p3651 = pneg %p3650
      $region62: #{tpu_custom_call.1} parent=5 // pred_check_branch
        %3653 = sbr.rel (%p3651) target = $region64
      $region63: #{tpu_custom_call.1} parent=5 // pred_region
        %s3654 = ssub.s32 %s12, 2
        // Predicated region
        $region65: #{tpu_custom_call.1} parent=63 // pred_check
          %p3655 = pneg %p165
        $region66: #{tpu_custom_call.1} parent=63 // pred_check_branch
          %3657 = sbr.rel (%p3655) target = $region68
        $region67: #{tpu_custom_call.1} parent=63 // pred_region
          %p3658 = scmp.lt.s32.totalorder %s23, 1
          %s3659 = scalar_select %p3658, %s23, 1
          %s3660 = smul.addr %s3659, 128
          %s3661 = smul.addr %s3660, 8
          %s3662 = scalar_lea.vmem %s5, %s3661
        $region68: #{tpu_custom_call.1} parent=63 // pred_fallthru
          _
      $region64: #{tpu_custom_call.1} parent=5 // pred_fallthru
        _
    $region6: #{tpu_custom_call.1} parent=1 // loop_footer
      %s16 = sadd.s32 1, %s12
    $region7: #{tpu_custom_call.1} parent=1 // loop_footer_branch
      %11 = sbr.rel target = $region3
    $region8: #{tpu_custom_call.1} parent=1 // loop_exit
      _
    %3663 = vsyncpa [#allocation4], 1
    %s3664 = scalar_lea.sflag [#allocation4], 1
    %3665 = vsyncpa %s3664, 1

</llo_original>
